<compile_context>
chip_gen: v6e
topology: v6e:2x2x1
jax: 0.10.0
libtpu: 0.0.40
codegen_flags: <defaults>
</compile_context>

<pallas_src>
import functools

import jax
import jax.numpy as jnp
from jax.experimental import pallas as pl
from jax.experimental.pallas import tpu as pltpu

NEURONS = [2, 128, 128, 2]   # matches ANN(neurons=[2, 128, 128, 2])
_LANES = 128


def _round_up(n, m):
    return ((n + m - 1) // m) * m


def _mlp_kernel(x_ref, w1_ref, w2_ref, w3_ref, o_ref, *, act_dtype, precision):
    """Three MXU matmuls + two ReLUs.  Biases are already folded into the
    (augmented) weight matrices; x_ref carries a constant ones row."""
    x = x_ref[...]                                   # (K1, T)
    h = jnp.dot(w1_ref[...], x,                      # (M1, T)
                preferred_element_type=act_dtype, precision=precision)
    h = jnp.maximum(h, 0)
    h = jnp.dot(w2_ref[...], h,                      # (M2, T)
                preferred_element_type=act_dtype, precision=precision)
    h = jnp.maximum(h, 0)
    out = jnp.dot(w3_ref[...], h,                    # (M3, T), f32 accumulate
                  preferred_element_type=jnp.float32, precision=precision)
    # Store only the real output rows (d_out); padded rows are never written.
    o_ref[...] = out[: o_ref.shape[0], :].astype(o_ref.dtype)


def _augment_params(params, d_in, d_h1, d_h2, d_out, compute_dtype):
    """Build bias-folded, padded weight matrices (done once, outside the kernel).

    Layer l's matmul consumes an activation vector whose last "real" row is a
    constant 1, so the bias becomes an extra weight column.  Each hidden
    layer's augmented weight also re-emits that ones row (ReLU(1)=1) so the
    next layer can fold its bias too.
    """
    K1 = _round_up(d_in + 1, 8)       # input rows:   x (d_in) + ones + pad
    M1 = _round_up(d_h1 + 1, 16)      # layer-1 rows: h1 + ones + pad
    M2 = _round_up(d_h2 + 1, 16)      # layer-2 rows: h2 + ones + pad
    M3 = _round_up(d_out, 8)          # layer-3 rows: out + pad (no ones needed)

    w1, b1 = params["w1"], params["b1"]
    w2, b2 = params["w2"], params["b2"]
    w3, b3 = params["w3"], params["b3"]

    w1a = jnp.zeros((M1, K1), jnp.float32)
    w1a = w1a.at[:d_h1, :d_in].set(w1)
    w1a = w1a.at[:d_h1, d_in].set(b1[:, 0])
    w1a = w1a.at[d_h1, d_in].set(1.0)          # emits the ones row of h1

    w2a = jnp.zeros((M2, M1), jnp.float32)
    w2a = w2a.at[:d_h2, :d_h1].set(w2)
    w2a = w2a.at[:d_h2, d_h1].set(b2[:, 0])
    w2a = w2a.at[d_h2, d_h1].set(1.0)          # emits the ones row of h2

    w3a = jnp.zeros((M3, M2), jnp.float32)
    w3a = w3a.at[:d_out, :d_h2].set(w3)
    w3a = w3a.at[:d_out, d_h2].set(b3[:, 0])

    return (w1a.astype(compute_dtype), w2a.astype(compute_dtype),
            w3a.astype(compute_dtype), K1, M1, M2, M3)


def ann_forward(x, params, *, batch_tile=4096, use_bf16=True):
    """ANN forward pass with a Pallas TPU kernel.

    x:       (B, 2) float32, row-major (same as PyTorch nn.Linear input)
    params:  dict with wN of shape (out, in) and bN of shape (out, 1)
    use_bf16: bf16 weights/activations with f32 MXU accumulation (fastest on
              v6e/v7x).  Use False for an exact f32 path (recommended on v5e).
    returns: (B, 2) float32
    """
    B, d_in = x.shape
    d_h1 = params["w1"].shape[0]
    d_h2 = params["w2"].shape[0]
    d_out = params["w3"].shape[0]
    assert params["w1"].shape[1] == d_in

    compute_dtype = jnp.bfloat16 if use_bf16 else jnp.float32
    # f32 path: force exact-precision MXU emulation (bf16x3/x6) so the result
    # matches a true f32 reference; ignored/irrelevant for bf16 operands.
    precision = jax.lax.Precision.HIGHEST if compute_dtype == jnp.float32 else None

    # Batch rides the lane axis -> tile must be a multiple of 128.  A single
    # large tile amortizes the ~0.35us/step overhead and MXU weight staging;
    # for large B the grid naturally has >=2 steps so the "parallel" axis can
    # still shard across TensorCores on multi-core parts (v7x).
    bt = min(int(batch_tile), pl.cdiv(B, _LANES) * _LANES)
    bt = max(_LANES, (bt // _LANES) * _LANES)
    B_pad = pl.cdiv(B, bt) * bt
    grid = (B_pad // bt,)

    # One-time (wrapper-side) parameter prep: bias folding + padding + cast.
    w1a, w2a, w3a, K1, M1, M2, M3 = _augment_params(
        params, d_in, d_h1, d_h2, d_out, compute_dtype)

    # Feature-major, augmented input: rows [0:d_in] = x^T, row d_in = 1.
    # (The transpose is wrapper-side layout plumbing; inside the kernel all
    #  loads/stores stay lane-dense.)
    x_t = jnp.zeros((K1, B_pad), compute_dtype)
    x_t = x_t.at[:d_in, :B].set(x.T.astype(compute_dtype))
    x_t = x_t.at[d_in, :].set(1.0)

    kernel = functools.partial(_mlp_kernel, act_dtype=compute_dtype,
                               precision=precision)

    def const_spec(shape):
        # Full-array block, resident across the whole grid (constant index map).
        return pl.BlockSpec(shape, lambda i: tuple(0 for _ in shape))

    out_t = pl.pallas_call(
        kernel,
        out_shape=jax.ShapeDtypeStruct((d_out, B_pad), jnp.float32),
        grid_spec=pltpu.PrefetchScalarGridSpec(
            num_scalar_prefetch=0,
            grid=grid,
            in_specs=[
                pl.BlockSpec((K1, bt), lambda i: (0, i)),   # augmented x^T tile
                const_spec((M1, K1)),                       # W1 (bias-folded)
                const_spec((M2, M1)),                       # W2 (bias-folded)
                const_spec((M3, M2)),                       # W3 (bias-folded)
            ],
            # Only d_out (=2) rows: block dim == full array dim satisfies the
            # (8,128) rule; lane dim is a multiple of 128 -> dense stores.
            out_specs=pl.BlockSpec((d_out, bt), lambda i: (0, i)),
        ),
        compiler_params=pltpu.CompilerParams(
            dimension_semantics=("parallel",),
            vmem_limit_bytes=32 * 1024 * 1024,   # live VMEM is only a few MiB
        ),
    )(x_t, w1a, w2a, w3a)

    # Back to row-major (B, d_out), dropping batch padding.
    return out_t[:, :B].T


def init_params(key, neurons=NEURONS):
    """Deterministic init mirroring torch.nn.Linear defaults:
    W, b ~ U(-1/sqrt(fan_in), 1/sqrt(fan_in)); W stored as (out, in), b as (out, 1)."""
    params = {}
    for li in range(1, len(neurons)):
        fan_in, fan_out = neurons[li - 1], neurons[li]
        key, kw, kb = jax.random.split(key, 3)
        bound = 1.0 / (fan_in ** 0.5)
        params[f"w{li}"] = jax.random.uniform(
            kw, (fan_out, fan_in), jnp.float32, -bound, bound)
        params[f"b{li}"] = jax.random.uniform(
            kb, (fan_out, 1), jnp.float32, -bound, bound)
    return params


def ann_reference(x, params, neurons=NEURONS):
    """Pure-JAX f32 reference of the same forward pass (HIGHEST precision so
    it is a true f32 baseline on TPU)."""
    h = x
    n_layers = len(neurons) - 1
    for li in range(1, n_layers + 1):
        h = jnp.dot(h, params[f"w{li}"].T,
                    precision=jax.lax.Precision.HIGHEST) + params[f"b{li}"].T
        if li != n_layers:
            h = jnp.maximum(h, 0.0)
    return h


if __name__ == "__main__":
    key = jax.random.PRNGKey(0)
    k_param, k_x = jax.random.split(key)

    params = init_params(k_param, NEURONS)

    B = 16  # small demo batch; any B works (padded to the lane-aligned tile)
    x = jax.random.normal(k_x, (B, NEURONS[0]), dtype=jnp.float32)

    ref = ann_reference(x, params)

    # Exact f32 MXU path (recommended on v5e).
    out_f32 = jax.block_until_ready(ann_forward(x, params, use_bf16=False))
    assert out_f32.shape == (B, NEURONS[-1])
    assert jnp.allclose(out_f32, ref, atol=1e-4, rtol=1e-4), \
        "Pallas f32 output mismatch vs reference"

    # bf16 weights/activations, f32 MXU accumulation (default; v6e/v7x).
    out_bf16 = jax.block_until_ready(ann_forward(x, params, use_bf16=True))
    assert out_bf16.shape == (B, NEURONS[-1])
    assert jnp.allclose(out_bf16, ref, atol=3e-2, rtol=3e-2), \
        "Pallas bf16 output mismatch vs reference"

    print("KERNEL_OK")
</pallas_src>

<mosaic_0001>
module attributes {stable_mosaic.version = 11 : i64} {
  func.func @_mlp_kernel(%arg0: i32, %arg1: memref<8x128xf32, #tpu.memory_space<vmem>>, %arg2: memref<144x8xf32, #tpu.memory_space<vmem>>, %arg3: memref<144x144xf32, #tpu.memory_space<vmem>>, %arg4: memref<8x144xf32, #tpu.memory_space<vmem>>, %arg5: memref<2x128xf32, #tpu.memory_space<vmem>>) attributes {dimension_semantics = [#tpu.dimension_semantics<parallel>], iteration_bounds = array<i64: 1>, scalar_prefetch = 0 : i64, scratch_operands = 0 : i64, tpu.core_type = #tpu.core_type<tc>, window_params = [{transform_indices = @transform_0, window_bounds = array<i64: 8, 128>}, {pipeline_mode = #tpu.pipeline_mode<synchronous>, transform_indices = @transform_1, window_bounds = array<i64: 144, 8>}, {pipeline_mode = #tpu.pipeline_mode<synchronous>, transform_indices = @transform_2, window_bounds = array<i64: 144, 144>}, {pipeline_mode = #tpu.pipeline_mode<synchronous>, transform_indices = @transform_3, window_bounds = array<i64: 8, 144>}, {transform_indices = @transform_4, window_bounds = array<i64: 2, 128>}]} {
    %c0 = arith.constant 0 : index
    %c0_0 = arith.constant 0 : index
    %0 = vector.load %arg1[%c0, %c0_0] : memref<8x128xf32, #tpu.memory_space<vmem>>, vector<8x128xf32>
    %c0_1 = arith.constant 0 : index
    %c0_2 = arith.constant 0 : index
    %1 = vector.load %arg2[%c0_1, %c0_2] : memref<144x8xf32, #tpu.memory_space<vmem>>, vector<144x8xf32>
    %cst = arith.constant dense<0.000000e+00> : vector<144x128xf32>
    %2 = tpu.matmul %1, %0, %cst {dimension_numbers = #tpu.dot_dimension_numbers<[1], [0], [0], [1], [0, 0, 1, 1], [], []>, precision = #tpu.contract_precision<fp32>} : vector<144x8xf32>, vector<8x128xf32>, vector<144x128xf32> -> vector<144x128xf32>
    %cst_3 = arith.constant 0.000000e+00 : f32
    %3 = vector.broadcast %cst_3 : f32 to vector<144x128xf32>
    %4 = arith.maximumf %2, %3 : vector<144x128xf32>
    %c0_4 = arith.constant 0 : index
    %c0_5 = arith.constant 0 : index
    %5 = vector.load %arg3[%c0_4, %c0_5] : memref<144x144xf32, #tpu.memory_space<vmem>>, vector<144x144xf32>
    %cst_6 = arith.constant dense<0.000000e+00> : vector<144x128xf32>
    %6 = tpu.matmul %5, %4, %cst_6 {dimension_numbers = #tpu.dot_dimension_numbers<[1], [0], [0], [1], [0, 0, 1, 1], [], []>, precision = #tpu.contract_precision<fp32>} : vector<144x144xf32>, vector<144x128xf32>, vector<144x128xf32> -> vector<144x128xf32>
    %cst_7 = arith.constant 0.000000e+00 : f32
    %7 = vector.broadcast %cst_7 : f32 to vector<144x128xf32>
    %8 = arith.maximumf %6, %7 : vector<144x128xf32>
    %c0_8 = arith.constant 0 : index
    %c0_9 = arith.constant 0 : index
    %9 = vector.load %arg4[%c0_8, %c0_9] : memref<8x144xf32, #tpu.memory_space<vmem>>, vector<8x144xf32>
    %cst_10 = arith.constant dense<0.000000e+00> : vector<8x128xf32>
    %10 = tpu.matmul %9, %8, %cst_10 {dimension_numbers = #tpu.dot_dimension_numbers<[1], [0], [0], [1], [0, 0, 1, 1], [], []>, precision = #tpu.contract_precision<fp32>} : vector<8x144xf32>, vector<144x128xf32>, vector<8x128xf32> -> vector<8x128xf32>
    %11 = vector.extract_strided_slice %10 {offsets = [0, 0], sizes = [2, 128], strides = [1, 1]} : vector<8x128xf32> to vector<2x128xf32>
    %c0_11 = arith.constant 0 : index
    %c0_12 = arith.constant 0 : index
    %12 = vector.load %arg5[%c0_11, %c0_12] : memref<2x128xf32, #tpu.memory_space<vmem>>, vector<2x128xf32>
    tpu.vector_store %arg5[%c0_11, %c0_12], %11 {strides = array<i32>} : memref<2x128xf32, #tpu.memory_space<vmem>>, vector<2x128xf32>,
    return
  }
  func.func @transform_0(%arg0: i32) -> (i32, i32) {
    %c0_i32 = arith.constant 0 : i32
    %c0_i32_0 = arith.constant 0 : i32
    return %c0_i32, %arg0 : i32, i32
  }
  func.func @transform_1(%arg0: i32) -> (i32, i32) {
    %c0_i32 = arith.constant 0 : i32
    %c0_i32_0 = arith.constant 0 : i32
    %c0_i32_1 = arith.constant 0 : i32
    return %c0_i32, %c0_i32_0 : i32, i32
  }
  func.func @transform_2(%arg0: i32) -> (i32, i32) {
    %c0_i32 = arith.constant 0 : i32
    %c0_i32_0 = arith.constant 0 : i32
    %c0_i32_1 = arith.constant 0 : i32
    return %c0_i32, %c0_i32_0 : i32, i32
  }
  func.func @transform_3(%arg0: i32) -> (i32, i32) {
    %c0_i32 = arith.constant 0 : i32
    %c0_i32_0 = arith.constant 0 : i32
    %c0_i32_1 = arith.constant 0 : i32
    return %c0_i32, %c0_i32_0 : i32, i32
  }
  func.func @transform_4(%arg0: i32) -> (i32, i32) {
    %c0_i32 = arith.constant 0 : i32
    %c0_i32_0 = arith.constant 0 : i32
    return %c0_i32, %arg0 : i32, i32
  }
}

</mosaic_0001>

<llo_original>
// kernel: tpu_custom_call.1
$region0: #{tpu_custom_call.1}
  #allocation0 [shape = 'u32[]', space=smem, size = 0x4, offset = 0x4, fixed_abs, tag = 'smem constant byte address 0x4 - core index']
  #allocation1 [shape = 'u32[144,128]{1,0:T(1,128)}', space=vmem, size = 0x12000, scoped, tag = 'internal scratch']
  %s0 = inlined_call_operand.vmem [shape: f32[8,128], index: 0, kind: input, shape index: {}]
  %s1 = inlined_call_operand.vmem [shape: f32[144,8], index: 1, kind: input, shape index: {}]
  %s2 = inlined_call_operand.hbm [shape: f32[144,144], index: 2, kind: input, shape index: {}]
  %s3 = inlined_call_operand.vmem [shape: f32[8,144], index: 3, kind: input, shape index: {}]
  %s4 = inlined_call_operand.hbm [shape: f32[2,128], index: 4, kind: output, shape index: {}]
  %s5 = sld [smem:[#allocation0]]
  $region30: #{tpu_custom_call.1} parent=0
    _
  %s7 = ssub.s32 1, %s5
  %s8 = scalar_select 0, %s7, %s5
  $region1: #{tpu_custom_call.1} parent=0
    #allocation2 [shape = 'u8[147456]{0}', space=vmem, size = 0x24000, scoped, tag = 'input window, operand 2, single buffered']
    #allocation3 [shape = 's32[1]{0}', space=sflag, size = 0x4, scoped, tag = 'scoped memory for tpu_custom_call.1']
    #allocation4 [shape = 's32[1]{0}', space=sflag, size = 0x4, scoped, tag = 'scoped memory for tpu_custom_call.1']
    #allocation5 [shape = 'u8[1024]{0}', space=vmem, size = 0x400, scoped, tag = 'output window, operand 0, single buffered']
    %9 = vsyncpa [#allocation3], 0
    %10 = vsyncpa [#allocation4], 0
    // Predicated region
    $region2: #{tpu_custom_call.1} parent=1 // pred_check
      _
    $region3: #{tpu_custom_call.1} parent=1 // pred_check_branch
      %12 = sbr.rel (0) target = $region5
    $region4: #{tpu_custom_call.1} parent=1 // pred_region
      _
    $region5: #{tpu_custom_call.1} parent=1 // pred_fallthru
      _
    // Predicated region
    $region6: #{tpu_custom_call.1} parent=1 // pred_check
      _
    $region7: #{tpu_custom_call.1} parent=1 // pred_check_branch
      %14 = sbr.rel (0) target = $region9
    $region8: #{tpu_custom_call.1} parent=1 // pred_region
      _
    $region9: #{tpu_custom_call.1} parent=1 // pred_fallthru
      _
    // Predicated region
    $region10: #{tpu_custom_call.1} parent=1 // pred_check
      _
    $region11: #{tpu_custom_call.1} parent=1 // pred_check_branch
      %16 = sbr.rel (0) target = $region13
    $region12: #{tpu_custom_call.1} parent=1 // pred_region
      %s18 = ssub.s32 4608, 4608
      %19 = vsyncadd [#allocation3], %s18
      %s20 = sshll.u32 [#allocation2], 4
      %s21 = int_to_ptr.vmem [resolvable:$true] %s20
      %26 = dma.hbm_to_vmem [thread:$0]  %s2, 4608, %s21, [#allocation3], 256, 256, 16
    $region13: #{tpu_custom_call.1} parent=1 // pred_fallthru
      _
    // Predicated region
    $region14: #{tpu_custom_call.1} parent=1 // pred_check
      _
    $region15: #{tpu_custom_call.1} parent=1 // pred_check_branch
      %28 = sbr.rel (0) target = $region17
    $region16: #{tpu_custom_call.1} parent=1 // pred_region
      _
    $region17: #{tpu_custom_call.1} parent=1 // pred_fallthru
      _
    // Predicated region
    $region18: #{tpu_custom_call.1} parent=1 // pred_check
      _
    $region19: #{tpu_custom_call.1} parent=1 // pred_check_branch
      %30 = sbr.rel (0) target = $region21
    $region20: #{tpu_custom_call.1} parent=1 // pred_region
      %31 = dma.done [#allocation3], 4608
    $region21: #{tpu_custom_call.1} parent=1 // pred_fallthru
      _
    %v32 = vld [vmem:[%s0] sm:$0xff]
    %v33 = vld [vmem:[%s1] sm:$0xff]
    %v34 = vld [vmem:[%s1 + $0x8] sm:$0xff]
    %v35 = vld [vmem:[%s1 + $0x10] sm:$0xff]
    %v36 = vld [vmem:[%s1 + $0x18] sm:$0xff]
    %v37 = vld [vmem:[%s1 + $0x20] sm:$0xff]
    %v38 = vld [vmem:[%s1 + $0x28] sm:$0xff]
    %v39 = vld [vmem:[%s1 + $0x30] sm:$0xff]
    %v40 = vld [vmem:[%s1 + $0x38] sm:$0xff]
    %v41 = vld [vmem:[%s1 + $0x40] sm:$0xff]
    %v42 = vld [vmem:[%s1 + $0x48] sm:$0xff]
    %v43 = vld [vmem:[%s1 + $0x50] sm:$0xff]
    %v44 = vld [vmem:[%s1 + $0x58] sm:$0xff]
    %v45 = vld [vmem:[%s1 + $0x60] sm:$0xff]
    %v46 = vld [vmem:[%s1 + $0x68] sm:$0xff]
    %v47 = vld [vmem:[%s1 + $0x70] sm:$0xff]
    %v48 = vld [vmem:[%s1 + $0x78] sm:$0xff]
    %v49 = vld [vmem:[%s1 + $0x80] sm:$0xff]
    %v50 = vld [vmem:[%s1 + $0x88] sm:$0xff]
    %vm51 = vcmask 64512
    %v53 = vsel %vm51, %v33, 0
    %v56 = vsel %vm51, %v34, 0
    %v59 = vsel %vm51, %v35, 0
    %v62 = vsel %vm51, %v36, 0
    %v65 = vsel %vm51, %v37, 0
    %v68 = vsel %vm51, %v38, 0
    %v71 = vsel %vm51, %v39, 0
    %v74 = vsel %vm51, %v40, 0
    %v77 = vsel %vm51, %v41, 0
    %v80 = vsel %vm51, %v42, 0
    %v83 = vsel %vm51, %v43, 0
    %v86 = vsel %vm51, %v44, 0
    %v89 = vsel %vm51, %v45, 0
    %v92 = vsel %vm51, %v46, 0
    %v95 = vsel %vm51, %v47, 0
    %v98 = vsel %vm51, %v48, 0
    %v101 = vsel %vm51, %v49, 0
    %v104 = vsel %vm51, %v50, 0
    %106 = vmatprep.subr.mxu0 0.0
    %107 = vmatpush1.msra.mxu0 0.0
    %108 = vmatprep.subr.mxu0 0.0
    %109 = vmatpush1.msra.mxu0 0.0
    %110 = vmatprep.subr.mxu0 0.0
    %111 = vmatpush1.msra.mxu0 0.0
    %112 = vmatprep.subr.mxu0 0.0
    %113 = vmatpush1.msra.mxu0 0.0
    %114 = vmatprep.subr.mxu0 0.0
    %115 = vmatpush1.msra.mxu0 0.0
    %116 = vmatprep.subr.mxu0 0.0
    %117 = vmatpush1.msra.mxu0 0.0
    %118 = vmatprep.subr.mxu0 0.0
    %119 = vmatpush1.msra.mxu0 0.0
    %120 = vmatprep.subr.mxu0 0.0
    %121 = vmatpush1.msra.mxu0 0.0
    %122 = vmatprep.subr.mxu0 0.0
    %123 = vmatpush1.msra.mxu0 0.0
    %124 = vmatprep.subr.mxu0 0.0
    %125 = vmatpush1.msra.mxu0 0.0
    %126 = vmatprep.subr.mxu0 0.0
    %127 = vmatpush1.msra.mxu0 0.0
    %128 = vmatprep.subr.mxu0 0.0
    %129 = vmatpush1.msra.mxu0 0.0
    %130 = vmatprep.subr.mxu0 0.0
    %131 = vmatpush1.msra.mxu0 0.0
    %132 = vmatprep.subr.mxu0 0.0
    %133 = vmatpush1.msra.mxu0 0.0
    %134 = vmatprep.subr.mxu0 0.0
    %135 = vmatpush1.msra.mxu0 0.0
    %136 = vmatprep.subr.mxu0 0.0
    %v137 = vand.u32 %v32, 4294901760
    %138 = vmatpush1.msra.mxu0 %v137
    %139 = vmatprep.subr.mxu0 0.0
    %140 = vmatpush2.msra.mxu0 0.0
    %141 = vmatprep.subr.mxu0 0.0
    %142 = vmatpush2.msra.mxu0 0.0
    %143 = vmatprep.subr.mxu0 0.0
    %144 = vmatpush2.msra.mxu0 0.0
    %145 = vmatprep.subr.mxu0 0.0
    %146 = vmatpush2.msra.mxu0 0.0
    %147 = vmatprep.subr.mxu0 0.0
    %148 = vmatpush2.msra.mxu0 0.0
    %149 = vmatprep.subr.mxu0 0.0
    %150 = vmatpush2.msra.mxu0 0.0
    %151 = vmatprep.subr.mxu0 0.0
    %152 = vmatpush2.msra.mxu0 0.0
    %153 = vmatprep.subr.mxu0 0.0
    %154 = vmatpush2.msra.mxu0 0.0
    %155 = vmatprep.subr.mxu0 0.0
    %156 = vmatpush2.msra.mxu0 0.0
    %157 = vmatprep.subr.mxu0 0.0
    %158 = vmatpush2.msra.mxu0 0.0
    %159 = vmatprep.subr.mxu0 0.0
    %160 = vmatpush2.msra.mxu0 0.0
    %161 = vmatprep.subr.mxu0 0.0
    %162 = vmatpush2.msra.mxu0 0.0
    %163 = vmatprep.subr.mxu0 0.0
    %164 = vmatpush2.msra.mxu0 0.0
    %165 = vmatprep.subr.mxu0 0.0
    %166 = vmatpush2.msra.mxu0 0.0
    %167 = vmatprep.subr.mxu0 0.0
    %168 = vmatpush2.msra.mxu0 0.0
    %169 = vmatprep.subr.mxu0 0.0
    %170 = vmatpush2.msra.mxu0 0.0
    %171 = vmatprep.mubr.f32.mxu0 0.0
    %v172 = vand.u32 %v53, 4294901760
    %v173 = vsub.f32 %v53, %v172
    %v174 = vand.u32 %v173, 4294901760
    %v175 = vsub.f32 %v173, %v174
    %v176 = vand.u32 %v175, 4294901760
    %177 = vmatmul.mubr.f32.gmra.mxu0 %v176
    %v178 = vpop.f32.mrf.mxu0
    %v179 = vadd.f32 0.0, %v178
    %v180 = vpop.f32.mrf.mxu0
    %181 = vmatprep.mubr.f32.mxu0 0.0
    %v182 = vand.u32 %v56, 4294901760
    %v183 = vsub.f32 %v56, %v182
    %v184 = vand.u32 %v183, 4294901760
    %v185 = vsub.f32 %v183, %v184
    %v186 = vand.u32 %v185, 4294901760
    %187 = vmatmul.mubr.f32.gmra.mxu0 %v186
    %v188 = vpop.f32.mrf.mxu0
    %v189 = vadd.f32 0.0, %v188
    %v190 = vpop.f32.mrf.mxu0
    %191 = vmatprep.mubr.f32.mxu0 0.0
    %v192 = vand.u32 %v59, 4294901760
    %v193 = vsub.f32 %v59, %v192
    %v194 = vand.u32 %v193, 4294901760
    %v195 = vsub.f32 %v193, %v194
    %v196 = vand.u32 %v195, 4294901760
    %197 = vmatmul.mubr.f32.gmra.mxu0 %v196
    %v198 = vpop.f32.mrf.mxu0
    %v199 = vadd.f32 0.0, %v198
    %v200 = vpop.f32.mrf.mxu0
    %201 = vmatprep.mubr.f32.mxu0 0.0
    %v202 = vand.u32 %v62, 4294901760
    %v203 = vsub.f32 %v62, %v202
    %v204 = vand.u32 %v203, 4294901760
    %v205 = vsub.f32 %v203, %v204
    %v206 = vand.u32 %v205, 4294901760
    %207 = vmatmul.mubr.f32.gmra.mxu0 %v206
    %v208 = vpop.f32.mrf.mxu0
    %v209 = vadd.f32 0.0, %v208
    %v210 = vpop.f32.mrf.mxu0
    %211 = vmatprep.mubr.f32.mxu0 0.0
    %v212 = vand.u32 %v65, 4294901760
    %v213 = vsub.f32 %v65, %v212
    %v214 = vand.u32 %v213, 4294901760
    %v215 = vsub.f32 %v213, %v214
    %v216 = vand.u32 %v215, 4294901760
    %217 = vmatmul.mubr.f32.gmra.mxu0 %v216
    %v218 = vpop.f32.mrf.mxu0
    %v219 = vadd.f32 0.0, %v218
    %v220 = vpop.f32.mrf.mxu0
    %221 = vmatprep.mubr.f32.mxu0 0.0
    %v222 = vand.u32 %v68, 4294901760
    %v223 = vsub.f32 %v68, %v222
    %v224 = vand.u32 %v223, 4294901760
    %v225 = vsub.f32 %v223, %v224
    %v226 = vand.u32 %v225, 4294901760
    %227 = vmatmul.mubr.f32.gmra.mxu0 %v226
    %v228 = vpop.f32.mrf.mxu0
    %v229 = vadd.f32 0.0, %v228
    %v230 = vpop.f32.mrf.mxu0
    %231 = vmatprep.mubr.f32.mxu0 0.0
    %v232 = vand.u32 %v71, 4294901760
    %v233 = vsub.f32 %v71, %v232
    %v234 = vand.u32 %v233, 4294901760
    %v235 = vsub.f32 %v233, %v234
    %v236 = vand.u32 %v235, 4294901760
    %237 = vmatmul.mubr.f32.gmra.mxu0 %v236
    %v238 = vpop.f32.mrf.mxu0
    %v239 = vadd.f32 0.0, %v238
    %v240 = vpop.f32.mrf.mxu0
    %241 = vmatprep.mubr.f32.mxu0 0.0
    %v242 = vand.u32 %v74, 4294901760
    %v243 = vsub.f32 %v74, %v242
    %v244 = vand.u32 %v243, 4294901760
    %v245 = vsub.f32 %v243, %v244
    %v246 = vand.u32 %v245, 4294901760
    %247 = vmatmul.mubr.f32.gmra.mxu0 %v246
    %v248 = vpop.f32.mrf.mxu0
    %v249 = vadd.f32 0.0, %v248
    %v250 = vpop.f32.mrf.mxu0
    %251 = vmatprep.mubr.f32.mxu0 0.0
    %v252 = vand.u32 %v77, 4294901760
    %v253 = vsub.f32 %v77, %v252
    %v254 = vand.u32 %v253, 4294901760
    %v255 = vsub.f32 %v253, %v254
    %v256 = vand.u32 %v255, 4294901760
    %257 = vmatmul.mubr.f32.gmra.mxu0 %v256
    %v258 = vpop.f32.mrf.mxu0
    %v259 = vadd.f32 0.0, %v258
    %v260 = vpop.f32.mrf.mxu0
    %261 = vmatprep.mubr.f32.mxu0 0.0
    %v262 = vand.u32 %v80, 4294901760
    %v263 = vsub.f32 %v80, %v262
    %v264 = vand.u32 %v263, 4294901760
    %v265 = vsub.f32 %v263, %v264
    %v266 = vand.u32 %v265, 4294901760
    %267 = vmatmul.mubr.f32.gmra.mxu0 %v266
    %v268 = vpop.f32.mrf.mxu0
    %v269 = vadd.f32 0.0, %v268
    %v270 = vpop.f32.mrf.mxu0
    %271 = vmatprep.mubr.f32.mxu0 0.0
    %v272 = vand.u32 %v83, 4294901760
    %v273 = vsub.f32 %v83, %v272
    %v274 = vand.u32 %v273, 4294901760
    %v275 = vsub.f32 %v273, %v274
    %v276 = vand.u32 %v275, 4294901760
    %277 = vmatmul.mubr.f32.gmra.mxu0 %v276
    %v278 = vpop.f32.mrf.mxu0
    %v279 = vadd.f32 0.0, %v278
    %v280 = vpop.f32.mrf.mxu0
    %281 = vmatprep.mubr.f32.mxu0 0.0
    %v282 = vand.u32 %v86, 4294901760
    %v283 = vsub.f32 %v86, %v282
    %v284 = vand.u32 %v283, 4294901760
    %v285 = vsub.f32 %v283, %v284
    %v286 = vand.u32 %v285, 4294901760
    %287 = vmatmul.mubr.f32.gmra.mxu0 %v286
    %v288 = vpop.f32.mrf.mxu0
    %v289 = vadd.f32 0.0, %v288
    %v290 = vpop.f32.mrf.mxu0
    %291 = vmatprep.mubr.f32.mxu0 0.0
    %v292 = vand.u32 %v89, 4294901760
    %v293 = vsub.f32 %v89, %v292
    %v294 = vand.u32 %v293, 4294901760
    %v295 = vsub.f32 %v293, %v294
    %v296 = vand.u32 %v295, 4294901760
    %297 = vmatmul.mubr.f32.gmra.mxu0 %v296
    %v298 = vpop.f32.mrf.mxu0
    %v299 = vadd.f32 0.0, %v298
    %v300 = vpop.f32.mrf.mxu0
    %301 = vmatprep.mubr.f32.mxu0 0.0
    %v302 = vand.u32 %v92, 4294901760
    %v303 = vsub.f32 %v92, %v302
    %v304 = vand.u32 %v303, 4294901760
    %v305 = vsub.f32 %v303, %v304
    %v306 = vand.u32 %v305, 4294901760
    %307 = vmatmul.mubr.f32.gmra.mxu0 %v306
    %v308 = vpop.f32.mrf.mxu0
    %v309 = vadd.f32 0.0, %v308
    %v310 = vpop.f32.mrf.mxu0
    %311 = vmatprep.mubr.f32.mxu0 0.0
    %v312 = vand.u32 %v95, 4294901760
    %v313 = vsub.f32 %v95, %v312
    %v314 = vand.u32 %v313, 4294901760
    %v315 = vsub.f32 %v313, %v314
    %v316 = vand.u32 %v315, 4294901760
    %317 = vmatmul.mubr.f32.gmra.mxu0 %v316
    %v318 = vpop.f32.mrf.mxu0
    %v319 = vadd.f32 0.0, %v318
    %v320 = vpop.f32.mrf.mxu0
    %321 = vmatprep.mubr.f32.mxu0 0.0
    %v322 = vand.u32 %v98, 4294901760
    %v323 = vsub.f32 %v98, %v322
    %v324 = vand.u32 %v323, 4294901760
    %v325 = vsub.f32 %v323, %v324
    %v326 = vand.u32 %v325, 4294901760
    %327 = vmatmul.mubr.f32.gmra.mxu0 %v326
    %v328 = vpop.f32.mrf.mxu0
    %v329 = vadd.f32 0.0, %v328
    %v330 = vpop.f32.mrf.mxu0
    %331 = vmatprep.mubr.f32.mxu0 0.0
    %v332 = vand.u32 %v101, 4294901760
    %v333 = vsub.f32 %v101, %v332
    %v334 = vand.u32 %v333, 4294901760
    %v335 = vsub.f32 %v333, %v334
    %v336 = vand.u32 %v335, 4294901760
    %337 = vmatmul.mubr.f32.gmra.mxu0 %v336
    %v338 = vpop.f32.mrf.mxu0
    %v339 = vadd.f32 0.0, %v338
    %v340 = vpop.f32.mrf.mxu0
    %341 = vmatprep.mubr.f32.mxu0 0.0
    %v342 = vand.u32 %v104, 4294901760
    %v343 = vsub.f32 %v104, %v342
    %v344 = vand.u32 %v343, 4294901760
    %v345 = vsub.f32 %v343, %v344
    %v346 = vand.u32 %v345, 4294901760
    %347 = vmatmul.mubr.f32.gmra.mxu0 %v346
    %v348 = vpop.f32.mrf.mxu0
    %v349 = vadd.f32 0.0, %v348
    %v350 = vpop.f32.mrf.mxu0
    %351 = vdwg.mxu0
    %352 = vmatprep.subr.mxu0 0.0
    %353 = vmatpush1.msra.mxu0 0.0
    %354 = vmatprep.subr.mxu0 0.0
    %355 = vmatpush1.msra.mxu0 0.0
    %356 = vmatprep.subr.mxu0 0.0
    %357 = vmatpush1.msra.mxu0 0.0
    %358 = vmatprep.subr.mxu0 0.0
    %359 = vmatpush1.msra.mxu0 0.0
    %360 = vmatprep.subr.mxu0 0.0
    %361 = vmatpush1.msra.mxu0 0.0
    %362 = vmatprep.subr.mxu0 0.0
    %363 = vmatpush1.msra.mxu0 0.0
    %364 = vmatprep.subr.mxu0 0.0
    %365 = vmatpush1.msra.mxu0 0.0
    %366 = vmatprep.subr.mxu0 0.0
    %367 = vmatpush1.msra.mxu0 0.0
    %368 = vmatprep.subr.mxu0 0.0
    %369 = vmatpush1.msra.mxu0 0.0
    %370 = vmatprep.subr.mxu0 0.0
    %371 = vmatpush1.msra.mxu0 0.0
    %372 = vmatprep.subr.mxu0 0.0
    %373 = vmatpush1.msra.mxu0 0.0
    %374 = vmatprep.subr.mxu0 0.0
    %375 = vmatpush1.msra.mxu0 0.0
    %376 = vmatprep.subr.mxu0 0.0
    %377 = vmatpush1.msra.mxu0 0.0
    %378 = vmatprep.subr.mxu0 0.0
    %379 = vmatpush1.msra.mxu0 0.0
    %380 = vmatprep.subr.mxu0 0.0
    %381 = vmatpush1.msra.mxu0 0.0
    %382 = vmatprep.subr.mxu0 0.0
    %v383 = vand.u32 %v32, 4294901760
    %v384 = vsub.f32 %v32, %v383
    %v385 = vand.u32 %v384, 4294901760
    %v386 = vsub.f32 %v384, %v385
    %v387 = vand.u32 %v386, 4294901760
    %388 = vmatpush1.msra.mxu0 %v387
    %389 = vmatprep.subr.mxu0 0.0
    %390 = vmatpush2.msra.mxu0 0.0
    %391 = vmatprep.subr.mxu0 0.0
    %392 = vmatpush2.msra.mxu0 0.0
    %393 = vmatprep.subr.mxu0 0.0
    %394 = vmatpush2.msra.mxu0 0.0
    %395 = vmatprep.subr.mxu0 0.0
    %396 = vmatpush2.msra.mxu0 0.0
    %397 = vmatprep.subr.mxu0 0.0
    %398 = vmatpush2.msra.mxu0 0.0
    %399 = vmatprep.subr.mxu0 0.0
    %400 = vmatpush2.msra.mxu0 0.0
    %401 = vmatprep.subr.mxu0 0.0
    %402 = vmatpush2.msra.mxu0 0.0
    %403 = vmatprep.subr.mxu0 0.0
    %404 = vmatpush2.msra.mxu0 0.0
    %405 = vmatprep.subr.mxu0 0.0
    %406 = vmatpush2.msra.mxu0 0.0
    %407 = vmatprep.subr.mxu0 0.0
    %408 = vmatpush2.msra.mxu0 0.0
    %409 = vmatprep.subr.mxu0 0.0
    %410 = vmatpush2.msra.mxu0 0.0
    %411 = vmatprep.subr.mxu0 0.0
    %412 = vmatpush2.msra.mxu0 0.0
    %413 = vmatprep.subr.mxu0 0.0
    %414 = vmatpush2.msra.mxu0 0.0
    %415 = vmatprep.subr.mxu0 0.0
    %416 = vmatpush2.msra.mxu0 0.0
    %417 = vmatprep.subr.mxu0 0.0
    %418 = vmatpush2.msra.mxu0 0.0
    %419 = vmatprep.subr.mxu0 0.0
    %420 = vmatpush2.msra.mxu0 0.0
    %421 = vmatprep.mubr.f32.mxu0 0.0
    %v422 = vand.u32 %v53, 4294901760
    %423 = vmatmul.mubr.f32.gmra.mxu0 %v422
    %v424 = vpop.f32.mrf.mxu0
    %v425 = vadd.f32 %v179, %v424
    %v426 = vpop.f32.mrf.mxu0
    %427 = vmatprep.mubr.f32.mxu0 0.0
    %v428 = vand.u32 %v56, 4294901760
    %429 = vmatmul.mubr.f32.gmra.mxu0 %v428
    %v430 = vpop.f32.mrf.mxu0
    %v431 = vadd.f32 %v189, %v430
    %v432 = vpop.f32.mrf.mxu0
    %433 = vmatprep.mubr.f32.mxu0 0.0
    %v434 = vand.u32 %v59, 4294901760
    %435 = vmatmul.mubr.f32.gmra.mxu0 %v434
    %v436 = vpop.f32.mrf.mxu0
    %v437 = vadd.f32 %v199, %v436
    %v438 = vpop.f32.mrf.mxu0
    %439 = vmatprep.mubr.f32.mxu0 0.0
    %v440 = vand.u32 %v62, 4294901760
    %441 = vmatmul.mubr.f32.gmra.mxu0 %v440
    %v442 = vpop.f32.mrf.mxu0
    %v443 = vadd.f32 %v209, %v442
    %v444 = vpop.f32.mrf.mxu0
    %445 = vmatprep.mubr.f32.mxu0 0.0
    %v446 = vand.u32 %v65, 4294901760
    %447 = vmatmul.mubr.f32.gmra.mxu0 %v446
    %v448 = vpop.f32.mrf.mxu0
    %v449 = vadd.f32 %v219, %v448
    %v450 = vpop.f32.mrf.mxu0
    %451 = vmatprep.mubr.f32.mxu0 0.0
    %v452 = vand.u32 %v68, 4294901760
    %453 = vmatmul.mubr.f32.gmra.mxu0 %v452
    %v454 = vpop.f32.mrf.mxu0
    %v455 = vadd.f32 %v229, %v454
    %v456 = vpop.f32.mrf.mxu0
    %457 = vmatprep.mubr.f32.mxu0 0.0
    %v458 = vand.u32 %v71, 4294901760
    %459 = vmatmul.mubr.f32.gmra.mxu0 %v458
    %v460 = vpop.f32.mrf.mxu0
    %v461 = vadd.f32 %v239, %v460
    %v462 = vpop.f32.mrf.mxu0
    %463 = vmatprep.mubr.f32.mxu0 0.0
    %v464 = vand.u32 %v74, 4294901760
    %465 = vmatmul.mubr.f32.gmra.mxu0 %v464
    %v466 = vpop.f32.mrf.mxu0
    %v467 = vadd.f32 %v249, %v466
    %v468 = vpop.f32.mrf.mxu0
    %469 = vmatprep.mubr.f32.mxu0 0.0
    %v470 = vand.u32 %v77, 4294901760
    %471 = vmatmul.mubr.f32.gmra.mxu0 %v470
    %v472 = vpop.f32.mrf.mxu0
    %v473 = vadd.f32 %v259, %v472
    %v474 = vpop.f32.mrf.mxu0
    %475 = vmatprep.mubr.f32.mxu0 0.0
    %v476 = vand.u32 %v80, 4294901760
    %477 = vmatmul.mubr.f32.gmra.mxu0 %v476
    %v478 = vpop.f32.mrf.mxu0
    %v479 = vadd.f32 %v269, %v478
    %v480 = vpop.f32.mrf.mxu0
    %481 = vmatprep.mubr.f32.mxu0 0.0
    %v482 = vand.u32 %v83, 4294901760
    %483 = vmatmul.mubr.f32.gmra.mxu0 %v482
    %v484 = vpop.f32.mrf.mxu0
    %v485 = vadd.f32 %v279, %v484
    %v486 = vpop.f32.mrf.mxu0
    %487 = vmatprep.mubr.f32.mxu0 0.0
    %v488 = vand.u32 %v86, 4294901760
    %489 = vmatmul.mubr.f32.gmra.mxu0 %v488
    %v490 = vpop.f32.mrf.mxu0
    %v491 = vadd.f32 %v289, %v490
    %v492 = vpop.f32.mrf.mxu0
    %493 = vmatprep.mubr.f32.mxu0 0.0
    %v494 = vand.u32 %v89, 4294901760
    %495 = vmatmul.mubr.f32.gmra.mxu0 %v494
    %v496 = vpop.f32.mrf.mxu0
    %v497 = vadd.f32 %v299, %v496
    %v498 = vpop.f32.mrf.mxu0
    %499 = vmatprep.mubr.f32.mxu0 0.0
    %v500 = vand.u32 %v92, 4294901760
    %501 = vmatmul.mubr.f32.gmra.mxu0 %v500
    %v502 = vpop.f32.mrf.mxu0
    %v503 = vadd.f32 %v309, %v502
    %v504 = vpop.f32.mrf.mxu0
    %505 = vmatprep.mubr.f32.mxu0 0.0
    %v506 = vand.u32 %v95, 4294901760
    %507 = vmatmul.mubr.f32.gmra.mxu0 %v506
    %v508 = vpop.f32.mrf.mxu0
    %v509 = vadd.f32 %v319, %v508
    %v510 = vpop.f32.mrf.mxu0
    %511 = vmatprep.mubr.f32.mxu0 0.0
    %v512 = vand.u32 %v98, 4294901760
    %513 = vmatmul.mubr.f32.gmra.mxu0 %v512
    %v514 = vpop.f32.mrf.mxu0
    %v515 = vadd.f32 %v329, %v514
    %v516 = vpop.f32.mrf.mxu0
    %517 = vmatprep.mubr.f32.mxu0 0.0
    %v518 = vand.u32 %v101, 4294901760
    %519 = vmatmul.mubr.f32.gmra.mxu0 %v518
    %v520 = vpop.f32.mrf.mxu0
    %v521 = vadd.f32 %v339, %v520
    %v522 = vpop.f32.mrf.mxu0
    %523 = vmatprep.mubr.f32.mxu0 0.0
    %v524 = vand.u32 %v104, 4294901760
    %525 = vmatmul.mubr.f32.gmra.mxu0 %v524
    %v526 = vpop.f32.mrf.mxu0
    %v527 = vadd.f32 %v349, %v526
    %v528 = vpop.f32.mrf.mxu0
    %529 = vdwg.mxu0
    %530 = vmatprep.subr.mxu0 0.0
    %531 = vmatpush1.msra.mxu0 0.0
    %532 = vmatprep.subr.mxu0 0.0
    %533 = vmatpush1.msra.mxu0 0.0
    %534 = vmatprep.subr.mxu0 0.0
    %535 = vmatpush1.msra.mxu0 0.0
    %536 = vmatprep.subr.mxu0 0.0
    %537 = vmatpush1.msra.mxu0 0.0
    %538 = vmatprep.subr.mxu0 0.0
    %539 = vmatpush1.msra.mxu0 0.0
    %540 = vmatprep.subr.mxu0 0.0
    %541 = vmatpush1.msra.mxu0 0.0
    %542 = vmatprep.subr.mxu0 0.0
    %543 = vmatpush1.msra.mxu0 0.0
    %544 = vmatprep.subr.mxu0 0.0
    %545 = vmatpush1.msra.mxu0 0.0
    %546 = vmatprep.subr.mxu0 0.0
    %547 = vmatpush1.msra.mxu0 0.0
    %548 = vmatprep.subr.mxu0 0.0
    %549 = vmatpush1.msra.mxu0 0.0
    %550 = vmatprep.subr.mxu0 0.0
    %551 = vmatpush1.msra.mxu0 0.0
    %552 = vmatprep.subr.mxu0 0.0
    %553 = vmatpush1.msra.mxu0 0.0
    %554 = vmatprep.subr.mxu0 0.0
    %555 = vmatpush1.msra.mxu0 0.0
    %556 = vmatprep.subr.mxu0 0.0
    %557 = vmatpush1.msra.mxu0 0.0
    %558 = vmatprep.subr.mxu0 0.0
    %559 = vmatpush1.msra.mxu0 0.0
    %560 = vmatprep.subr.mxu0 0.0
    %v561 = vand.u32 %v32, 4294901760
    %v562 = vsub.f32 %v32, %v561
    %563 = vmatpush1.msra.mxu0 %v562
    %564 = vmatprep.subr.mxu0 0.0
    %565 = vmatpush2.msra.mxu0 0.0
    %566 = vmatprep.subr.mxu0 0.0
    %567 = vmatpush2.msra.mxu0 0.0
    %568 = vmatprep.subr.mxu0 0.0
    %569 = vmatpush2.msra.mxu0 0.0
    %570 = vmatprep.subr.mxu0 0.0
    %571 = vmatpush2.msra.mxu0 0.0
    %572 = vmatprep.subr.mxu0 0.0
    %573 = vmatpush2.msra.mxu0 0.0
    %574 = vmatprep.subr.mxu0 0.0
    %575 = vmatpush2.msra.mxu0 0.0
    %576 = vmatprep.subr.mxu0 0.0
    %577 = vmatpush2.msra.mxu0 0.0
    %578 = vmatprep.subr.mxu0 0.0
    %579 = vmatpush2.msra.mxu0 0.0
    %580 = vmatprep.subr.mxu0 0.0
    %581 = vmatpush2.msra.mxu0 0.0
    %582 = vmatprep.subr.mxu0 0.0
    %583 = vmatpush2.msra.mxu0 0.0
    %584 = vmatprep.subr.mxu0 0.0
    %585 = vmatpush2.msra.mxu0 0.0
    %586 = vmatprep.subr.mxu0 0.0
    %587 = vmatpush2.msra.mxu0 0.0
    %588 = vmatprep.subr.mxu0 0.0
    %589 = vmatpush2.msra.mxu0 0.0
    %590 = vmatprep.subr.mxu0 0.0
    %591 = vmatpush2.msra.mxu0 0.0
    %592 = vmatprep.subr.mxu0 0.0
    %593 = vmatpush2.msra.mxu0 0.0
    %594 = vmatprep.subr.mxu0 0.0
    %595 = vmatpush2.msra.mxu0 0.0
    %596 = vmatprep.mubr.f32.mxu0 0.0
    %v597 = vand.u32 %v53, 4294901760
    %v598 = vsub.f32 %v53, %v597
    %599 = vmatmul.mubr.f32.gmra.mxu0 %v598
    %v600 = vpop.f32.mrf.mxu0
    %v601 = vadd.f32 %v425, %v600
    %v602 = vpop.f32.mrf.mxu0
    %603 = vmatprep.mubr.f32.mxu0 0.0
    %v604 = vand.u32 %v56, 4294901760
    %v605 = vsub.f32 %v56, %v604
    %606 = vmatmul.mubr.f32.gmra.mxu0 %v605
    %v607 = vpop.f32.mrf.mxu0
    %v608 = vadd.f32 %v431, %v607
    %v609 = vpop.f32.mrf.mxu0
    %610 = vmatprep.mubr.f32.mxu0 0.0
    %v611 = vand.u32 %v59, 4294901760
    %v612 = vsub.f32 %v59, %v611
    %613 = vmatmul.mubr.f32.gmra.mxu0 %v612
    %v614 = vpop.f32.mrf.mxu0
    %v615 = vadd.f32 %v437, %v614
    %v616 = vpop.f32.mrf.mxu0
    %617 = vmatprep.mubr.f32.mxu0 0.0
    %v618 = vand.u32 %v62, 4294901760
    %v619 = vsub.f32 %v62, %v618
    %620 = vmatmul.mubr.f32.gmra.mxu0 %v619
    %v621 = vpop.f32.mrf.mxu0
    %v622 = vadd.f32 %v443, %v621
    %v623 = vpop.f32.mrf.mxu0
    %624 = vmatprep.mubr.f32.mxu0 0.0
    %v625 = vand.u32 %v65, 4294901760
    %v626 = vsub.f32 %v65, %v625
    %627 = vmatmul.mubr.f32.gmra.mxu0 %v626
    %v628 = vpop.f32.mrf.mxu0
    %v629 = vadd.f32 %v449, %v628
    %v630 = vpop.f32.mrf.mxu0
    %631 = vmatprep.mubr.f32.mxu0 0.0
    %v632 = vand.u32 %v68, 4294901760
    %v633 = vsub.f32 %v68, %v632
    %634 = vmatmul.mubr.f32.gmra.mxu0 %v633
    %v635 = vpop.f32.mrf.mxu0
    %v636 = vadd.f32 %v455, %v635
    %v637 = vpop.f32.mrf.mxu0
    %638 = vmatprep.mubr.f32.mxu0 0.0
    %v639 = vand.u32 %v71, 4294901760
    %v640 = vsub.f32 %v71, %v639
    %641 = vmatmul.mubr.f32.gmra.mxu0 %v640
    %v642 = vpop.f32.mrf.mxu0
    %v643 = vadd.f32 %v461, %v642
    %v644 = vpop.f32.mrf.mxu0
    %645 = vmatprep.mubr.f32.mxu0 0.0
    %v646 = vand.u32 %v74, 4294901760
    %v647 = vsub.f32 %v74, %v646
    %648 = vmatmul.mubr.f32.gmra.mxu0 %v647
    %v649 = vpop.f32.mrf.mxu0
    %v650 = vadd.f32 %v467, %v649
    %v651 = vpop.f32.mrf.mxu0
    %652 = vmatprep.mubr.f32.mxu0 0.0
    %v653 = vand.u32 %v77, 4294901760
    %v654 = vsub.f32 %v77, %v653
    %655 = vmatmul.mubr.f32.gmra.mxu0 %v654
    %v656 = vpop.f32.mrf.mxu0
    %v657 = vadd.f32 %v473, %v656
    %v658 = vpop.f32.mrf.mxu0
    %659 = vmatprep.mubr.f32.mxu0 0.0
    %v660 = vand.u32 %v80, 4294901760
    %v661 = vsub.f32 %v80, %v660
    %662 = vmatmul.mubr.f32.gmra.mxu0 %v661
    %v663 = vpop.f32.mrf.mxu0
    %v664 = vadd.f32 %v479, %v663
    %v665 = vpop.f32.mrf.mxu0
    %666 = vmatprep.mubr.f32.mxu0 0.0
    %v667 = vand.u32 %v83, 4294901760
    %v668 = vsub.f32 %v83, %v667
    %669 = vmatmul.mubr.f32.gmra.mxu0 %v668
    %v670 = vpop.f32.mrf.mxu0
    %v671 = vadd.f32 %v485, %v670
    %v672 = vpop.f32.mrf.mxu0
    %673 = vmatprep.mubr.f32.mxu0 0.0
    %v674 = vand.u32 %v86, 4294901760
    %v675 = vsub.f32 %v86, %v674
    %676 = vmatmul.mubr.f32.gmra.mxu0 %v675
    %v677 = vpop.f32.mrf.mxu0
    %v678 = vadd.f32 %v491, %v677
    %v679 = vpop.f32.mrf.mxu0
    %680 = vmatprep.mubr.f32.mxu0 0.0
    %v681 = vand.u32 %v89, 4294901760
    %v682 = vsub.f32 %v89, %v681
    %683 = vmatmul.mubr.f32.gmra.mxu0 %v682
    %v684 = vpop.f32.mrf.mxu0
    %v685 = vadd.f32 %v497, %v684
    %v686 = vpop.f32.mrf.mxu0
    %687 = vmatprep.mubr.f32.mxu0 0.0
    %v688 = vand.u32 %v92, 4294901760
    %v689 = vsub.f32 %v92, %v688
    %690 = vmatmul.mubr.f32.gmra.mxu0 %v689
    %v691 = vpop.f32.mrf.mxu0
    %v692 = vadd.f32 %v503, %v691
    %v693 = vpop.f32.mrf.mxu0
    %694 = vmatprep.mubr.f32.mxu0 0.0
    %v695 = vand.u32 %v95, 4294901760
    %v696 = vsub.f32 %v95, %v695
    %697 = vmatmul.mubr.f32.gmra.mxu0 %v696
    %v698 = vpop.f32.mrf.mxu0
    %v699 = vadd.f32 %v509, %v698
    %v700 = vpop.f32.mrf.mxu0
    %701 = vmatprep.mubr.f32.mxu0 0.0
    %v702 = vand.u32 %v98, 4294901760
    %v703 = vsub.f32 %v98, %v702
    %704 = vmatmul.mubr.f32.gmra.mxu0 %v703
    %v705 = vpop.f32.mrf.mxu0
    %v706 = vadd.f32 %v515, %v705
    %v707 = vpop.f32.mrf.mxu0
    %708 = vmatprep.mubr.f32.mxu0 0.0
    %v709 = vand.u32 %v101, 4294901760
    %v710 = vsub.f32 %v101, %v709
    %711 = vmatmul.mubr.f32.gmra.mxu0 %v710
    %v712 = vpop.f32.mrf.mxu0
    %v713 = vadd.f32 %v521, %v712
    %v714 = vpop.f32.mrf.mxu0
    %715 = vmatprep.mubr.f32.mxu0 0.0
    %v716 = vand.u32 %v104, 4294901760
    %v717 = vsub.f32 %v104, %v716
    %718 = vmatmul.mubr.f32.gmra.mxu0 %v717
    %v719 = vpop.f32.mrf.mxu0
    %v720 = vadd.f32 %v527, %v719
    %v721 = vpop.f32.mrf.mxu0
    %722 = vdwg.mxu0
    %723 = vmatprep.subr.mxu0 0.0
    %724 = vmatpush1.msra.mxu0 0.0
    %725 = vmatprep.subr.mxu0 0.0
    %726 = vmatpush1.msra.mxu0 0.0
    %727 = vmatprep.subr.mxu0 0.0
    %728 = vmatpush1.msra.mxu0 0.0
    %729 = vmatprep.subr.mxu0 0.0
    %730 = vmatpush1.msra.mxu0 0.0
    %731 = vmatprep.subr.mxu0 0.0
    %732 = vmatpush1.msra.mxu0 0.0
    %733 = vmatprep.subr.mxu0 0.0
    %734 = vmatpush1.msra.mxu0 0.0
    %735 = vmatprep.subr.mxu0 0.0
    %736 = vmatpush1.msra.mxu0 0.0
    %737 = vmatprep.subr.mxu0 0.0
    %738 = vmatpush1.msra.mxu0 0.0
    %739 = vmatprep.subr.mxu0 0.0
    %740 = vmatpush1.msra.mxu0 0.0
    %741 = vmatprep.subr.mxu0 0.0
    %742 = vmatpush1.msra.mxu0 0.0
    %743 = vmatprep.subr.mxu0 0.0
    %744 = vmatpush1.msra.mxu0 0.0
    %745 = vmatprep.subr.mxu0 0.0
    %746 = vmatpush1.msra.mxu0 0.0
    %747 = vmatprep.subr.mxu0 0.0
    %748 = vmatpush1.msra.mxu0 0.0
    %749 = vmatprep.subr.mxu0 0.0
    %750 = vmatpush1.msra.mxu0 0.0
    %751 = vmatprep.subr.mxu0 0.0
    %752 = vmatpush1.msra.mxu0 0.0
    %753 = vmatprep.subr.mxu0 0.0
    %v754 = vand.u32 %v32, 4294901760
    %755 = vmatpush1.msra.mxu0 %v754
    %756 = vmatprep.subr.mxu0 0.0
    %757 = vmatpush2.msra.mxu0 0.0
    %758 = vmatprep.subr.mxu0 0.0
    %759 = vmatpush2.msra.mxu0 0.0
    %760 = vmatprep.subr.mxu0 0.0
    %761 = vmatpush2.msra.mxu0 0.0
    %762 = vmatprep.subr.mxu0 0.0
    %763 = vmatpush2.msra.mxu0 0.0
    %764 = vmatprep.subr.mxu0 0.0
    %765 = vmatpush2.msra.mxu0 0.0
    %766 = vmatprep.subr.mxu0 0.0
    %767 = vmatpush2.msra.mxu0 0.0
    %768 = vmatprep.subr.mxu0 0.0
    %769 = vmatpush2.msra.mxu0 0.0
    %770 = vmatprep.subr.mxu0 0.0
    %771 = vmatpush2.msra.mxu0 0.0
    %772 = vmatprep.subr.mxu0 0.0
    %773 = vmatpush2.msra.mxu0 0.0
    %774 = vmatprep.subr.mxu0 0.0
    %775 = vmatpush2.msra.mxu0 0.0
    %776 = vmatprep.subr.mxu0 0.0
    %777 = vmatpush2.msra.mxu0 0.0
    %778 = vmatprep.subr.mxu0 0.0
    %779 = vmatpush2.msra.mxu0 0.0
    %780 = vmatprep.subr.mxu0 0.0
    %781 = vmatpush2.msra.mxu0 0.0
    %782 = vmatprep.subr.mxu0 0.0
    %783 = vmatpush2.msra.mxu0 0.0
    %784 = vmatprep.subr.mxu0 0.0
    %785 = vmatpush2.msra.mxu0 0.0
    %786 = vmatprep.subr.mxu0 0.0
    %787 = vmatpush2.msra.mxu0 0.0
    %788 = vmatprep.mubr.f32.mxu0 0.0
    %v789 = vand.u32 %v53, 4294901760
    %v790 = vsub.f32 %v53, %v789
    %v791 = vand.u32 %v790, 4294901760
    %792 = vmatmul.mubr.f32.gmra.mxu0 %v791
    %v793 = vpop.f32.mrf.mxu0
    %v794 = vadd.f32 %v601, %v793
    %v795 = vpop.f32.mrf.mxu0
    %796 = vmatprep.mubr.f32.mxu0 0.0
    %v797 = vand.u32 %v56, 4294901760
    %v798 = vsub.f32 %v56, %v797
    %v799 = vand.u32 %v798, 4294901760
    %800 = vmatmul.mubr.f32.gmra.mxu0 %v799
    %v801 = vpop.f32.mrf.mxu0
    %v802 = vadd.f32 %v608, %v801
    %v803 = vpop.f32.mrf.mxu0
    %804 = vmatprep.mubr.f32.mxu0 0.0
    %v805 = vand.u32 %v59, 4294901760
    %v806 = vsub.f32 %v59, %v805
    %v807 = vand.u32 %v806, 4294901760
    %808 = vmatmul.mubr.f32.gmra.mxu0 %v807
    %v809 = vpop.f32.mrf.mxu0
    %v810 = vadd.f32 %v615, %v809
    %v811 = vpop.f32.mrf.mxu0
    %812 = vmatprep.mubr.f32.mxu0 0.0
    %v813 = vand.u32 %v62, 4294901760
    %v814 = vsub.f32 %v62, %v813
    %v815 = vand.u32 %v814, 4294901760
    %816 = vmatmul.mubr.f32.gmra.mxu0 %v815
    %v817 = vpop.f32.mrf.mxu0
    %v818 = vadd.f32 %v622, %v817
    %v819 = vpop.f32.mrf.mxu0
    %820 = vmatprep.mubr.f32.mxu0 0.0
    %v821 = vand.u32 %v65, 4294901760
    %v822 = vsub.f32 %v65, %v821
    %v823 = vand.u32 %v822, 4294901760
    %824 = vmatmul.mubr.f32.gmra.mxu0 %v823
    %v825 = vpop.f32.mrf.mxu0
    %v826 = vadd.f32 %v629, %v825
    %v827 = vpop.f32.mrf.mxu0
    %828 = vmatprep.mubr.f32.mxu0 0.0
    %v829 = vand.u32 %v68, 4294901760
    %v830 = vsub.f32 %v68, %v829
    %v831 = vand.u32 %v830, 4294901760
    %832 = vmatmul.mubr.f32.gmra.mxu0 %v831
    %v833 = vpop.f32.mrf.mxu0
    %v834 = vadd.f32 %v636, %v833
    %v835 = vpop.f32.mrf.mxu0
    %836 = vmatprep.mubr.f32.mxu0 0.0
    %v837 = vand.u32 %v71, 4294901760
    %v838 = vsub.f32 %v71, %v837
    %v839 = vand.u32 %v838, 4294901760
    %840 = vmatmul.mubr.f32.gmra.mxu0 %v839
    %v841 = vpop.f32.mrf.mxu0
    %v842 = vadd.f32 %v643, %v841
    %v843 = vpop.f32.mrf.mxu0
    %844 = vmatprep.mubr.f32.mxu0 0.0
    %v845 = vand.u32 %v74, 4294901760
    %v846 = vsub.f32 %v74, %v845
    %v847 = vand.u32 %v846, 4294901760
    %848 = vmatmul.mubr.f32.gmra.mxu0 %v847
    %v849 = vpop.f32.mrf.mxu0
    %v850 = vadd.f32 %v650, %v849
    %v851 = vpop.f32.mrf.mxu0
    %852 = vmatprep.mubr.f32.mxu0 0.0
    %v853 = vand.u32 %v77, 4294901760
    %v854 = vsub.f32 %v77, %v853
    %v855 = vand.u32 %v854, 4294901760
    %856 = vmatmul.mubr.f32.gmra.mxu0 %v855
    %v857 = vpop.f32.mrf.mxu0
    %v858 = vadd.f32 %v657, %v857
    %v859 = vpop.f32.mrf.mxu0
    %860 = vmatprep.mubr.f32.mxu0 0.0
    %v861 = vand.u32 %v80, 4294901760
    %v862 = vsub.f32 %v80, %v861
    %v863 = vand.u32 %v862, 4294901760
    %864 = vmatmul.mubr.f32.gmra.mxu0 %v863
    %v865 = vpop.f32.mrf.mxu0
    %v866 = vadd.f32 %v664, %v865
    %v867 = vpop.f32.mrf.mxu0
    %868 = vmatprep.mubr.f32.mxu0 0.0
    %v869 = vand.u32 %v83, 4294901760
    %v870 = vsub.f32 %v83, %v869
    %v871 = vand.u32 %v870, 4294901760
    %872 = vmatmul.mubr.f32.gmra.mxu0 %v871
    %v873 = vpop.f32.mrf.mxu0
    %v874 = vadd.f32 %v671, %v873
    %v875 = vpop.f32.mrf.mxu0
    %876 = vmatprep.mubr.f32.mxu0 0.0
    %v877 = vand.u32 %v86, 4294901760
    %v878 = vsub.f32 %v86, %v877
    %v879 = vand.u32 %v878, 4294901760
    %880 = vmatmul.mubr.f32.gmra.mxu0 %v879
    %v881 = vpop.f32.mrf.mxu0
    %v882 = vadd.f32 %v678, %v881
    %v883 = vpop.f32.mrf.mxu0
    %884 = vmatprep.mubr.f32.mxu0 0.0
    %v885 = vand.u32 %v89, 4294901760
    %v886 = vsub.f32 %v89, %v885
    %v887 = vand.u32 %v886, 4294901760
    %888 = vmatmul.mubr.f32.gmra.mxu0 %v887
    %v889 = vpop.f32.mrf.mxu0
    %v890 = vadd.f32 %v685, %v889
    %v891 = vpop.f32.mrf.mxu0
    %892 = vmatprep.mubr.f32.mxu0 0.0
    %v893 = vand.u32 %v92, 4294901760
    %v894 = vsub.f32 %v92, %v893
    %v895 = vand.u32 %v894, 4294901760
    %896 = vmatmul.mubr.f32.gmra.mxu0 %v895
    %v897 = vpop.f32.mrf.mxu0
    %v898 = vadd.f32 %v692, %v897
    %v899 = vpop.f32.mrf.mxu0
    %900 = vmatprep.mubr.f32.mxu0 0.0
    %v901 = vand.u32 %v95, 4294901760
    %v902 = vsub.f32 %v95, %v901
    %v903 = vand.u32 %v902, 4294901760
    %904 = vmatmul.mubr.f32.gmra.mxu0 %v903
    %v905 = vpop.f32.mrf.mxu0
    %v906 = vadd.f32 %v699, %v905
    %v907 = vpop.f32.mrf.mxu0
    %908 = vmatprep.mubr.f32.mxu0 0.0
    %v909 = vand.u32 %v98, 4294901760
    %v910 = vsub.f32 %v98, %v909
    %v911 = vand.u32 %v910, 4294901760
    %912 = vmatmul.mubr.f32.gmra.mxu0 %v911
    %v913 = vpop.f32.mrf.mxu0
    %v914 = vadd.f32 %v706, %v913
    %v915 = vpop.f32.mrf.mxu0
    %916 = vmatprep.mubr.f32.mxu0 0.0
    %v917 = vand.u32 %v101, 4294901760
    %v918 = vsub.f32 %v101, %v917
    %v919 = vand.u32 %v918, 4294901760
    %920 = vmatmul.mubr.f32.gmra.mxu0 %v919
    %v921 = vpop.f32.mrf.mxu0
    %v922 = vadd.f32 %v713, %v921
    %v923 = vpop.f32.mrf.mxu0
    %924 = vmatprep.mubr.f32.mxu0 0.0
    %v925 = vand.u32 %v104, 4294901760
    %v926 = vsub.f32 %v104, %v925
    %v927 = vand.u32 %v926, 4294901760
    %928 = vmatmul.mubr.f32.gmra.mxu0 %v927
    %v929 = vpop.f32.mrf.mxu0
    %v930 = vadd.f32 %v720, %v929
    %v931 = vpop.f32.mrf.mxu0
    %932 = vdwg.mxu0
    %933 = vmatprep.subr.mxu0 0.0
    %934 = vmatpush1.msra.mxu0 0.0
    %935 = vmatprep.subr.mxu0 0.0
    %936 = vmatpush1.msra.mxu0 0.0
    %937 = vmatprep.subr.mxu0 0.0
    %938 = vmatpush1.msra.mxu0 0.0
    %939 = vmatprep.subr.mxu0 0.0
    %940 = vmatpush1.msra.mxu0 0.0
    %941 = vmatprep.subr.mxu0 0.0
    %942 = vmatpush1.msra.mxu0 0.0
    %943 = vmatprep.subr.mxu0 0.0
    %944 = vmatpush1.msra.mxu0 0.0
    %945 = vmatprep.subr.mxu0 0.0
    %946 = vmatpush1.msra.mxu0 0.0
    %947 = vmatprep.subr.mxu0 0.0
    %948 = vmatpush1.msra.mxu0 0.0
    %949 = vmatprep.subr.mxu0 0.0
    %950 = vmatpush1.msra.mxu0 0.0
    %951 = vmatprep.subr.mxu0 0.0
    %952 = vmatpush1.msra.mxu0 0.0
    %953 = vmatprep.subr.mxu0 0.0
    %954 = vmatpush1.msra.mxu0 0.0
    %955 = vmatprep.subr.mxu0 0.0
    %956 = vmatpush1.msra.mxu0 0.0
    %957 = vmatprep.subr.mxu0 0.0
    %958 = vmatpush1.msra.mxu0 0.0
    %959 = vmatprep.subr.mxu0 0.0
    %960 = vmatpush1.msra.mxu0 0.0
    %961 = vmatprep.subr.mxu0 0.0
    %962 = vmatpush1.msra.mxu0 0.0
    %963 = vmatprep.subr.mxu0 0.0
    %v964 = vand.u32 %v32, 4294901760
    %v965 = vsub.f32 %v32, %v964
    %v966 = vand.u32 %v965, 4294901760
    %967 = vmatpush1.msra.mxu0 %v966
    %968 = vmatprep.subr.mxu0 0.0
    %969 = vmatpush2.msra.mxu0 0.0
    %970 = vmatprep.subr.mxu0 0.0
    %971 = vmatpush2.msra.mxu0 0.0
    %972 = vmatprep.subr.mxu0 0.0
    %973 = vmatpush2.msra.mxu0 0.0
    %974 = vmatprep.subr.mxu0 0.0
    %975 = vmatpush2.msra.mxu0 0.0
    %976 = vmatprep.subr.mxu0 0.0
    %977 = vmatpush2.msra.mxu0 0.0
    %978 = vmatprep.subr.mxu0 0.0
    %979 = vmatpush2.msra.mxu0 0.0
    %980 = vmatprep.subr.mxu0 0.0
    %981 = vmatpush2.msra.mxu0 0.0
    %982 = vmatprep.subr.mxu0 0.0
    %983 = vmatpush2.msra.mxu0 0.0
    %984 = vmatprep.subr.mxu0 0.0
    %985 = vmatpush2.msra.mxu0 0.0
    %986 = vmatprep.subr.mxu0 0.0
    %987 = vmatpush2.msra.mxu0 0.0
    %988 = vmatprep.subr.mxu0 0.0
    %989 = vmatpush2.msra.mxu0 0.0
    %990 = vmatprep.subr.mxu0 0.0
    %991 = vmatpush2.msra.mxu0 0.0
    %992 = vmatprep.subr.mxu0 0.0
    %993 = vmatpush2.msra.mxu0 0.0
    %994 = vmatprep.subr.mxu0 0.0
    %995 = vmatpush2.msra.mxu0 0.0
    %996 = vmatprep.subr.mxu0 0.0
    %997 = vmatpush2.msra.mxu0 0.0
    %998 = vmatprep.subr.mxu0 0.0
    %999 = vmatpush2.msra.mxu0 0.0
    %1000 = vmatprep.mubr.f32.mxu0 0.0
    %v1001 = vand.u32 %v53, 4294901760
    %1002 = vmatmul.mubr.f32.gmra.mxu0 %v1001
    %v1003 = vpop.f32.mrf.mxu0
    %v1004 = vadd.f32 %v794, %v1003
    %v1005 = vpop.f32.mrf.mxu0
    %1006 = vmatprep.mubr.f32.mxu0 0.0
    %v1007 = vand.u32 %v56, 4294901760
    %1008 = vmatmul.mubr.f32.gmra.mxu0 %v1007
    %v1009 = vpop.f32.mrf.mxu0
    %v1010 = vadd.f32 %v802, %v1009
    %v1011 = vpop.f32.mrf.mxu0
    %1012 = vmatprep.mubr.f32.mxu0 0.0
    %v1013 = vand.u32 %v59, 4294901760
    %1014 = vmatmul.mubr.f32.gmra.mxu0 %v1013
    %v1015 = vpop.f32.mrf.mxu0
    %v1016 = vadd.f32 %v810, %v1015
    %v1017 = vpop.f32.mrf.mxu0
    %1018 = vmatprep.mubr.f32.mxu0 0.0
    %v1019 = vand.u32 %v62, 4294901760
    %1020 = vmatmul.mubr.f32.gmra.mxu0 %v1019
    %v1021 = vpop.f32.mrf.mxu0
    %v1022 = vadd.f32 %v818, %v1021
    %v1023 = vpop.f32.mrf.mxu0
    %1024 = vmatprep.mubr.f32.mxu0 0.0
    %v1025 = vand.u32 %v65, 4294901760
    %1026 = vmatmul.mubr.f32.gmra.mxu0 %v1025
    %v1027 = vpop.f32.mrf.mxu0
    %v1028 = vadd.f32 %v826, %v1027
    %v1029 = vpop.f32.mrf.mxu0
    %1030 = vmatprep.mubr.f32.mxu0 0.0
    %v1031 = vand.u32 %v68, 4294901760
    %1032 = vmatmul.mubr.f32.gmra.mxu0 %v1031
    %v1033 = vpop.f32.mrf.mxu0
    %v1034 = vadd.f32 %v834, %v1033
    %v1035 = vpop.f32.mrf.mxu0
    %1036 = vmatprep.mubr.f32.mxu0 0.0
    %v1037 = vand.u32 %v71, 4294901760
    %1038 = vmatmul.mubr.f32.gmra.mxu0 %v1037
    %v1039 = vpop.f32.mrf.mxu0
    %v1040 = vadd.f32 %v842, %v1039
    %v1041 = vpop.f32.mrf.mxu0
    %1042 = vmatprep.mubr.f32.mxu0 0.0
    %v1043 = vand.u32 %v74, 4294901760
    %1044 = vmatmul.mubr.f32.gmra.mxu0 %v1043
    %v1045 = vpop.f32.mrf.mxu0
    %v1046 = vadd.f32 %v850, %v1045
    %v1047 = vpop.f32.mrf.mxu0
    %1048 = vmatprep.mubr.f32.mxu0 0.0
    %v1049 = vand.u32 %v77, 4294901760
    %1050 = vmatmul.mubr.f32.gmra.mxu0 %v1049
    %v1051 = vpop.f32.mrf.mxu0
    %v1052 = vadd.f32 %v858, %v1051
    %v1053 = vpop.f32.mrf.mxu0
    %1054 = vmatprep.mubr.f32.mxu0 0.0
    %v1055 = vand.u32 %v80, 4294901760
    %1056 = vmatmul.mubr.f32.gmra.mxu0 %v1055
    %v1057 = vpop.f32.mrf.mxu0
    %v1058 = vadd.f32 %v866, %v1057
    %v1059 = vpop.f32.mrf.mxu0
    %1060 = vmatprep.mubr.f32.mxu0 0.0
    %v1061 = vand.u32 %v83, 4294901760
    %1062 = vmatmul.mubr.f32.gmra.mxu0 %v1061
    %v1063 = vpop.f32.mrf.mxu0
    %v1064 = vadd.f32 %v874, %v1063
    %v1065 = vpop.f32.mrf.mxu0
    %1066 = vmatprep.mubr.f32.mxu0 0.0
    %v1067 = vand.u32 %v86, 4294901760
    %1068 = vmatmul.mubr.f32.gmra.mxu0 %v1067
    %v1069 = vpop.f32.mrf.mxu0
    %v1070 = vadd.f32 %v882, %v1069
    %v1071 = vpop.f32.mrf.mxu0
    %1072 = vmatprep.mubr.f32.mxu0 0.0
    %v1073 = vand.u32 %v89, 4294901760
    %1074 = vmatmul.mubr.f32.gmra.mxu0 %v1073
    %v1075 = vpop.f32.mrf.mxu0
    %v1076 = vadd.f32 %v890, %v1075
    %v1077 = vpop.f32.mrf.mxu0
    %1078 = vmatprep.mubr.f32.mxu0 0.0
    %v1079 = vand.u32 %v92, 4294901760
    %1080 = vmatmul.mubr.f32.gmra.mxu0 %v1079
    %v1081 = vpop.f32.mrf.mxu0
    %v1082 = vadd.f32 %v898, %v1081
    %v1083 = vpop.f32.mrf.mxu0
    %1084 = vmatprep.mubr.f32.mxu0 0.0
    %v1085 = vand.u32 %v95, 4294901760
    %1086 = vmatmul.mubr.f32.gmra.mxu0 %v1085
    %v1087 = vpop.f32.mrf.mxu0
    %v1088 = vadd.f32 %v906, %v1087
    %v1089 = vpop.f32.mrf.mxu0
    %1090 = vmatprep.mubr.f32.mxu0 0.0
    %v1091 = vand.u32 %v98, 4294901760
    %1092 = vmatmul.mubr.f32.gmra.mxu0 %v1091
    %v1093 = vpop.f32.mrf.mxu0
    %v1094 = vadd.f32 %v914, %v1093
    %v1095 = vpop.f32.mrf.mxu0
    %1096 = vmatprep.mubr.f32.mxu0 0.0
    %v1097 = vand.u32 %v101, 4294901760
    %1098 = vmatmul.mubr.f32.gmra.mxu0 %v1097
    %v1099 = vpop.f32.mrf.mxu0
    %v1100 = vadd.f32 %v922, %v1099
    %v1101 = vpop.f32.mrf.mxu0
    %1102 = vmatprep.mubr.f32.mxu0 0.0
    %v1103 = vand.u32 %v104, 4294901760
    %1104 = vmatmul.mubr.f32.gmra.mxu0 %v1103
    %v1105 = vpop.f32.mrf.mxu0
    %v1106 = vadd.f32 %v930, %v1105
    %v1107 = vpop.f32.mrf.mxu0
    %1108 = vdwg.mxu0
    %1109 = vmatprep.subr.mxu0 0.0
    %1110 = vmatpush1.msra.mxu0 0.0
    %1111 = vmatprep.subr.mxu0 0.0
    %1112 = vmatpush1.msra.mxu0 0.0
    %1113 = vmatprep.subr.mxu0 0.0
    %1114 = vmatpush1.msra.mxu0 0.0
    %1115 = vmatprep.subr.mxu0 0.0
    %1116 = vmatpush1.msra.mxu0 0.0
    %1117 = vmatprep.subr.mxu0 0.0
    %1118 = vmatpush1.msra.mxu0 0.0
    %1119 = vmatprep.subr.mxu0 0.0
    %1120 = vmatpush1.msra.mxu0 0.0
    %1121 = vmatprep.subr.mxu0 0.0
    %1122 = vmatpush1.msra.mxu0 0.0
    %1123 = vmatprep.subr.mxu0 0.0
    %1124 = vmatpush1.msra.mxu0 0.0
    %1125 = vmatprep.subr.mxu0 0.0
    %1126 = vmatpush1.msra.mxu0 0.0
    %1127 = vmatprep.subr.mxu0 0.0
    %1128 = vmatpush1.msra.mxu0 0.0
    %1129 = vmatprep.subr.mxu0 0.0
    %1130 = vmatpush1.msra.mxu0 0.0
    %1131 = vmatprep.subr.mxu0 0.0
    %1132 = vmatpush1.msra.mxu0 0.0
    %1133 = vmatprep.subr.mxu0 0.0
    %1134 = vmatpush1.msra.mxu0 0.0
    %1135 = vmatprep.subr.mxu0 0.0
    %1136 = vmatpush1.msra.mxu0 0.0
    %1137 = vmatprep.subr.mxu0 0.0
    %1138 = vmatpush1.msra.mxu0 0.0
    %1139 = vmatprep.subr.mxu0 0.0
    %v1140 = vand.u32 %v32, 4294901760
    %1141 = vmatpush1.msra.mxu0 %v1140
    %1142 = vmatprep.subr.mxu0 0.0
    %1143 = vmatpush2.msra.mxu0 0.0
    %1144 = vmatprep.subr.mxu0 0.0
    %1145 = vmatpush2.msra.mxu0 0.0
    %1146 = vmatprep.subr.mxu0 0.0
    %1147 = vmatpush2.msra.mxu0 0.0
    %1148 = vmatprep.subr.mxu0 0.0
    %1149 = vmatpush2.msra.mxu0 0.0
    %1150 = vmatprep.subr.mxu0 0.0
    %1151 = vmatpush2.msra.mxu0 0.0
    %1152 = vmatprep.subr.mxu0 0.0
    %1153 = vmatpush2.msra.mxu0 0.0
    %1154 = vmatprep.subr.mxu0 0.0
    %1155 = vmatpush2.msra.mxu0 0.0
    %1156 = vmatprep.subr.mxu0 0.0
    %1157 = vmatpush2.msra.mxu0 0.0
    %1158 = vmatprep.subr.mxu0 0.0
    %1159 = vmatpush2.msra.mxu0 0.0
    %1160 = vmatprep.subr.mxu0 0.0
    %1161 = vmatpush2.msra.mxu0 0.0
    %1162 = vmatprep.subr.mxu0 0.0
    %1163 = vmatpush2.msra.mxu0 0.0
    %1164 = vmatprep.subr.mxu0 0.0
    %1165 = vmatpush2.msra.mxu0 0.0
    %1166 = vmatprep.subr.mxu0 0.0
    %1167 = vmatpush2.msra.mxu0 0.0
    %1168 = vmatprep.subr.mxu0 0.0
    %1169 = vmatpush2.msra.mxu0 0.0
    %1170 = vmatprep.subr.mxu0 0.0
    %1171 = vmatpush2.msra.mxu0 0.0
    %1172 = vmatprep.subr.mxu0 0.0
    %1173 = vmatpush2.msra.mxu0 0.0
    %1174 = vmatprep.mubr.f32.mxu0 0.0
    %v1175 = vand.u32 %v53, 4294901760
    %1176 = vmatmul.mubr.f32.gmra.mxu0 %v1175
    %v1177 = vpop.f32.mrf.mxu0
    %v1178 = vadd.f32 %v1004, %v1177
    %v1179 = vpop.f32.mrf.mxu0
    %1180 = vmatprep.mubr.f32.mxu0 0.0
    %v1181 = vand.u32 %v56, 4294901760
    %1182 = vmatmul.mubr.f32.gmra.mxu0 %v1181
    %v1183 = vpop.f32.mrf.mxu0
    %v1184 = vadd.f32 %v1010, %v1183
    %v1185 = vpop.f32.mrf.mxu0
    %1186 = vmatprep.mubr.f32.mxu0 0.0
    %v1187 = vand.u32 %v59, 4294901760
    %1188 = vmatmul.mubr.f32.gmra.mxu0 %v1187
    %v1189 = vpop.f32.mrf.mxu0
    %v1190 = vadd.f32 %v1016, %v1189
    %v1191 = vpop.f32.mrf.mxu0
    %1192 = vmatprep.mubr.f32.mxu0 0.0
    %v1193 = vand.u32 %v62, 4294901760
    %1194 = vmatmul.mubr.f32.gmra.mxu0 %v1193
    %v1195 = vpop.f32.mrf.mxu0
    %v1196 = vadd.f32 %v1022, %v1195
    %v1197 = vpop.f32.mrf.mxu0
    %1198 = vmatprep.mubr.f32.mxu0 0.0
    %v1199 = vand.u32 %v65, 4294901760
    %1200 = vmatmul.mubr.f32.gmra.mxu0 %v1199
    %v1201 = vpop.f32.mrf.mxu0
    %v1202 = vadd.f32 %v1028, %v1201
    %v1203 = vpop.f32.mrf.mxu0
    %1204 = vmatprep.mubr.f32.mxu0 0.0
    %v1205 = vand.u32 %v68, 4294901760
    %1206 = vmatmul.mubr.f32.gmra.mxu0 %v1205
    %v1207 = vpop.f32.mrf.mxu0
    %v1208 = vadd.f32 %v1034, %v1207
    %v1209 = vpop.f32.mrf.mxu0
    %1210 = vmatprep.mubr.f32.mxu0 0.0
    %v1211 = vand.u32 %v71, 4294901760
    %1212 = vmatmul.mubr.f32.gmra.mxu0 %v1211
    %v1213 = vpop.f32.mrf.mxu0
    %v1214 = vadd.f32 %v1040, %v1213
    %v1215 = vpop.f32.mrf.mxu0
    %1216 = vmatprep.mubr.f32.mxu0 0.0
    %v1217 = vand.u32 %v74, 4294901760
    %1218 = vmatmul.mubr.f32.gmra.mxu0 %v1217
    %v1219 = vpop.f32.mrf.mxu0
    %v1220 = vadd.f32 %v1046, %v1219
    %v1221 = vpop.f32.mrf.mxu0
    %1222 = vmatprep.mubr.f32.mxu0 0.0
    %v1223 = vand.u32 %v77, 4294901760
    %1224 = vmatmul.mubr.f32.gmra.mxu0 %v1223
    %v1225 = vpop.f32.mrf.mxu0
    %v1226 = vadd.f32 %v1052, %v1225
    %v1227 = vpop.f32.mrf.mxu0
    %1228 = vmatprep.mubr.f32.mxu0 0.0
    %v1229 = vand.u32 %v80, 4294901760
    %1230 = vmatmul.mubr.f32.gmra.mxu0 %v1229
    %v1231 = vpop.f32.mrf.mxu0
    %v1232 = vadd.f32 %v1058, %v1231
    %v1233 = vpop.f32.mrf.mxu0
    %1234 = vmatprep.mubr.f32.mxu0 0.0
    %v1235 = vand.u32 %v83, 4294901760
    %1236 = vmatmul.mubr.f32.gmra.mxu0 %v1235
    %v1237 = vpop.f32.mrf.mxu0
    %v1238 = vadd.f32 %v1064, %v1237
    %v1239 = vpop.f32.mrf.mxu0
    %1240 = vmatprep.mubr.f32.mxu0 0.0
    %v1241 = vand.u32 %v86, 4294901760
    %1242 = vmatmul.mubr.f32.gmra.mxu0 %v1241
    %v1243 = vpop.f32.mrf.mxu0
    %v1244 = vadd.f32 %v1070, %v1243
    %v1245 = vpop.f32.mrf.mxu0
    %1246 = vmatprep.mubr.f32.mxu0 0.0
    %v1247 = vand.u32 %v89, 4294901760
    %1248 = vmatmul.mubr.f32.gmra.mxu0 %v1247
    %v1249 = vpop.f32.mrf.mxu0
    %v1250 = vadd.f32 %v1076, %v1249
    %v1251 = vpop.f32.mrf.mxu0
    %1252 = vmatprep.mubr.f32.mxu0 0.0
    %v1253 = vand.u32 %v92, 4294901760
    %1254 = vmatmul.mubr.f32.gmra.mxu0 %v1253
    %v1255 = vpop.f32.mrf.mxu0
    %v1256 = vadd.f32 %v1082, %v1255
    %v1257 = vpop.f32.mrf.mxu0
    %1258 = vmatprep.mubr.f32.mxu0 0.0
    %v1259 = vand.u32 %v95, 4294901760
    %1260 = vmatmul.mubr.f32.gmra.mxu0 %v1259
    %v1261 = vpop.f32.mrf.mxu0
    %v1262 = vadd.f32 %v1088, %v1261
    %v1263 = vpop.f32.mrf.mxu0
    %1264 = vmatprep.mubr.f32.mxu0 0.0
    %v1265 = vand.u32 %v98, 4294901760
    %1266 = vmatmul.mubr.f32.gmra.mxu0 %v1265
    %v1267 = vpop.f32.mrf.mxu0
    %v1268 = vadd.f32 %v1094, %v1267
    %v1269 = vpop.f32.mrf.mxu0
    %1270 = vmatprep.mubr.f32.mxu0 0.0
    %v1271 = vand.u32 %v101, 4294901760
    %1272 = vmatmul.mubr.f32.gmra.mxu0 %v1271
    %v1273 = vpop.f32.mrf.mxu0
    %v1274 = vadd.f32 %v1100, %v1273
    %v1275 = vpop.f32.mrf.mxu0
    %1276 = vmatprep.mubr.f32.mxu0 0.0
    %v1277 = vand.u32 %v104, 4294901760
    %1278 = vmatmul.mubr.f32.gmra.mxu0 %v1277
    %v1279 = vpop.f32.mrf.mxu0
    %v1280 = vadd.f32 %v1106, %v1279
    %v1281 = vpop.f32.mrf.mxu0
    %1282 = vdwg.mxu0
    %v1283 = vmax.f32 %v1178, 0.0
    %v1284 = vmax.f32 %v1184, 0.0
    %v1285 = vmax.f32 %v1190, 0.0
    %v1286 = vmax.f32 %v1196, 0.0
    %v1287 = vmax.f32 %v1202, 0.0
    %v1288 = vmax.f32 %v1208, 0.0
    %v1289 = vmax.f32 %v1214, 0.0
    %v1290 = vmax.f32 %v1220, 0.0
    %v1291 = vmax.f32 %v1226, 0.0
    %v1292 = vmax.f32 %v1232, 0.0
    %v1293 = vmax.f32 %v1238, 0.0
    %v1294 = vmax.f32 %v1244, 0.0
    %v1295 = vmax.f32 %v1250, 0.0
    %v1296 = vmax.f32 %v1256, 0.0
    %v1297 = vmax.f32 %v1262, 0.0
    %v1298 = vmax.f32 %v1268, 0.0
    %v1299 = vmax.f32 %v1274, 0.0
    %v1300 = vmax.f32 %v1280, 0.0
    %v1301 = vld [vmem:[#allocation2] sm:$0xff]
    %v1302 = vld [vmem:[#allocation2 + $0x8] sm:$0xff]
    %v1303 = vld [vmem:[#allocation2 + $0x10] sm:$0xff]
    %v1304 = vld [vmem:[#allocation2 + $0x18] sm:$0xff]
    %v1305 = vld [vmem:[#allocation2 + $0x20] sm:$0xff]
    %v1306 = vld [vmem:[#allocation2 + $0x28] sm:$0xff]
    %v1307 = vld [vmem:[#allocation2 + $0x30] sm:$0xff]
    %v1308 = vld [vmem:[#allocation2 + $0x38] sm:$0xff]
    %v1309 = vld [vmem:[#allocation2 + $0x40] sm:$0xff]
    %v1310 = vld [vmem:[#allocation2 + $0x48] sm:$0xff]
    %v1311 = vld [vmem:[#allocation2 + $0x50] sm:$0xff]
    %v1312 = vld [vmem:[#allocation2 + $0x58] sm:$0xff]
    %v1313 = vld [vmem:[#allocation2 + $0x60] sm:$0xff]
    %v1314 = vld [vmem:[#allocation2 + $0x68] sm:$0xff]
    %v1315 = vld [vmem:[#allocation2 + $0x70] sm:$0xff]
    %v1316 = vld [vmem:[#allocation2 + $0x78] sm:$0xff]
    %v1317 = vld [vmem:[#allocation2 + $0x80] sm:$0xff]
    %v1318 = vld [vmem:[#allocation2 + $0x88] sm:$0xff]
    %v1319 = vld [vmem:[#allocation2 + $0x90] sm:$0xff]
    %v1320 = vld [vmem:[#allocation2 + $0x98] sm:$0xff]
    %v1321 = vld [vmem:[#allocation2 + $0xa0] sm:$0xff]
    %v1322 = vld [vmem:[#allocation2 + $0xa8] sm:$0xff]
    %v1323 = vld [vmem:[#allocation2 + $0xb0] sm:$0xff]
    %v1324 = vld [vmem:[#allocation2 + $0xb8] sm:$0xff]
    %v1325 = vld [vmem:[#allocation2 + $0xc0] sm:$0xff]
    %v1326 = vld [vmem:[#allocation2 + $0xc8] sm:$0xff]
    %v1327 = vld [vmem:[#allocation2 + $0xd0] sm:$0xff]
    %v1328 = vld [vmem:[#allocation2 + $0xd8] sm:$0xff]
    %v1329 = vld [vmem:[#allocation2 + $0xe0] sm:$0xff]
    %v1330 = vld [vmem:[#allocation2 + $0xe8] sm:$0xff]
    %v1331 = vld [vmem:[#allocation2 + $0xf0] sm:$0xff]
    %v1332 = vld [vmem:[#allocation2 + $0xf8] sm:$0xff]
    %v1333 = vld [vmem:[#allocation2 + $0x100] sm:$0xff]
    %v1334 = vld [vmem:[#allocation2 + $0x108] sm:$0xff]
    %v1335 = vld [vmem:[#allocation2 + $0x110] sm:$0xff]
    %v1336 = vld [vmem:[#allocation2 + $0x118] sm:$0xff]
    %vm1337 = vcmask 130048
    %v1339 = vsel %vm1337, %v1302, 0
    %v1342 = vsel %vm1337, %v1304, 0
    %v1345 = vsel %vm1337, %v1306, 0
    %v1348 = vsel %vm1337, %v1308, 0
    %v1351 = vsel %vm1337, %v1310, 0
    %v1354 = vsel %vm1337, %v1312, 0
    %v1357 = vsel %vm1337, %v1314, 0
    %v1360 = vsel %vm1337, %v1316, 0
    %v1363 = vsel %vm1337, %v1318, 0
    %v1366 = vsel %vm1337, %v1320, 0
    %v1369 = vsel %vm1337, %v1322, 0
    %v1372 = vsel %vm1337, %v1324, 0
    %v1375 = vsel %vm1337, %v1326, 0
    %v1378 = vsel %vm1337, %v1328, 0
    %v1381 = vsel %vm1337, %v1330, 0
    %v1384 = vsel %vm1337, %v1332, 0
    %v1387 = vsel %vm1337, %v1334, 0
    %v1390 = vsel %vm1337, %v1336, 0
    %1392 = vmatprep.subr.mxu0 0.0
    %v1393 = vand.u32 %v1298, 4294901760
    %1394 = vmatpush1.msra.mxu0 %v1393
    %1395 = vmatprep.subr.mxu0 0.0
    %v1396 = vand.u32 %v1297, 4294901760
    %1397 = vmatpush1.msra.mxu0 %v1396
    %1398 = vmatprep.subr.mxu0 0.0
    %v1399 = vand.u32 %v1296, 4294901760
    %1400 = vmatpush1.msra.mxu0 %v1399
    %1401 = vmatprep.subr.mxu0 0.0
    %v1402 = vand.u32 %v1295, 4294901760
    %1403 = vmatpush1.msra.mxu0 %v1402
    %1404 = vmatprep.subr.mxu0 0.0
    %v1405 = vand.u32 %v1294, 4294901760
    %1406 = vmatpush1.msra.mxu0 %v1405
    %1407 = vmatprep.subr.mxu0 0.0
    %v1408 = vand.u32 %v1293, 4294901760
    %1409 = vmatpush1.msra.mxu0 %v1408
    %1410 = vmatprep.subr.mxu0 0.0
    %v1411 = vand.u32 %v1292, 4294901760
    %1412 = vmatpush1.msra.mxu0 %v1411
    %1413 = vmatprep.subr.mxu0 0.0
    %v1414 = vand.u32 %v1291, 4294901760
    %1415 = vmatpush1.msra.mxu0 %v1414
    %1416 = vmatprep.subr.mxu0 0.0
    %v1417 = vand.u32 %v1290, 4294901760
    %1418 = vmatpush1.msra.mxu0 %v1417
    %1419 = vmatprep.subr.mxu0 0.0
    %v1420 = vand.u32 %v1289, 4294901760
    %1421 = vmatpush1.msra.mxu0 %v1420
    %1422 = vmatprep.subr.mxu0 0.0
    %v1423 = vand.u32 %v1288, 4294901760
    %1424 = vmatpush1.msra.mxu0 %v1423
    %1425 = vmatprep.subr.mxu0 0.0
    %v1426 = vand.u32 %v1287, 4294901760
    %1427 = vmatpush1.msra.mxu0 %v1426
    %1428 = vmatprep.subr.mxu0 0.0
    %v1429 = vand.u32 %v1286, 4294901760
    %1430 = vmatpush1.msra.mxu0 %v1429
    %1431 = vmatprep.subr.mxu0 0.0
    %v1432 = vand.u32 %v1285, 4294901760
    %1433 = vmatpush1.msra.mxu0 %v1432
    %1434 = vmatprep.subr.mxu0 0.0
    %v1435 = vand.u32 %v1284, 4294901760
    %1436 = vmatpush1.msra.mxu0 %v1435
    %1437 = vmatprep.subr.mxu0 0.0
    %v1438 = vand.u32 %v1283, 4294901760
    %1439 = vmatpush1.msra.mxu0 %v1438
    %1440 = vmatprep.subr.mxu0 0.0
    %1441 = vmatpush2.msra.mxu0 0.0
    %1442 = vmatprep.subr.mxu0 0.0
    %1443 = vmatpush2.msra.mxu0 0.0
    %1444 = vmatprep.subr.mxu0 0.0
    %1445 = vmatpush2.msra.mxu0 0.0
    %1446 = vmatprep.subr.mxu0 0.0
    %1447 = vmatpush2.msra.mxu0 0.0
    %1448 = vmatprep.subr.mxu0 0.0
    %1449 = vmatpush2.msra.mxu0 0.0
    %1450 = vmatprep.subr.mxu0 0.0
    %1451 = vmatpush2.msra.mxu0 0.0
    %1452 = vmatprep.subr.mxu0 0.0
    %1453 = vmatpush2.msra.mxu0 0.0
    %1454 = vmatprep.subr.mxu0 0.0
    %1455 = vmatpush2.msra.mxu0 0.0
    %1456 = vmatprep.subr.mxu0 0.0
    %1457 = vmatpush2.msra.mxu0 0.0
    %1458 = vmatprep.subr.mxu0 0.0
    %1459 = vmatpush2.msra.mxu0 0.0
    %1460 = vmatprep.subr.mxu0 0.0
    %1461 = vmatpush2.msra.mxu0 0.0
    %1462 = vmatprep.subr.mxu0 0.0
    %1463 = vmatpush2.msra.mxu0 0.0
    %1464 = vmatprep.subr.mxu0 0.0
    %1465 = vmatpush2.msra.mxu0 0.0
    %1466 = vmatprep.subr.mxu0 0.0
    %1467 = vmatpush2.msra.mxu0 0.0
    %1468 = vmatprep.subr.mxu0 0.0
    %v1469 = vand.u32 %v1300, 4294901760
    %1470 = vmatpush2.msra.mxu0 %v1469
    %1471 = vmatprep.subr.mxu0 0.0
    %v1472 = vand.u32 %v1299, 4294901760
    %1473 = vmatpush2.msra.mxu0 %v1472
    %v1474 = vand.u32 %v1339, 4294901760
    %v1475 = vsub.f32 %v1339, %v1474
    %v1476 = vand.u32 %v1475, 4294901760
    %v1477 = vsub.f32 %v1475, %v1476
    %v1478 = vand.u32 %v1477, 4294901760
    %1479 = vmatprep.mubr.f32.mxu0 %v1478
    %v1480 = vand.u32 %v1301, 4294901760
    %v1481 = vsub.f32 %v1301, %v1480
    %v1482 = vand.u32 %v1481, 4294901760
    %v1483 = vsub.f32 %v1481, %v1482
    %v1484 = vand.u32 %v1483, 4294901760
    %1485 = vmatmul.mubr.f32.gmra.mxu0 %v1484
    %v1486 = vpop.f32.mrf.mxu0
    %v1487 = vadd.f32 0.0, %v1486
    %v1488 = vpop.f32.mrf.mxu0
    %v1489 = vand.u32 %v1342, 4294901760
    %v1490 = vsub.f32 %v1342, %v1489
    %v1491 = vand.u32 %v1490, 4294901760
    %v1492 = vsub.f32 %v1490, %v1491
    %v1493 = vand.u32 %v1492, 4294901760
    %1494 = vmatprep.mubr.f32.mxu0 %v1493
    %v1495 = vand.u32 %v1303, 4294901760
    %v1496 = vsub.f32 %v1303, %v1495
    %v1497 = vand.u32 %v1496, 4294901760
    %v1498 = vsub.f32 %v1496, %v1497
    %v1499 = vand.u32 %v1498, 4294901760
    %1500 = vmatmul.mubr.f32.gmra.mxu0 %v1499
    %v1501 = vpop.f32.mrf.mxu0
    %v1502 = vadd.f32 0.0, %v1501
    %v1503 = vpop.f32.mrf.mxu0
    %v1504 = vand.u32 %v1345, 4294901760
    %v1505 = vsub.f32 %v1345, %v1504
    %v1506 = vand.u32 %v1505, 4294901760
    %v1507 = vsub.f32 %v1505, %v1506
    %v1508 = vand.u32 %v1507, 4294901760
    %1509 = vmatprep.mubr.f32.mxu0 %v1508
    %v1510 = vand.u32 %v1305, 4294901760
    %v1511 = vsub.f32 %v1305, %v1510
    %v1512 = vand.u32 %v1511, 4294901760
    %v1513 = vsub.f32 %v1511, %v1512
    %v1514 = vand.u32 %v1513, 4294901760
    %1515 = vmatmul.mubr.f32.gmra.mxu0 %v1514
    %v1516 = vpop.f32.mrf.mxu0
    %v1517 = vadd.f32 0.0, %v1516
    %v1518 = vpop.f32.mrf.mxu0
    %v1519 = vand.u32 %v1348, 4294901760
    %v1520 = vsub.f32 %v1348, %v1519
    %v1521 = vand.u32 %v1520, 4294901760
    %v1522 = vsub.f32 %v1520, %v1521
    %v1523 = vand.u32 %v1522, 4294901760
    %1524 = vmatprep.mubr.f32.mxu0 %v1523
    %v1525 = vand.u32 %v1307, 4294901760
    %v1526 = vsub.f32 %v1307, %v1525
    %v1527 = vand.u32 %v1526, 4294901760
    %v1528 = vsub.f32 %v1526, %v1527
    %v1529 = vand.u32 %v1528, 4294901760
    %1530 = vmatmul.mubr.f32.gmra.mxu0 %v1529
    %v1531 = vpop.f32.mrf.mxu0
    %v1532 = vadd.f32 0.0, %v1531
    %v1533 = vpop.f32.mrf.mxu0
    %v1534 = vand.u32 %v1351, 4294901760
    %v1535 = vsub.f32 %v1351, %v1534
    %v1536 = vand.u32 %v1535, 4294901760
    %v1537 = vsub.f32 %v1535, %v1536
    %v1538 = vand.u32 %v1537, 4294901760
    %1539 = vmatprep.mubr.f32.mxu0 %v1538
    %v1540 = vand.u32 %v1309, 4294901760
    %v1541 = vsub.f32 %v1309, %v1540
    %v1542 = vand.u32 %v1541, 4294901760
    %v1543 = vsub.f32 %v1541, %v1542
    %v1544 = vand.u32 %v1543, 4294901760
    %1545 = vmatmul.mubr.f32.gmra.mxu0 %v1544
    %v1546 = vpop.f32.mrf.mxu0
    %v1547 = vadd.f32 0.0, %v1546
    %v1548 = vpop.f32.mrf.mxu0
    %v1549 = vand.u32 %v1354, 4294901760
    %v1550 = vsub.f32 %v1354, %v1549
    %v1551 = vand.u32 %v1550, 4294901760
    %v1552 = vsub.f32 %v1550, %v1551
    %v1553 = vand.u32 %v1552, 4294901760
    %1554 = vmatprep.mubr.f32.mxu0 %v1553
    %v1555 = vand.u32 %v1311, 4294901760
    %v1556 = vsub.f32 %v1311, %v1555
    %v1557 = vand.u32 %v1556, 4294901760
    %v1558 = vsub.f32 %v1556, %v1557
    %v1559 = vand.u32 %v1558, 4294901760
    %1560 = vmatmul.mubr.f32.gmra.mxu0 %v1559
    %v1561 = vpop.f32.mrf.mxu0
    %v1562 = vadd.f32 0.0, %v1561
    %v1563 = vpop.f32.mrf.mxu0
    %v1564 = vand.u32 %v1357, 4294901760
    %v1565 = vsub.f32 %v1357, %v1564
    %v1566 = vand.u32 %v1565, 4294901760
    %v1567 = vsub.f32 %v1565, %v1566
    %v1568 = vand.u32 %v1567, 4294901760
    %1569 = vmatprep.mubr.f32.mxu0 %v1568
    %v1570 = vand.u32 %v1313, 4294901760
    %v1571 = vsub.f32 %v1313, %v1570
    %v1572 = vand.u32 %v1571, 4294901760
    %v1573 = vsub.f32 %v1571, %v1572
    %v1574 = vand.u32 %v1573, 4294901760
    %1575 = vmatmul.mubr.f32.gmra.mxu0 %v1574
    %v1576 = vpop.f32.mrf.mxu0
    %v1577 = vadd.f32 0.0, %v1576
    %v1578 = vpop.f32.mrf.mxu0
    %v1579 = vand.u32 %v1360, 4294901760
    %v1580 = vsub.f32 %v1360, %v1579
    %v1581 = vand.u32 %v1580, 4294901760
    %v1582 = vsub.f32 %v1580, %v1581
    %v1583 = vand.u32 %v1582, 4294901760
    %1584 = vmatprep.mubr.f32.mxu0 %v1583
    %v1585 = vand.u32 %v1315, 4294901760
    %v1586 = vsub.f32 %v1315, %v1585
    %v1587 = vand.u32 %v1586, 4294901760
    %v1588 = vsub.f32 %v1586, %v1587
    %v1589 = vand.u32 %v1588, 4294901760
    %1590 = vmatmul.mubr.f32.gmra.mxu0 %v1589
    %v1591 = vpop.f32.mrf.mxu0
    %v1592 = vadd.f32 0.0, %v1591
    %v1593 = vpop.f32.mrf.mxu0
    %v1594 = vand.u32 %v1363, 4294901760
    %v1595 = vsub.f32 %v1363, %v1594
    %v1596 = vand.u32 %v1595, 4294901760
    %v1597 = vsub.f32 %v1595, %v1596
    %v1598 = vand.u32 %v1597, 4294901760
    %1599 = vmatprep.mubr.f32.mxu0 %v1598
    %v1600 = vand.u32 %v1317, 4294901760
    %v1601 = vsub.f32 %v1317, %v1600
    %v1602 = vand.u32 %v1601, 4294901760
    %v1603 = vsub.f32 %v1601, %v1602
    %v1604 = vand.u32 %v1603, 4294901760
    %1605 = vmatmul.mubr.f32.gmra.mxu0 %v1604
    %v1606 = vpop.f32.mrf.mxu0
    %v1607 = vadd.f32 0.0, %v1606
    %v1608 = vpop.f32.mrf.mxu0
    %v1609 = vand.u32 %v1366, 4294901760
    %v1610 = vsub.f32 %v1366, %v1609
    %v1611 = vand.u32 %v1610, 4294901760
    %v1612 = vsub.f32 %v1610, %v1611
    %v1613 = vand.u32 %v1612, 4294901760
    %1614 = vmatprep.mubr.f32.mxu0 %v1613
    %v1615 = vand.u32 %v1319, 4294901760
    %v1616 = vsub.f32 %v1319, %v1615
    %v1617 = vand.u32 %v1616, 4294901760
    %v1618 = vsub.f32 %v1616, %v1617
    %v1619 = vand.u32 %v1618, 4294901760
    %1620 = vmatmul.mubr.f32.gmra.mxu0 %v1619
    %v1621 = vpop.f32.mrf.mxu0
    %v1622 = vadd.f32 0.0, %v1621
    %v1623 = vpop.f32.mrf.mxu0
    %v1624 = vand.u32 %v1369, 4294901760
    %v1625 = vsub.f32 %v1369, %v1624
    %v1626 = vand.u32 %v1625, 4294901760
    %v1627 = vsub.f32 %v1625, %v1626
    %v1628 = vand.u32 %v1627, 4294901760
    %1629 = vmatprep.mubr.f32.mxu0 %v1628
    %v1630 = vand.u32 %v1321, 4294901760
    %v1631 = vsub.f32 %v1321, %v1630
    %v1632 = vand.u32 %v1631, 4294901760
    %v1633 = vsub.f32 %v1631, %v1632
    %v1634 = vand.u32 %v1633, 4294901760
    %1635 = vmatmul.mubr.f32.gmra.mxu0 %v1634
    %v1636 = vpop.f32.mrf.mxu0
    %v1637 = vadd.f32 0.0, %v1636
    %v1638 = vpop.f32.mrf.mxu0
    %v1639 = vand.u32 %v1372, 4294901760
    %v1640 = vsub.f32 %v1372, %v1639
    %v1641 = vand.u32 %v1640, 4294901760
    %v1642 = vsub.f32 %v1640, %v1641
    %v1643 = vand.u32 %v1642, 4294901760
    %1644 = vmatprep.mubr.f32.mxu0 %v1643
    %v1645 = vand.u32 %v1323, 4294901760
    %v1646 = vsub.f32 %v1323, %v1645
    %v1647 = vand.u32 %v1646, 4294901760
    %v1648 = vsub.f32 %v1646, %v1647
    %v1649 = vand.u32 %v1648, 4294901760
    %1650 = vmatmul.mubr.f32.gmra.mxu0 %v1649
    %v1651 = vpop.f32.mrf.mxu0
    %v1652 = vadd.f32 0.0, %v1651
    %v1653 = vpop.f32.mrf.mxu0
    %v1654 = vand.u32 %v1375, 4294901760
    %v1655 = vsub.f32 %v1375, %v1654
    %v1656 = vand.u32 %v1655, 4294901760
    %v1657 = vsub.f32 %v1655, %v1656
    %v1658 = vand.u32 %v1657, 4294901760
    %1659 = vmatprep.mubr.f32.mxu0 %v1658
    %v1660 = vand.u32 %v1325, 4294901760
    %v1661 = vsub.f32 %v1325, %v1660
    %v1662 = vand.u32 %v1661, 4294901760
    %v1663 = vsub.f32 %v1661, %v1662
    %v1664 = vand.u32 %v1663, 4294901760
    %1665 = vmatmul.mubr.f32.gmra.mxu0 %v1664
    %v1666 = vpop.f32.mrf.mxu0
    %v1667 = vadd.f32 0.0, %v1666
    %v1668 = vpop.f32.mrf.mxu0
    %v1669 = vand.u32 %v1378, 4294901760
    %v1670 = vsub.f32 %v1378, %v1669
    %v1671 = vand.u32 %v1670, 4294901760
    %v1672 = vsub.f32 %v1670, %v1671
    %v1673 = vand.u32 %v1672, 4294901760
    %1674 = vmatprep.mubr.f32.mxu0 %v1673
    %v1675 = vand.u32 %v1327, 4294901760
    %v1676 = vsub.f32 %v1327, %v1675
    %v1677 = vand.u32 %v1676, 4294901760
    %v1678 = vsub.f32 %v1676, %v1677
    %v1679 = vand.u32 %v1678, 4294901760
    %1680 = vmatmul.mubr.f32.gmra.mxu0 %v1679
    %v1681 = vpop.f32.mrf.mxu0
    %v1682 = vadd.f32 0.0, %v1681
    %v1683 = vpop.f32.mrf.mxu0
    %v1684 = vand.u32 %v1381, 4294901760
    %v1685 = vsub.f32 %v1381, %v1684
    %v1686 = vand.u32 %v1685, 4294901760
    %v1687 = vsub.f32 %v1685, %v1686
    %v1688 = vand.u32 %v1687, 4294901760
    %1689 = vmatprep.mubr.f32.mxu0 %v1688
    %v1690 = vand.u32 %v1329, 4294901760
    %v1691 = vsub.f32 %v1329, %v1690
    %v1692 = vand.u32 %v1691, 4294901760
    %v1693 = vsub.f32 %v1691, %v1692
    %v1694 = vand.u32 %v1693, 4294901760
    %1695 = vmatmul.mubr.f32.gmra.mxu0 %v1694
    %v1696 = vpop.f32.mrf.mxu0
    %v1697 = vadd.f32 0.0, %v1696
    %v1698 = vpop.f32.mrf.mxu0
    %v1699 = vand.u32 %v1384, 4294901760
    %v1700 = vsub.f32 %v1384, %v1699
    %v1701 = vand.u32 %v1700, 4294901760
    %v1702 = vsub.f32 %v1700, %v1701
    %v1703 = vand.u32 %v1702, 4294901760
    %1704 = vmatprep.mubr.f32.mxu0 %v1703
    %v1705 = vand.u32 %v1331, 4294901760
    %v1706 = vsub.f32 %v1331, %v1705
    %v1707 = vand.u32 %v1706, 4294901760
    %v1708 = vsub.f32 %v1706, %v1707
    %v1709 = vand.u32 %v1708, 4294901760
    %1710 = vmatmul.mubr.f32.gmra.mxu0 %v1709
    %v1711 = vpop.f32.mrf.mxu0
    %v1712 = vadd.f32 0.0, %v1711
    %v1713 = vpop.f32.mrf.mxu0
    %v1714 = vand.u32 %v1387, 4294901760
    %v1715 = vsub.f32 %v1387, %v1714
    %v1716 = vand.u32 %v1715, 4294901760
    %v1717 = vsub.f32 %v1715, %v1716
    %v1718 = vand.u32 %v1717, 4294901760
    %1719 = vmatprep.mubr.f32.mxu0 %v1718
    %v1720 = vand.u32 %v1333, 4294901760
    %v1721 = vsub.f32 %v1333, %v1720
    %v1722 = vand.u32 %v1721, 4294901760
    %v1723 = vsub.f32 %v1721, %v1722
    %v1724 = vand.u32 %v1723, 4294901760
    %1725 = vmatmul.mubr.f32.gmra.mxu0 %v1724
    %v1726 = vpop.f32.mrf.mxu0
    %v1727 = vadd.f32 0.0, %v1726
    %v1728 = vpop.f32.mrf.mxu0
    %v1729 = vand.u32 %v1390, 4294901760
    %v1730 = vsub.f32 %v1390, %v1729
    %v1731 = vand.u32 %v1730, 4294901760
    %v1732 = vsub.f32 %v1730, %v1731
    %v1733 = vand.u32 %v1732, 4294901760
    %1734 = vmatprep.mubr.f32.mxu0 %v1733
    %v1735 = vand.u32 %v1335, 4294901760
    %v1736 = vsub.f32 %v1335, %v1735
    %v1737 = vand.u32 %v1736, 4294901760
    %v1738 = vsub.f32 %v1736, %v1737
    %v1739 = vand.u32 %v1738, 4294901760
    %1740 = vmatmul.mubr.f32.gmra.mxu0 %v1739
    %v1741 = vpop.f32.mrf.mxu0
    %v1742 = vadd.f32 0.0, %v1741
    %v1743 = vpop.f32.mrf.mxu0
    %1744 = vdwg.mxu0
    %1745 = vmatprep.subr.mxu0 0.0
    %v1746 = vand.u32 %v1298, 4294901760
    %v1747 = vsub.f32 %v1298, %v1746
    %v1748 = vand.u32 %v1747, 4294901760
    %v1749 = vsub.f32 %v1747, %v1748
    %v1750 = vand.u32 %v1749, 4294901760
    %1751 = vmatpush1.msra.mxu0 %v1750
    %1752 = vmatprep.subr.mxu0 0.0
    %v1753 = vand.u32 %v1297, 4294901760
    %v1754 = vsub.f32 %v1297, %v1753
    %v1755 = vand.u32 %v1754, 4294901760
    %v1756 = vsub.f32 %v1754, %v1755
    %v1757 = vand.u32 %v1756, 4294901760
    %1758 = vmatpush1.msra.mxu0 %v1757
    %1759 = vmatprep.subr.mxu0 0.0
    %v1760 = vand.u32 %v1296, 4294901760
    %v1761 = vsub.f32 %v1296, %v1760
    %v1762 = vand.u32 %v1761, 4294901760
    %v1763 = vsub.f32 %v1761, %v1762
    %v1764 = vand.u32 %v1763, 4294901760
    %1765 = vmatpush1.msra.mxu0 %v1764
    %1766 = vmatprep.subr.mxu0 0.0
    %v1767 = vand.u32 %v1295, 4294901760
    %v1768 = vsub.f32 %v1295, %v1767
    %v1769 = vand.u32 %v1768, 4294901760
    %v1770 = vsub.f32 %v1768, %v1769
    %v1771 = vand.u32 %v1770, 4294901760
    %1772 = vmatpush1.msra.mxu0 %v1771
    %1773 = vmatprep.subr.mxu0 0.0
    %v1774 = vand.u32 %v1294, 4294901760
    %v1775 = vsub.f32 %v1294, %v1774
    %v1776 = vand.u32 %v1775, 4294901760
    %v1777 = vsub.f32 %v1775, %v1776
    %v1778 = vand.u32 %v1777, 4294901760
    %1779 = vmatpush1.msra.mxu0 %v1778
    %1780 = vmatprep.subr.mxu0 0.0
    %v1781 = vand.u32 %v1293, 4294901760
    %v1782 = vsub.f32 %v1293, %v1781
    %v1783 = vand.u32 %v1782, 4294901760
    %v1784 = vsub.f32 %v1782, %v1783
    %v1785 = vand.u32 %v1784, 4294901760
    %1786 = vmatpush1.msra.mxu0 %v1785
    %1787 = vmatprep.subr.mxu0 0.0
    %v1788 = vand.u32 %v1292, 4294901760
    %v1789 = vsub.f32 %v1292, %v1788
    %v1790 = vand.u32 %v1789, 4294901760
    %v1791 = vsub.f32 %v1789, %v1790
    %v1792 = vand.u32 %v1791, 4294901760
    %1793 = vmatpush1.msra.mxu0 %v1792
    %1794 = vmatprep.subr.mxu0 0.0
    %v1795 = vand.u32 %v1291, 4294901760
    %v1796 = vsub.f32 %v1291, %v1795
    %v1797 = vand.u32 %v1796, 4294901760
    %v1798 = vsub.f32 %v1796, %v1797
    %v1799 = vand.u32 %v1798, 4294901760
    %1800 = vmatpush1.msra.mxu0 %v1799
    %1801 = vmatprep.subr.mxu0 0.0
    %v1802 = vand.u32 %v1290, 4294901760
    %v1803 = vsub.f32 %v1290, %v1802
    %v1804 = vand.u32 %v1803, 4294901760
    %v1805 = vsub.f32 %v1803, %v1804
    %v1806 = vand.u32 %v1805, 4294901760
    %1807 = vmatpush1.msra.mxu0 %v1806
    %1808 = vmatprep.subr.mxu0 0.0
    %v1809 = vand.u32 %v1289, 4294901760
    %v1810 = vsub.f32 %v1289, %v1809
    %v1811 = vand.u32 %v1810, 4294901760
    %v1812 = vsub.f32 %v1810, %v1811
    %v1813 = vand.u32 %v1812, 4294901760
    %1814 = vmatpush1.msra.mxu0 %v1813
    %1815 = vmatprep.subr.mxu0 0.0
    %v1816 = vand.u32 %v1288, 4294901760
    %v1817 = vsub.f32 %v1288, %v1816
    %v1818 = vand.u32 %v1817, 4294901760
    %v1819 = vsub.f32 %v1817, %v1818
    %v1820 = vand.u32 %v1819, 4294901760
    %1821 = vmatpush1.msra.mxu0 %v1820
    %1822 = vmatprep.subr.mxu0 0.0
    %v1823 = vand.u32 %v1287, 4294901760
    %v1824 = vsub.f32 %v1287, %v1823
    %v1825 = vand.u32 %v1824, 4294901760
    %v1826 = vsub.f32 %v1824, %v1825
    %v1827 = vand.u32 %v1826, 4294901760
    %1828 = vmatpush1.msra.mxu0 %v1827
    %1829 = vmatprep.subr.mxu0 0.0
    %v1830 = vand.u32 %v1286, 4294901760
    %v1831 = vsub.f32 %v1286, %v1830
    %v1832 = vand.u32 %v1831, 4294901760
    %v1833 = vsub.f32 %v1831, %v1832
    %v1834 = vand.u32 %v1833, 4294901760
    %1835 = vmatpush1.msra.mxu0 %v1834
    %1836 = vmatprep.subr.mxu0 0.0
    %v1837 = vand.u32 %v1285, 4294901760
    %v1838 = vsub.f32 %v1285, %v1837
    %v1839 = vand.u32 %v1838, 4294901760
    %v1840 = vsub.f32 %v1838, %v1839
    %v1841 = vand.u32 %v1840, 4294901760
    %1842 = vmatpush1.msra.mxu0 %v1841
    %1843 = vmatprep.subr.mxu0 0.0
    %v1844 = vand.u32 %v1284, 4294901760
    %v1845 = vsub.f32 %v1284, %v1844
    %v1846 = vand.u32 %v1845, 4294901760
    %v1847 = vsub.f32 %v1845, %v1846
    %v1848 = vand.u32 %v1847, 4294901760
    %1849 = vmatpush1.msra.mxu0 %v1848
    %1850 = vmatprep.subr.mxu0 0.0
    %v1851 = vand.u32 %v1283, 4294901760
    %v1852 = vsub.f32 %v1283, %v1851
    %v1853 = vand.u32 %v1852, 4294901760
    %v1854 = vsub.f32 %v1852, %v1853
    %v1855 = vand.u32 %v1854, 4294901760
    %1856 = vmatpush1.msra.mxu0 %v1855
    %1857 = vmatprep.subr.mxu0 0.0
    %1858 = vmatpush2.msra.mxu0 0.0
    %1859 = vmatprep.subr.mxu0 0.0
    %1860 = vmatpush2.msra.mxu0 0.0
    %1861 = vmatprep.subr.mxu0 0.0
    %1862 = vmatpush2.msra.mxu0 0.0
    %1863 = vmatprep.subr.mxu0 0.0
    %1864 = vmatpush2.msra.mxu0 0.0
    %1865 = vmatprep.subr.mxu0 0.0
    %1866 = vmatpush2.msra.mxu0 0.0
    %1867 = vmatprep.subr.mxu0 0.0
    %1868 = vmatpush2.msra.mxu0 0.0
    %1869 = vmatprep.subr.mxu0 0.0
    %1870 = vmatpush2.msra.mxu0 0.0
    %1871 = vmatprep.subr.mxu0 0.0
    %1872 = vmatpush2.msra.mxu0 0.0
    %1873 = vmatprep.subr.mxu0 0.0
    %1874 = vmatpush2.msra.mxu0 0.0
    %1875 = vmatprep.subr.mxu0 0.0
    %1876 = vmatpush2.msra.mxu0 0.0
    %1877 = vmatprep.subr.mxu0 0.0
    %1878 = vmatpush2.msra.mxu0 0.0
    %1879 = vmatprep.subr.mxu0 0.0
    %1880 = vmatpush2.msra.mxu0 0.0
    %1881 = vmatprep.subr.mxu0 0.0
    %1882 = vmatpush2.msra.mxu0 0.0
    %1883 = vmatprep.subr.mxu0 0.0
    %1884 = vmatpush2.msra.mxu0 0.0
    %1885 = vmatprep.subr.mxu0 0.0
    %v1886 = vand.u32 %v1300, 4294901760
    %v1887 = vsub.f32 %v1300, %v1886
    %v1888 = vand.u32 %v1887, 4294901760
    %v1889 = vsub.f32 %v1887, %v1888
    %v1890 = vand.u32 %v1889, 4294901760
    %1891 = vmatpush2.msra.mxu0 %v1890
    %1892 = vmatprep.subr.mxu0 0.0
    %v1893 = vand.u32 %v1299, 4294901760
    %v1894 = vsub.f32 %v1299, %v1893
    %v1895 = vand.u32 %v1894, 4294901760
    %v1896 = vsub.f32 %v1894, %v1895
    %v1897 = vand.u32 %v1896, 4294901760
    %1898 = vmatpush2.msra.mxu0 %v1897
    %v1899 = vand.u32 %v1339, 4294901760
    %1900 = vmatprep.mubr.f32.mxu0 %v1899
    %v1901 = vand.u32 %v1301, 4294901760
    %1902 = vmatmul.mubr.f32.gmra.mxu0 %v1901
    %v1903 = vpop.f32.mrf.mxu0
    %v1904 = vadd.f32 %v1487, %v1903
    %v1905 = vpop.f32.mrf.mxu0
    %v1906 = vand.u32 %v1342, 4294901760
    %1907 = vmatprep.mubr.f32.mxu0 %v1906
    %v1908 = vand.u32 %v1303, 4294901760
    %1909 = vmatmul.mubr.f32.gmra.mxu0 %v1908
    %v1910 = vpop.f32.mrf.mxu0
    %v1911 = vadd.f32 %v1502, %v1910
    %v1912 = vpop.f32.mrf.mxu0
    %v1913 = vand.u32 %v1345, 4294901760
    %1914 = vmatprep.mubr.f32.mxu0 %v1913
    %v1915 = vand.u32 %v1305, 4294901760
    %1916 = vmatmul.mubr.f32.gmra.mxu0 %v1915
    %v1917 = vpop.f32.mrf.mxu0
    %v1918 = vadd.f32 %v1517, %v1917
    %v1919 = vpop.f32.mrf.mxu0
    %v1920 = vand.u32 %v1348, 4294901760
    %1921 = vmatprep.mubr.f32.mxu0 %v1920
    %v1922 = vand.u32 %v1307, 4294901760
    %1923 = vmatmul.mubr.f32.gmra.mxu0 %v1922
    %v1924 = vpop.f32.mrf.mxu0
    %v1925 = vadd.f32 %v1532, %v1924
    %v1926 = vpop.f32.mrf.mxu0
    %v1927 = vand.u32 %v1351, 4294901760
    %1928 = vmatprep.mubr.f32.mxu0 %v1927
    %v1929 = vand.u32 %v1309, 4294901760
    %1930 = vmatmul.mubr.f32.gmra.mxu0 %v1929
    %v1931 = vpop.f32.mrf.mxu0
    %v1932 = vadd.f32 %v1547, %v1931
    %v1933 = vpop.f32.mrf.mxu0
    %v1934 = vand.u32 %v1354, 4294901760
    %1935 = vmatprep.mubr.f32.mxu0 %v1934
    %v1936 = vand.u32 %v1311, 4294901760
    %1937 = vmatmul.mubr.f32.gmra.mxu0 %v1936
    %v1938 = vpop.f32.mrf.mxu0
    %v1939 = vadd.f32 %v1562, %v1938
    %v1940 = vpop.f32.mrf.mxu0
    %v1941 = vand.u32 %v1357, 4294901760
    %1942 = vmatprep.mubr.f32.mxu0 %v1941
    %v1943 = vand.u32 %v1313, 4294901760
    %1944 = vmatmul.mubr.f32.gmra.mxu0 %v1943
    %v1945 = vpop.f32.mrf.mxu0
    %v1946 = vadd.f32 %v1577, %v1945
    %v1947 = vpop.f32.mrf.mxu0
    %v1948 = vand.u32 %v1360, 4294901760
    %1949 = vmatprep.mubr.f32.mxu0 %v1948
    %v1950 = vand.u32 %v1315, 4294901760
    %1951 = vmatmul.mubr.f32.gmra.mxu0 %v1950
    %v1952 = vpop.f32.mrf.mxu0
    %v1953 = vadd.f32 %v1592, %v1952
    %v1954 = vpop.f32.mrf.mxu0
    %v1955 = vand.u32 %v1363, 4294901760
    %1956 = vmatprep.mubr.f32.mxu0 %v1955
    %v1957 = vand.u32 %v1317, 4294901760
    %1958 = vmatmul.mubr.f32.gmra.mxu0 %v1957
    %v1959 = vpop.f32.mrf.mxu0
    %v1960 = vadd.f32 %v1607, %v1959
    %v1961 = vpop.f32.mrf.mxu0
    %v1962 = vand.u32 %v1366, 4294901760
    %1963 = vmatprep.mubr.f32.mxu0 %v1962
    %v1964 = vand.u32 %v1319, 4294901760
    %1965 = vmatmul.mubr.f32.gmra.mxu0 %v1964
    %v1966 = vpop.f32.mrf.mxu0
    %v1967 = vadd.f32 %v1622, %v1966
    %v1968 = vpop.f32.mrf.mxu0
    %v1969 = vand.u32 %v1369, 4294901760
    %1970 = vmatprep.mubr.f32.mxu0 %v1969
    %v1971 = vand.u32 %v1321, 4294901760
    %1972 = vmatmul.mubr.f32.gmra.mxu0 %v1971
    %v1973 = vpop.f32.mrf.mxu0
    %v1974 = vadd.f32 %v1637, %v1973
    %v1975 = vpop.f32.mrf.mxu0
    %v1976 = vand.u32 %v1372, 4294901760
    %1977 = vmatprep.mubr.f32.mxu0 %v1976
    %v1978 = vand.u32 %v1323, 4294901760
    %1979 = vmatmul.mubr.f32.gmra.mxu0 %v1978
    %v1980 = vpop.f32.mrf.mxu0
    %v1981 = vadd.f32 %v1652, %v1980
    %v1982 = vpop.f32.mrf.mxu0
    %v1983 = vand.u32 %v1375, 4294901760
    %1984 = vmatprep.mubr.f32.mxu0 %v1983
    %v1985 = vand.u32 %v1325, 4294901760
    %1986 = vmatmul.mubr.f32.gmra.mxu0 %v1985
    %v1987 = vpop.f32.mrf.mxu0
    %v1988 = vadd.f32 %v1667, %v1987
    %v1989 = vpop.f32.mrf.mxu0
    %v1990 = vand.u32 %v1378, 4294901760
    %1991 = vmatprep.mubr.f32.mxu0 %v1990
    %v1992 = vand.u32 %v1327, 4294901760
    %1993 = vmatmul.mubr.f32.gmra.mxu0 %v1992
    %v1994 = vpop.f32.mrf.mxu0
    %v1995 = vadd.f32 %v1682, %v1994
    %v1996 = vpop.f32.mrf.mxu0
    %v1997 = vand.u32 %v1381, 4294901760
    %1998 = vmatprep.mubr.f32.mxu0 %v1997
    %v1999 = vand.u32 %v1329, 4294901760
    %2000 = vmatmul.mubr.f32.gmra.mxu0 %v1999
    %v2001 = vpop.f32.mrf.mxu0
    %v2002 = vadd.f32 %v1697, %v2001
    %v2003 = vpop.f32.mrf.mxu0
    %v2004 = vand.u32 %v1384, 4294901760
    %2005 = vmatprep.mubr.f32.mxu0 %v2004
    %v2006 = vand.u32 %v1331, 4294901760
    %2007 = vmatmul.mubr.f32.gmra.mxu0 %v2006
    %v2008 = vpop.f32.mrf.mxu0
    %v2009 = vadd.f32 %v1712, %v2008
    %v2010 = vpop.f32.mrf.mxu0
    %v2011 = vand.u32 %v1387, 4294901760
    %2012 = vmatprep.mubr.f32.mxu0 %v2011
    %v2013 = vand.u32 %v1333, 4294901760
    %2014 = vmatmul.mubr.f32.gmra.mxu0 %v2013
    %v2015 = vpop.f32.mrf.mxu0
    %v2016 = vadd.f32 %v1727, %v2015
    %v2017 = vpop.f32.mrf.mxu0
    %v2018 = vand.u32 %v1390, 4294901760
    %2019 = vmatprep.mubr.f32.mxu0 %v2018
    %v2020 = vand.u32 %v1335, 4294901760
    %2021 = vmatmul.mubr.f32.gmra.mxu0 %v2020
    %v2022 = vpop.f32.mrf.mxu0
    %v2023 = vadd.f32 %v1742, %v2022
    %v2024 = vpop.f32.mrf.mxu0
    %2025 = vdwg.mxu0
    %2026 = vmatprep.subr.mxu0 0.0
    %v2027 = vand.u32 %v1298, 4294901760
    %v2028 = vsub.f32 %v1298, %v2027
    %2029 = vmatpush1.msra.mxu0 %v2028
    %2030 = vmatprep.subr.mxu0 0.0
    %v2031 = vand.u32 %v1297, 4294901760
    %v2032 = vsub.f32 %v1297, %v2031
    %2033 = vmatpush1.msra.mxu0 %v2032
    %2034 = vmatprep.subr.mxu0 0.0
    %v2035 = vand.u32 %v1296, 4294901760
    %v2036 = vsub.f32 %v1296, %v2035
    %2037 = vmatpush1.msra.mxu0 %v2036
    %2038 = vmatprep.subr.mxu0 0.0
    %v2039 = vand.u32 %v1295, 4294901760
    %v2040 = vsub.f32 %v1295, %v2039
    %2041 = vmatpush1.msra.mxu0 %v2040
    %2042 = vmatprep.subr.mxu0 0.0
    %v2043 = vand.u32 %v1294, 4294901760
    %v2044 = vsub.f32 %v1294, %v2043
    %2045 = vmatpush1.msra.mxu0 %v2044
    %2046 = vmatprep.subr.mxu0 0.0
    %v2047 = vand.u32 %v1293, 4294901760
    %v2048 = vsub.f32 %v1293, %v2047
    %2049 = vmatpush1.msra.mxu0 %v2048
    %2050 = vmatprep.subr.mxu0 0.0
    %v2051 = vand.u32 %v1292, 4294901760
    %v2052 = vsub.f32 %v1292, %v2051
    %2053 = vmatpush1.msra.mxu0 %v2052
    %2054 = vmatprep.subr.mxu0 0.0
    %v2055 = vand.u32 %v1291, 4294901760
    %v2056 = vsub.f32 %v1291, %v2055
    %2057 = vmatpush1.msra.mxu0 %v2056
    %2058 = vmatprep.subr.mxu0 0.0
    %v2059 = vand.u32 %v1290, 4294901760
    %v2060 = vsub.f32 %v1290, %v2059
    %2061 = vmatpush1.msra.mxu0 %v2060
    %2062 = vmatprep.subr.mxu0 0.0
    %v2063 = vand.u32 %v1289, 4294901760
    %v2064 = vsub.f32 %v1289, %v2063
    %2065 = vmatpush1.msra.mxu0 %v2064
    %2066 = vmatprep.subr.mxu0 0.0
    %v2067 = vand.u32 %v1288, 4294901760
    %v2068 = vsub.f32 %v1288, %v2067
    %2069 = vmatpush1.msra.mxu0 %v2068
    %2070 = vmatprep.subr.mxu0 0.0
    %v2071 = vand.u32 %v1287, 4294901760
    %v2072 = vsub.f32 %v1287, %v2071
    %2073 = vmatpush1.msra.mxu0 %v2072
    %2074 = vmatprep.subr.mxu0 0.0
    %v2075 = vand.u32 %v1286, 4294901760
    %v2076 = vsub.f32 %v1286, %v2075
    %2077 = vmatpush1.msra.mxu0 %v2076
    %2078 = vmatprep.subr.mxu0 0.0
    %v2079 = vand.u32 %v1285, 4294901760
    %v2080 = vsub.f32 %v1285, %v2079
    %2081 = vmatpush1.msra.mxu0 %v2080
    %2082 = vmatprep.subr.mxu0 0.0
    %v2083 = vand.u32 %v1284, 4294901760
    %v2084 = vsub.f32 %v1284, %v2083
    %2085 = vmatpush1.msra.mxu0 %v2084
    %2086 = vmatprep.subr.mxu0 0.0
    %v2087 = vand.u32 %v1283, 4294901760
    %v2088 = vsub.f32 %v1283, %v2087
    %2089 = vmatpush1.msra.mxu0 %v2088
    %2090 = vmatprep.subr.mxu0 0.0
    %2091 = vmatpush2.msra.mxu0 0.0
    %2092 = vmatprep.subr.mxu0 0.0
    %2093 = vmatpush2.msra.mxu0 0.0
    %2094 = vmatprep.subr.mxu0 0.0
    %2095 = vmatpush2.msra.mxu0 0.0
    %2096 = vmatprep.subr.mxu0 0.0
    %2097 = vmatpush2.msra.mxu0 0.0
    %2098 = vmatprep.subr.mxu0 0.0
    %2099 = vmatpush2.msra.mxu0 0.0
    %2100 = vmatprep.subr.mxu0 0.0
    %2101 = vmatpush2.msra.mxu0 0.0
    %2102 = vmatprep.subr.mxu0 0.0
    %2103 = vmatpush2.msra.mxu0 0.0
    %2104 = vmatprep.subr.mxu0 0.0
    %2105 = vmatpush2.msra.mxu0 0.0
    %2106 = vmatprep.subr.mxu0 0.0
    %2107 = vmatpush2.msra.mxu0 0.0
    %2108 = vmatprep.subr.mxu0 0.0
    %2109 = vmatpush2.msra.mxu0 0.0
    %2110 = vmatprep.subr.mxu0 0.0
    %2111 = vmatpush2.msra.mxu0 0.0
    %2112 = vmatprep.subr.mxu0 0.0
    %2113 = vmatpush2.msra.mxu0 0.0
    %2114 = vmatprep.subr.mxu0 0.0
    %2115 = vmatpush2.msra.mxu0 0.0
    %2116 = vmatprep.subr.mxu0 0.0
    %2117 = vmatpush2.msra.mxu0 0.0
    %2118 = vmatprep.subr.mxu0 0.0
    %v2119 = vand.u32 %v1300, 4294901760
    %v2120 = vsub.f32 %v1300, %v2119
    %2121 = vmatpush2.msra.mxu0 %v2120
    %2122 = vmatprep.subr.mxu0 0.0
    %v2123 = vand.u32 %v1299, 4294901760
    %v2124 = vsub.f32 %v1299, %v2123
    %2125 = vmatpush2.msra.mxu0 %v2124
    %v2126 = vand.u32 %v1339, 4294901760
    %v2127 = vsub.f32 %v1339, %v2126
    %2128 = vmatprep.mubr.f32.mxu0 %v2127
    %v2129 = vand.u32 %v1301, 4294901760
    %v2130 = vsub.f32 %v1301, %v2129
    %2131 = vmatmul.mubr.f32.gmra.mxu0 %v2130
    %v2132 = vpop.f32.mrf.mxu0
    %v2133 = vadd.f32 %v1904, %v2132
    %v2134 = vpop.f32.mrf.mxu0
    %v2135 = vand.u32 %v1342, 4294901760
    %v2136 = vsub.f32 %v1342, %v2135
    %2137 = vmatprep.mubr.f32.mxu0 %v2136
    %v2138 = vand.u32 %v1303, 4294901760
    %v2139 = vsub.f32 %v1303, %v2138
    %2140 = vmatmul.mubr.f32.gmra.mxu0 %v2139
    %v2141 = vpop.f32.mrf.mxu0
    %v2142 = vadd.f32 %v1911, %v2141
    %v2143 = vpop.f32.mrf.mxu0
    %v2144 = vand.u32 %v1345, 4294901760
    %v2145 = vsub.f32 %v1345, %v2144
    %2146 = vmatprep.mubr.f32.mxu0 %v2145
    %v2147 = vand.u32 %v1305, 4294901760
    %v2148 = vsub.f32 %v1305, %v2147
    %2149 = vmatmul.mubr.f32.gmra.mxu0 %v2148
    %v2150 = vpop.f32.mrf.mxu0
    %v2151 = vadd.f32 %v1918, %v2150
    %v2152 = vpop.f32.mrf.mxu0
    %v2153 = vand.u32 %v1348, 4294901760
    %v2154 = vsub.f32 %v1348, %v2153
    %2155 = vmatprep.mubr.f32.mxu0 %v2154
    %v2156 = vand.u32 %v1307, 4294901760
    %v2157 = vsub.f32 %v1307, %v2156
    %2158 = vmatmul.mubr.f32.gmra.mxu0 %v2157
    %v2159 = vpop.f32.mrf.mxu0
    %v2160 = vadd.f32 %v1925, %v2159
    %v2161 = vpop.f32.mrf.mxu0
    %v2162 = vand.u32 %v1351, 4294901760
    %v2163 = vsub.f32 %v1351, %v2162
    %2164 = vmatprep.mubr.f32.mxu0 %v2163
    %v2165 = vand.u32 %v1309, 4294901760
    %v2166 = vsub.f32 %v1309, %v2165
    %2167 = vmatmul.mubr.f32.gmra.mxu0 %v2166
    %v2168 = vpop.f32.mrf.mxu0
    %v2169 = vadd.f32 %v1932, %v2168
    %v2170 = vpop.f32.mrf.mxu0
    %v2171 = vand.u32 %v1354, 4294901760
    %v2172 = vsub.f32 %v1354, %v2171
    %2173 = vmatprep.mubr.f32.mxu0 %v2172
    %v2174 = vand.u32 %v1311, 4294901760
    %v2175 = vsub.f32 %v1311, %v2174
    %2176 = vmatmul.mubr.f32.gmra.mxu0 %v2175
    %v2177 = vpop.f32.mrf.mxu0
    %v2178 = vadd.f32 %v1939, %v2177
    %v2179 = vpop.f32.mrf.mxu0
    %v2180 = vand.u32 %v1357, 4294901760
    %v2181 = vsub.f32 %v1357, %v2180
    %2182 = vmatprep.mubr.f32.mxu0 %v2181
    %v2183 = vand.u32 %v1313, 4294901760
    %v2184 = vsub.f32 %v1313, %v2183
    %2185 = vmatmul.mubr.f32.gmra.mxu0 %v2184
    %v2186 = vpop.f32.mrf.mxu0
    %v2187 = vadd.f32 %v1946, %v2186
    %v2188 = vpop.f32.mrf.mxu0
    %v2189 = vand.u32 %v1360, 4294901760
    %v2190 = vsub.f32 %v1360, %v2189
    %2191 = vmatprep.mubr.f32.mxu0 %v2190
    %v2192 = vand.u32 %v1315, 4294901760
    %v2193 = vsub.f32 %v1315, %v2192
    %2194 = vmatmul.mubr.f32.gmra.mxu0 %v2193
    %v2195 = vpop.f32.mrf.mxu0
    %v2196 = vadd.f32 %v1953, %v2195
    %v2197 = vpop.f32.mrf.mxu0
    %v2198 = vand.u32 %v1363, 4294901760
    %v2199 = vsub.f32 %v1363, %v2198
    %2200 = vmatprep.mubr.f32.mxu0 %v2199
    %v2201 = vand.u32 %v1317, 4294901760
    %v2202 = vsub.f32 %v1317, %v2201
    %2203 = vmatmul.mubr.f32.gmra.mxu0 %v2202
    %v2204 = vpop.f32.mrf.mxu0
    %v2205 = vadd.f32 %v1960, %v2204
    %v2206 = vpop.f32.mrf.mxu0
    %v2207 = vand.u32 %v1366, 4294901760
    %v2208 = vsub.f32 %v1366, %v2207
    %2209 = vmatprep.mubr.f32.mxu0 %v2208
    %v2210 = vand.u32 %v1319, 4294901760
    %v2211 = vsub.f32 %v1319, %v2210
    %2212 = vmatmul.mubr.f32.gmra.mxu0 %v2211
    %v2213 = vpop.f32.mrf.mxu0
    %v2214 = vadd.f32 %v1967, %v2213
    %v2215 = vpop.f32.mrf.mxu0
    %v2216 = vand.u32 %v1369, 4294901760
    %v2217 = vsub.f32 %v1369, %v2216
    %2218 = vmatprep.mubr.f32.mxu0 %v2217
    %v2219 = vand.u32 %v1321, 4294901760
    %v2220 = vsub.f32 %v1321, %v2219
    %2221 = vmatmul.mubr.f32.gmra.mxu0 %v2220
    %v2222 = vpop.f32.mrf.mxu0
    %v2223 = vadd.f32 %v1974, %v2222
    %v2224 = vpop.f32.mrf.mxu0
    %v2225 = vand.u32 %v1372, 4294901760
    %v2226 = vsub.f32 %v1372, %v2225
    %2227 = vmatprep.mubr.f32.mxu0 %v2226
    %v2228 = vand.u32 %v1323, 4294901760
    %v2229 = vsub.f32 %v1323, %v2228
    %2230 = vmatmul.mubr.f32.gmra.mxu0 %v2229
    %v2231 = vpop.f32.mrf.mxu0
    %v2232 = vadd.f32 %v1981, %v2231
    %v2233 = vpop.f32.mrf.mxu0
    %v2234 = vand.u32 %v1375, 4294901760
    %v2235 = vsub.f32 %v1375, %v2234
    %2236 = vmatprep.mubr.f32.mxu0 %v2235
    %v2237 = vand.u32 %v1325, 4294901760
    %v2238 = vsub.f32 %v1325, %v2237
    %2239 = vmatmul.mubr.f32.gmra.mxu0 %v2238
    %v2240 = vpop.f32.mrf.mxu0
    %v2241 = vadd.f32 %v1988, %v2240
    %v2242 = vpop.f32.mrf.mxu0
    %v2243 = vand.u32 %v1378, 4294901760
    %v2244 = vsub.f32 %v1378, %v2243
    %2245 = vmatprep.mubr.f32.mxu0 %v2244
    %v2246 = vand.u32 %v1327, 4294901760
    %v2247 = vsub.f32 %v1327, %v2246
    %2248 = vmatmul.mubr.f32.gmra.mxu0 %v2247
    %v2249 = vpop.f32.mrf.mxu0
    %v2250 = vadd.f32 %v1995, %v2249
    %v2251 = vpop.f32.mrf.mxu0
    %v2252 = vand.u32 %v1381, 4294901760
    %v2253 = vsub.f32 %v1381, %v2252
    %2254 = vmatprep.mubr.f32.mxu0 %v2253
    %v2255 = vand.u32 %v1329, 4294901760
    %v2256 = vsub.f32 %v1329, %v2255
    %2257 = vmatmul.mubr.f32.gmra.mxu0 %v2256
    %v2258 = vpop.f32.mrf.mxu0
    %v2259 = vadd.f32 %v2002, %v2258
    %v2260 = vpop.f32.mrf.mxu0
    %v2261 = vand.u32 %v1384, 4294901760
    %v2262 = vsub.f32 %v1384, %v2261
    %2263 = vmatprep.mubr.f32.mxu0 %v2262
    %v2264 = vand.u32 %v1331, 4294901760
    %v2265 = vsub.f32 %v1331, %v2264
    %2266 = vmatmul.mubr.f32.gmra.mxu0 %v2265
    %v2267 = vpop.f32.mrf.mxu0
    %v2268 = vadd.f32 %v2009, %v2267
    %v2269 = vpop.f32.mrf.mxu0
    %v2270 = vand.u32 %v1387, 4294901760
    %v2271 = vsub.f32 %v1387, %v2270
    %2272 = vmatprep.mubr.f32.mxu0 %v2271
    %v2273 = vand.u32 %v1333, 4294901760
    %v2274 = vsub.f32 %v1333, %v2273
    %2275 = vmatmul.mubr.f32.gmra.mxu0 %v2274
    %v2276 = vpop.f32.mrf.mxu0
    %v2277 = vadd.f32 %v2016, %v2276
    %v2278 = vpop.f32.mrf.mxu0
    %v2279 = vand.u32 %v1390, 4294901760
    %v2280 = vsub.f32 %v1390, %v2279
    %2281 = vmatprep.mubr.f32.mxu0 %v2280
    %v2282 = vand.u32 %v1335, 4294901760
    %v2283 = vsub.f32 %v1335, %v2282
    %2284 = vmatmul.mubr.f32.gmra.mxu0 %v2283
    %v2285 = vpop.f32.mrf.mxu0
    %v2286 = vadd.f32 %v2023, %v2285
    %v2287 = vpop.f32.mrf.mxu0
    %2288 = vdwg.mxu0
    %2289 = vmatprep.subr.mxu0 0.0
    %v2290 = vand.u32 %v1298, 4294901760
    %2291 = vmatpush1.msra.mxu0 %v2290
    %2292 = vmatprep.subr.mxu0 0.0
    %v2293 = vand.u32 %v1297, 4294901760
    %2294 = vmatpush1.msra.mxu0 %v2293
    %2295 = vmatprep.subr.mxu0 0.0
    %v2296 = vand.u32 %v1296, 4294901760
    %2297 = vmatpush1.msra.mxu0 %v2296
    %2298 = vmatprep.subr.mxu0 0.0
    %v2299 = vand.u32 %v1295, 4294901760
    %2300 = vmatpush1.msra.mxu0 %v2299
    %2301 = vmatprep.subr.mxu0 0.0
    %v2302 = vand.u32 %v1294, 4294901760
    %2303 = vmatpush1.msra.mxu0 %v2302
    %2304 = vmatprep.subr.mxu0 0.0
    %v2305 = vand.u32 %v1293, 4294901760
    %2306 = vmatpush1.msra.mxu0 %v2305
    %2307 = vmatprep.subr.mxu0 0.0
    %v2308 = vand.u32 %v1292, 4294901760
    %2309 = vmatpush1.msra.mxu0 %v2308
    %2310 = vmatprep.subr.mxu0 0.0
    %v2311 = vand.u32 %v1291, 4294901760
    %2312 = vmatpush1.msra.mxu0 %v2311
    %2313 = vmatprep.subr.mxu0 0.0
    %v2314 = vand.u32 %v1290, 4294901760
    %2315 = vmatpush1.msra.mxu0 %v2314
    %2316 = vmatprep.subr.mxu0 0.0
    %v2317 = vand.u32 %v1289, 4294901760
    %2318 = vmatpush1.msra.mxu0 %v2317
    %2319 = vmatprep.subr.mxu0 0.0
    %v2320 = vand.u32 %v1288, 4294901760
    %2321 = vmatpush1.msra.mxu0 %v2320
    %2322 = vmatprep.subr.mxu0 0.0
    %v2323 = vand.u32 %v1287, 4294901760
    %2324 = vmatpush1.msra.mxu0 %v2323
    %2325 = vmatprep.subr.mxu0 0.0
    %v2326 = vand.u32 %v1286, 4294901760
    %2327 = vmatpush1.msra.mxu0 %v2326
    %2328 = vmatprep.subr.mxu0 0.0
    %v2329 = vand.u32 %v1285, 4294901760
    %2330 = vmatpush1.msra.mxu0 %v2329
    %2331 = vmatprep.subr.mxu0 0.0
    %v2332 = vand.u32 %v1284, 4294901760
    %2333 = vmatpush1.msra.mxu0 %v2332
    %2334 = vmatprep.subr.mxu0 0.0
    %v2335 = vand.u32 %v1283, 4294901760
    %2336 = vmatpush1.msra.mxu0 %v2335
    %2337 = vmatprep.subr.mxu0 0.0
    %2338 = vmatpush2.msra.mxu0 0.0
    %2339 = vmatprep.subr.mxu0 0.0
    %2340 = vmatpush2.msra.mxu0 0.0
    %2341 = vmatprep.subr.mxu0 0.0
    %2342 = vmatpush2.msra.mxu0 0.0
    %2343 = vmatprep.subr.mxu0 0.0
    %2344 = vmatpush2.msra.mxu0 0.0
    %2345 = vmatprep.subr.mxu0 0.0
    %2346 = vmatpush2.msra.mxu0 0.0
    %2347 = vmatprep.subr.mxu0 0.0
    %2348 = vmatpush2.msra.mxu0 0.0
    %2349 = vmatprep.subr.mxu0 0.0
    %2350 = vmatpush2.msra.mxu0 0.0
    %2351 = vmatprep.subr.mxu0 0.0
    %2352 = vmatpush2.msra.mxu0 0.0
    %2353 = vmatprep.subr.mxu0 0.0
    %2354 = vmatpush2.msra.mxu0 0.0
    %2355 = vmatprep.subr.mxu0 0.0
    %2356 = vmatpush2.msra.mxu0 0.0
    %2357 = vmatprep.subr.mxu0 0.0
    %2358 = vmatpush2.msra.mxu0 0.0
    %2359 = vmatprep.subr.mxu0 0.0
    %2360 = vmatpush2.msra.mxu0 0.0
    %2361 = vmatprep.subr.mxu0 0.0
    %2362 = vmatpush2.msra.mxu0 0.0
    %2363 = vmatprep.subr.mxu0 0.0
    %2364 = vmatpush2.msra.mxu0 0.0
    %2365 = vmatprep.subr.mxu0 0.0
    %v2366 = vand.u32 %v1300, 4294901760
    %2367 = vmatpush2.msra.mxu0 %v2366
    %2368 = vmatprep.subr.mxu0 0.0
    %v2369 = vand.u32 %v1299, 4294901760
    %2370 = vmatpush2.msra.mxu0 %v2369
    %v2371 = vand.u32 %v1339, 4294901760
    %v2372 = vsub.f32 %v1339, %v2371
    %v2373 = vand.u32 %v2372, 4294901760
    %2374 = vmatprep.mubr.f32.mxu0 %v2373
    %v2375 = vand.u32 %v1301, 4294901760
    %v2376 = vsub.f32 %v1301, %v2375
    %v2377 = vand.u32 %v2376, 4294901760
    %2378 = vmatmul.mubr.f32.gmra.mxu0 %v2377
    %v2379 = vpop.f32.mrf.mxu0
    %v2380 = vadd.f32 %v2133, %v2379
    %v2381 = vpop.f32.mrf.mxu0
    %v2382 = vand.u32 %v1342, 4294901760
    %v2383 = vsub.f32 %v1342, %v2382
    %v2384 = vand.u32 %v2383, 4294901760
    %2385 = vmatprep.mubr.f32.mxu0 %v2384
    %v2386 = vand.u32 %v1303, 4294901760
    %v2387 = vsub.f32 %v1303, %v2386
    %v2388 = vand.u32 %v2387, 4294901760
    %2389 = vmatmul.mubr.f32.gmra.mxu0 %v2388
    %v2390 = vpop.f32.mrf.mxu0
    %v2391 = vadd.f32 %v2142, %v2390
    %v2392 = vpop.f32.mrf.mxu0
    %v2393 = vand.u32 %v1345, 4294901760
    %v2394 = vsub.f32 %v1345, %v2393
    %v2395 = vand.u32 %v2394, 4294901760
    %2396 = vmatprep.mubr.f32.mxu0 %v2395
    %v2397 = vand.u32 %v1305, 4294901760
    %v2398 = vsub.f32 %v1305, %v2397
    %v2399 = vand.u32 %v2398, 4294901760
    %2400 = vmatmul.mubr.f32.gmra.mxu0 %v2399
    %v2401 = vpop.f32.mrf.mxu0
    %v2402 = vadd.f32 %v2151, %v2401
    %v2403 = vpop.f32.mrf.mxu0
    %v2404 = vand.u32 %v1348, 4294901760
    %v2405 = vsub.f32 %v1348, %v2404
    %v2406 = vand.u32 %v2405, 4294901760
    %2407 = vmatprep.mubr.f32.mxu0 %v2406
    %v2408 = vand.u32 %v1307, 4294901760
    %v2409 = vsub.f32 %v1307, %v2408
    %v2410 = vand.u32 %v2409, 4294901760
    %2411 = vmatmul.mubr.f32.gmra.mxu0 %v2410
    %v2412 = vpop.f32.mrf.mxu0
    %v2413 = vadd.f32 %v2160, %v2412
    %v2414 = vpop.f32.mrf.mxu0
    %v2415 = vand.u32 %v1351, 4294901760
    %v2416 = vsub.f32 %v1351, %v2415
    %v2417 = vand.u32 %v2416, 4294901760
    %2418 = vmatprep.mubr.f32.mxu0 %v2417
    %v2419 = vand.u32 %v1309, 4294901760
    %v2420 = vsub.f32 %v1309, %v2419
    %v2421 = vand.u32 %v2420, 4294901760
    %2422 = vmatmul.mubr.f32.gmra.mxu0 %v2421
    %v2423 = vpop.f32.mrf.mxu0
    %v2424 = vadd.f32 %v2169, %v2423
    %v2425 = vpop.f32.mrf.mxu0
    %v2426 = vand.u32 %v1354, 4294901760
    %v2427 = vsub.f32 %v1354, %v2426
    %v2428 = vand.u32 %v2427, 4294901760
    %2429 = vmatprep.mubr.f32.mxu0 %v2428
    %v2430 = vand.u32 %v1311, 4294901760
    %v2431 = vsub.f32 %v1311, %v2430
    %v2432 = vand.u32 %v2431, 4294901760
    %2433 = vmatmul.mubr.f32.gmra.mxu0 %v2432
    %v2434 = vpop.f32.mrf.mxu0
    %v2435 = vadd.f32 %v2178, %v2434
    %v2436 = vpop.f32.mrf.mxu0
    %v2437 = vand.u32 %v1357, 4294901760
    %v2438 = vsub.f32 %v1357, %v2437
    %v2439 = vand.u32 %v2438, 4294901760
    %2440 = vmatprep.mubr.f32.mxu0 %v2439
    %v2441 = vand.u32 %v1313, 4294901760
    %v2442 = vsub.f32 %v1313, %v2441
    %v2443 = vand.u32 %v2442, 4294901760
    %2444 = vmatmul.mubr.f32.gmra.mxu0 %v2443
    %v2445 = vpop.f32.mrf.mxu0
    %v2446 = vadd.f32 %v2187, %v2445
    %v2447 = vpop.f32.mrf.mxu0
    %v2448 = vand.u32 %v1360, 4294901760
    %v2449 = vsub.f32 %v1360, %v2448
    %v2450 = vand.u32 %v2449, 4294901760
    %2451 = vmatprep.mubr.f32.mxu0 %v2450
    %v2452 = vand.u32 %v1315, 4294901760
    %v2453 = vsub.f32 %v1315, %v2452
    %v2454 = vand.u32 %v2453, 4294901760
    %2455 = vmatmul.mubr.f32.gmra.mxu0 %v2454
    %v2456 = vpop.f32.mrf.mxu0
    %v2457 = vadd.f32 %v2196, %v2456
    %v2458 = vpop.f32.mrf.mxu0
    %v2459 = vand.u32 %v1363, 4294901760
    %v2460 = vsub.f32 %v1363, %v2459
    %v2461 = vand.u32 %v2460, 4294901760
    %2462 = vmatprep.mubr.f32.mxu0 %v2461
    %v2463 = vand.u32 %v1317, 4294901760
    %v2464 = vsub.f32 %v1317, %v2463
    %v2465 = vand.u32 %v2464, 4294901760
    %2466 = vmatmul.mubr.f32.gmra.mxu0 %v2465
    %v2467 = vpop.f32.mrf.mxu0
    %v2468 = vadd.f32 %v2205, %v2467
    %v2469 = vpop.f32.mrf.mxu0
    %v2470 = vand.u32 %v1366, 4294901760
    %v2471 = vsub.f32 %v1366, %v2470
    %v2472 = vand.u32 %v2471, 4294901760
    %2473 = vmatprep.mubr.f32.mxu0 %v2472
    %v2474 = vand.u32 %v1319, 4294901760
    %v2475 = vsub.f32 %v1319, %v2474
    %v2476 = vand.u32 %v2475, 4294901760
    %2477 = vmatmul.mubr.f32.gmra.mxu0 %v2476
    %v2478 = vpop.f32.mrf.mxu0
    %v2479 = vadd.f32 %v2214, %v2478
    %v2480 = vpop.f32.mrf.mxu0
    %v2481 = vand.u32 %v1369, 4294901760
    %v2482 = vsub.f32 %v1369, %v2481
    %v2483 = vand.u32 %v2482, 4294901760
    %2484 = vmatprep.mubr.f32.mxu0 %v2483
    %v2485 = vand.u32 %v1321, 4294901760
    %v2486 = vsub.f32 %v1321, %v2485
    %v2487 = vand.u32 %v2486, 4294901760
    %2488 = vmatmul.mubr.f32.gmra.mxu0 %v2487
    %v2489 = vpop.f32.mrf.mxu0
    %v2490 = vadd.f32 %v2223, %v2489
    %v2491 = vpop.f32.mrf.mxu0
    %v2492 = vand.u32 %v1372, 4294901760
    %v2493 = vsub.f32 %v1372, %v2492
    %v2494 = vand.u32 %v2493, 4294901760
    %2495 = vmatprep.mubr.f32.mxu0 %v2494
    %v2496 = vand.u32 %v1323, 4294901760
    %v2497 = vsub.f32 %v1323, %v2496
    %v2498 = vand.u32 %v2497, 4294901760
    %2499 = vmatmul.mubr.f32.gmra.mxu0 %v2498
    %v2500 = vpop.f32.mrf.mxu0
    %v2501 = vadd.f32 %v2232, %v2500
    %v2502 = vpop.f32.mrf.mxu0
    %v2503 = vand.u32 %v1375, 4294901760
    %v2504 = vsub.f32 %v1375, %v2503
    %v2505 = vand.u32 %v2504, 4294901760
    %2506 = vmatprep.mubr.f32.mxu0 %v2505
    %v2507 = vand.u32 %v1325, 4294901760
    %v2508 = vsub.f32 %v1325, %v2507
    %v2509 = vand.u32 %v2508, 4294901760
    %2510 = vmatmul.mubr.f32.gmra.mxu0 %v2509
    %v2511 = vpop.f32.mrf.mxu0
    %v2512 = vadd.f32 %v2241, %v2511
    %v2513 = vpop.f32.mrf.mxu0
    %v2514 = vand.u32 %v1378, 4294901760
    %v2515 = vsub.f32 %v1378, %v2514
    %v2516 = vand.u32 %v2515, 4294901760
    %2517 = vmatprep.mubr.f32.mxu0 %v2516
    %v2518 = vand.u32 %v1327, 4294901760
    %v2519 = vsub.f32 %v1327, %v2518
    %v2520 = vand.u32 %v2519, 4294901760
    %2521 = vmatmul.mubr.f32.gmra.mxu0 %v2520
    %v2522 = vpop.f32.mrf.mxu0
    %v2523 = vadd.f32 %v2250, %v2522
    %v2524 = vpop.f32.mrf.mxu0
    %v2525 = vand.u32 %v1381, 4294901760
    %v2526 = vsub.f32 %v1381, %v2525
    %v2527 = vand.u32 %v2526, 4294901760
    %2528 = vmatprep.mubr.f32.mxu0 %v2527
    %v2529 = vand.u32 %v1329, 4294901760
    %v2530 = vsub.f32 %v1329, %v2529
    %v2531 = vand.u32 %v2530, 4294901760
    %2532 = vmatmul.mubr.f32.gmra.mxu0 %v2531
    %v2533 = vpop.f32.mrf.mxu0
    %v2534 = vadd.f32 %v2259, %v2533
    %v2535 = vpop.f32.mrf.mxu0
    %v2536 = vand.u32 %v1384, 4294901760
    %v2537 = vsub.f32 %v1384, %v2536
    %v2538 = vand.u32 %v2537, 4294901760
    %2539 = vmatprep.mubr.f32.mxu0 %v2538
    %v2540 = vand.u32 %v1331, 4294901760
    %v2541 = vsub.f32 %v1331, %v2540
    %v2542 = vand.u32 %v2541, 4294901760
    %2543 = vmatmul.mubr.f32.gmra.mxu0 %v2542
    %v2544 = vpop.f32.mrf.mxu0
    %v2545 = vadd.f32 %v2268, %v2544
    %v2546 = vpop.f32.mrf.mxu0
    %v2547 = vand.u32 %v1387, 4294901760
    %v2548 = vsub.f32 %v1387, %v2547
    %v2549 = vand.u32 %v2548, 4294901760
    %2550 = vmatprep.mubr.f32.mxu0 %v2549
    %v2551 = vand.u32 %v1333, 4294901760
    %v2552 = vsub.f32 %v1333, %v2551
    %v2553 = vand.u32 %v2552, 4294901760
    %2554 = vmatmul.mubr.f32.gmra.mxu0 %v2553
    %v2555 = vpop.f32.mrf.mxu0
    %v2556 = vadd.f32 %v2277, %v2555
    %v2557 = vpop.f32.mrf.mxu0
    %v2558 = vand.u32 %v1390, 4294901760
    %v2559 = vsub.f32 %v1390, %v2558
    %v2560 = vand.u32 %v2559, 4294901760
    %2561 = vmatprep.mubr.f32.mxu0 %v2560
    %v2562 = vand.u32 %v1335, 4294901760
    %v2563 = vsub.f32 %v1335, %v2562
    %v2564 = vand.u32 %v2563, 4294901760
    %2565 = vmatmul.mubr.f32.gmra.mxu0 %v2564
    %v2566 = vpop.f32.mrf.mxu0
    %v2567 = vadd.f32 %v2286, %v2566
    %v2568 = vpop.f32.mrf.mxu0
    %2569 = vdwg.mxu0
    %2570 = vmatprep.subr.mxu0 0.0
    %v2571 = vand.u32 %v1298, 4294901760
    %v2572 = vsub.f32 %v1298, %v2571
    %v2573 = vand.u32 %v2572, 4294901760
    %2574 = vmatpush1.msra.mxu0 %v2573
    %2575 = vmatprep.subr.mxu0 0.0
    %v2576 = vand.u32 %v1297, 4294901760
    %v2577 = vsub.f32 %v1297, %v2576
    %v2578 = vand.u32 %v2577, 4294901760
    %2579 = vmatpush1.msra.mxu0 %v2578
    %2580 = vmatprep.subr.mxu0 0.0
    %v2581 = vand.u32 %v1296, 4294901760
    %v2582 = vsub.f32 %v1296, %v2581
    %v2583 = vand.u32 %v2582, 4294901760
    %2584 = vmatpush1.msra.mxu0 %v2583
    %2585 = vmatprep.subr.mxu0 0.0
    %v2586 = vand.u32 %v1295, 4294901760
    %v2587 = vsub.f32 %v1295, %v2586
    %v2588 = vand.u32 %v2587, 4294901760
    %2589 = vmatpush1.msra.mxu0 %v2588
    %2590 = vmatprep.subr.mxu0 0.0
    %v2591 = vand.u32 %v1294, 4294901760
    %v2592 = vsub.f32 %v1294, %v2591
    %v2593 = vand.u32 %v2592, 4294901760
    %2594 = vmatpush1.msra.mxu0 %v2593
    %2595 = vmatprep.subr.mxu0 0.0
    %v2596 = vand.u32 %v1293, 4294901760
    %v2597 = vsub.f32 %v1293, %v2596
    %v2598 = vand.u32 %v2597, 4294901760
    %2599 = vmatpush1.msra.mxu0 %v2598
    %2600 = vmatprep.subr.mxu0 0.0
    %v2601 = vand.u32 %v1292, 4294901760
    %v2602 = vsub.f32 %v1292, %v2601
    %v2603 = vand.u32 %v2602, 4294901760
    %2604 = vmatpush1.msra.mxu0 %v2603
    %2605 = vmatprep.subr.mxu0 0.0
    %v2606 = vand.u32 %v1291, 4294901760
    %v2607 = vsub.f32 %v1291, %v2606
    %v2608 = vand.u32 %v2607, 4294901760
    %2609 = vmatpush1.msra.mxu0 %v2608
    %2610 = vmatprep.subr.mxu0 0.0
    %v2611 = vand.u32 %v1290, 4294901760
    %v2612 = vsub.f32 %v1290, %v2611
    %v2613 = vand.u32 %v2612, 4294901760
    %2614 = vmatpush1.msra.mxu0 %v2613
    %2615 = vmatprep.subr.mxu0 0.0
    %v2616 = vand.u32 %v1289, 4294901760
    %v2617 = vsub.f32 %v1289, %v2616
    %v2618 = vand.u32 %v2617, 4294901760
    %2619 = vmatpush1.msra.mxu0 %v2618
    %2620 = vmatprep.subr.mxu0 0.0
    %v2621 = vand.u32 %v1288, 4294901760
    %v2622 = vsub.f32 %v1288, %v2621
    %v2623 = vand.u32 %v2622, 4294901760
    %2624 = vmatpush1.msra.mxu0 %v2623
    %2625 = vmatprep.subr.mxu0 0.0
    %v2626 = vand.u32 %v1287, 4294901760
    %v2627 = vsub.f32 %v1287, %v2626
    %v2628 = vand.u32 %v2627, 4294901760
    %2629 = vmatpush1.msra.mxu0 %v2628
    %2630 = vmatprep.subr.mxu0 0.0
    %v2631 = vand.u32 %v1286, 4294901760
    %v2632 = vsub.f32 %v1286, %v2631
    %v2633 = vand.u32 %v2632, 4294901760
    %2634 = vmatpush1.msra.mxu0 %v2633
    %2635 = vmatprep.subr.mxu0 0.0
    %v2636 = vand.u32 %v1285, 4294901760
    %v2637 = vsub.f32 %v1285, %v2636
    %v2638 = vand.u32 %v2637, 4294901760
    %2639 = vmatpush1.msra.mxu0 %v2638
    %2640 = vmatprep.subr.mxu0 0.0
    %v2641 = vand.u32 %v1284, 4294901760
    %v2642 = vsub.f32 %v1284, %v2641
    %v2643 = vand.u32 %v2642, 4294901760
    %2644 = vmatpush1.msra.mxu0 %v2643
    %2645 = vmatprep.subr.mxu0 0.0
    %v2646 = vand.u32 %v1283, 4294901760
    %v2647 = vsub.f32 %v1283, %v2646
    %v2648 = vand.u32 %v2647, 4294901760
    %2649 = vmatpush1.msra.mxu0 %v2648
    %2650 = vmatprep.subr.mxu0 0.0
    %2651 = vmatpush2.msra.mxu0 0.0
    %2652 = vmatprep.subr.mxu0 0.0
    %2653 = vmatpush2.msra.mxu0 0.0
    %2654 = vmatprep.subr.mxu0 0.0
    %2655 = vmatpush2.msra.mxu0 0.0
    %2656 = vmatprep.subr.mxu0 0.0
    %2657 = vmatpush2.msra.mxu0 0.0
    %2658 = vmatprep.subr.mxu0 0.0
    %2659 = vmatpush2.msra.mxu0 0.0
    %2660 = vmatprep.subr.mxu0 0.0
    %2661 = vmatpush2.msra.mxu0 0.0
    %2662 = vmatprep.subr.mxu0 0.0
    %2663 = vmatpush2.msra.mxu0 0.0
    %2664 = vmatprep.subr.mxu0 0.0
    %2665 = vmatpush2.msra.mxu0 0.0
    %2666 = vmatprep.subr.mxu0 0.0
    %2667 = vmatpush2.msra.mxu0 0.0
    %2668 = vmatprep.subr.mxu0 0.0
    %2669 = vmatpush2.msra.mxu0 0.0
    %2670 = vmatprep.subr.mxu0 0.0
    %2671 = vmatpush2.msra.mxu0 0.0
    %2672 = vmatprep.subr.mxu0 0.0
    %2673 = vmatpush2.msra.mxu0 0.0
    %2674 = vmatprep.subr.mxu0 0.0
    %2675 = vmatpush2.msra.mxu0 0.0
    %2676 = vmatprep.subr.mxu0 0.0
    %2677 = vmatpush2.msra.mxu0 0.0
    %2678 = vmatprep.subr.mxu0 0.0
    %v2679 = vand.u32 %v1300, 4294901760
    %v2680 = vsub.f32 %v1300, %v2679
    %v2681 = vand.u32 %v2680, 4294901760
    %2682 = vmatpush2.msra.mxu0 %v2681
    %2683 = vmatprep.subr.mxu0 0.0
    %v2684 = vand.u32 %v1299, 4294901760
    %v2685 = vsub.f32 %v1299, %v2684
    %v2686 = vand.u32 %v2685, 4294901760
    %2687 = vmatpush2.msra.mxu0 %v2686
    %v2688 = vand.u32 %v1339, 4294901760
    %2689 = vmatprep.mubr.f32.mxu0 %v2688
    %v2690 = vand.u32 %v1301, 4294901760
    %2691 = vmatmul.mubr.f32.gmra.mxu0 %v2690
    %v2692 = vpop.f32.mrf.mxu0
    %v2693 = vadd.f32 %v2380, %v2692
    %v2694 = vpop.f32.mrf.mxu0
    %v2695 = vand.u32 %v1342, 4294901760
    %2696 = vmatprep.mubr.f32.mxu0 %v2695
    %v2697 = vand.u32 %v1303, 4294901760
    %2698 = vmatmul.mubr.f32.gmra.mxu0 %v2697
    %v2699 = vpop.f32.mrf.mxu0
    %v2700 = vadd.f32 %v2391, %v2699
    %v2701 = vpop.f32.mrf.mxu0
    %v2702 = vand.u32 %v1345, 4294901760
    %2703 = vmatprep.mubr.f32.mxu0 %v2702
    %v2704 = vand.u32 %v1305, 4294901760
    %2705 = vmatmul.mubr.f32.gmra.mxu0 %v2704
    %v2706 = vpop.f32.mrf.mxu0
    %v2707 = vadd.f32 %v2402, %v2706
    %v2708 = vpop.f32.mrf.mxu0
    %v2709 = vand.u32 %v1348, 4294901760
    %2710 = vmatprep.mubr.f32.mxu0 %v2709
    %v2711 = vand.u32 %v1307, 4294901760
    %2712 = vmatmul.mubr.f32.gmra.mxu0 %v2711
    %v2713 = vpop.f32.mrf.mxu0
    %v2714 = vadd.f32 %v2413, %v2713
    %v2715 = vpop.f32.mrf.mxu0
    %v2716 = vand.u32 %v1351, 4294901760
    %2717 = vmatprep.mubr.f32.mxu0 %v2716
    %v2718 = vand.u32 %v1309, 4294901760
    %2719 = vmatmul.mubr.f32.gmra.mxu0 %v2718
    %v2720 = vpop.f32.mrf.mxu0
    %v2721 = vadd.f32 %v2424, %v2720
    %v2722 = vpop.f32.mrf.mxu0
    %v2723 = vand.u32 %v1354, 4294901760
    %2724 = vmatprep.mubr.f32.mxu0 %v2723
    %v2725 = vand.u32 %v1311, 4294901760
    %2726 = vmatmul.mubr.f32.gmra.mxu0 %v2725
    %v2727 = vpop.f32.mrf.mxu0
    %v2728 = vadd.f32 %v2435, %v2727
    %v2729 = vpop.f32.mrf.mxu0
    %v2730 = vand.u32 %v1357, 4294901760
    %2731 = vmatprep.mubr.f32.mxu0 %v2730
    %v2732 = vand.u32 %v1313, 4294901760
    %2733 = vmatmul.mubr.f32.gmra.mxu0 %v2732
    %v2734 = vpop.f32.mrf.mxu0
    %v2735 = vadd.f32 %v2446, %v2734
    %v2736 = vpop.f32.mrf.mxu0
    %v2737 = vand.u32 %v1360, 4294901760
    %2738 = vmatprep.mubr.f32.mxu0 %v2737
    %v2739 = vand.u32 %v1315, 4294901760
    %2740 = vmatmul.mubr.f32.gmra.mxu0 %v2739
    %v2741 = vpop.f32.mrf.mxu0
    %v2742 = vadd.f32 %v2457, %v2741
    %v2743 = vpop.f32.mrf.mxu0
    %v2744 = vand.u32 %v1363, 4294901760
    %2745 = vmatprep.mubr.f32.mxu0 %v2744
    %v2746 = vand.u32 %v1317, 4294901760
    %2747 = vmatmul.mubr.f32.gmra.mxu0 %v2746
    %v2748 = vpop.f32.mrf.mxu0
    %v2749 = vadd.f32 %v2468, %v2748
    %v2750 = vpop.f32.mrf.mxu0
    %v2751 = vand.u32 %v1366, 4294901760
    %2752 = vmatprep.mubr.f32.mxu0 %v2751
    %v2753 = vand.u32 %v1319, 4294901760
    %2754 = vmatmul.mubr.f32.gmra.mxu0 %v2753
    %v2755 = vpop.f32.mrf.mxu0
    %v2756 = vadd.f32 %v2479, %v2755
    %v2757 = vpop.f32.mrf.mxu0
    %v2758 = vand.u32 %v1369, 4294901760
    %2759 = vmatprep.mubr.f32.mxu0 %v2758
    %v2760 = vand.u32 %v1321, 4294901760
    %2761 = vmatmul.mubr.f32.gmra.mxu0 %v2760
    %v2762 = vpop.f32.mrf.mxu0
    %v2763 = vadd.f32 %v2490, %v2762
    %v2764 = vpop.f32.mrf.mxu0
    %v2765 = vand.u32 %v1372, 4294901760
    %2766 = vmatprep.mubr.f32.mxu0 %v2765
    %v2767 = vand.u32 %v1323, 4294901760
    %2768 = vmatmul.mubr.f32.gmra.mxu0 %v2767
    %v2769 = vpop.f32.mrf.mxu0
    %v2770 = vadd.f32 %v2501, %v2769
    %v2771 = vpop.f32.mrf.mxu0
    %v2772 = vand.u32 %v1375, 4294901760
    %2773 = vmatprep.mubr.f32.mxu0 %v2772
    %v2774 = vand.u32 %v1325, 4294901760
    %2775 = vmatmul.mubr.f32.gmra.mxu0 %v2774
    %v2776 = vpop.f32.mrf.mxu0
    %v2777 = vadd.f32 %v2512, %v2776
    %v2778 = vpop.f32.mrf.mxu0
    %v2779 = vand.u32 %v1378, 4294901760
    %2780 = vmatprep.mubr.f32.mxu0 %v2779
    %v2781 = vand.u32 %v1327, 4294901760
    %2782 = vmatmul.mubr.f32.gmra.mxu0 %v2781
    %v2783 = vpop.f32.mrf.mxu0
    %v2784 = vadd.f32 %v2523, %v2783
    %v2785 = vpop.f32.mrf.mxu0
    %v2786 = vand.u32 %v1381, 4294901760
    %2787 = vmatprep.mubr.f32.mxu0 %v2786
    %v2788 = vand.u32 %v1329, 4294901760
    %2789 = vmatmul.mubr.f32.gmra.mxu0 %v2788
    %v2790 = vpop.f32.mrf.mxu0
    %v2791 = vadd.f32 %v2534, %v2790
    %v2792 = vpop.f32.mrf.mxu0
    %v2793 = vand.u32 %v1384, 4294901760
    %2794 = vmatprep.mubr.f32.mxu0 %v2793
    %v2795 = vand.u32 %v1331, 4294901760
    %2796 = vmatmul.mubr.f32.gmra.mxu0 %v2795
    %v2797 = vpop.f32.mrf.mxu0
    %v2798 = vadd.f32 %v2545, %v2797
    %v2799 = vpop.f32.mrf.mxu0
    %v2800 = vand.u32 %v1387, 4294901760
    %2801 = vmatprep.mubr.f32.mxu0 %v2800
    %v2802 = vand.u32 %v1333, 4294901760
    %2803 = vmatmul.mubr.f32.gmra.mxu0 %v2802
    %v2804 = vpop.f32.mrf.mxu0
    %v2805 = vadd.f32 %v2556, %v2804
    %v2806 = vpop.f32.mrf.mxu0
    %v2807 = vand.u32 %v1390, 4294901760
    %2808 = vmatprep.mubr.f32.mxu0 %v2807
    %v2809 = vand.u32 %v1335, 4294901760
    %2810 = vmatmul.mubr.f32.gmra.mxu0 %v2809
    %v2811 = vpop.f32.mrf.mxu0
    %v2812 = vadd.f32 %v2567, %v2811
    %v2813 = vpop.f32.mrf.mxu0
    %2814 = vdwg.mxu0
    %2815 = vmatprep.subr.mxu0 0.0
    %v2816 = vand.u32 %v1298, 4294901760
    %2817 = vmatpush1.msra.mxu0 %v2816
    %2818 = vmatprep.subr.mxu0 0.0
    %v2819 = vand.u32 %v1297, 4294901760
    %2820 = vmatpush1.msra.mxu0 %v2819
    %2821 = vmatprep.subr.mxu0 0.0
    %v2822 = vand.u32 %v1296, 4294901760
    %2823 = vmatpush1.msra.mxu0 %v2822
    %2824 = vmatprep.subr.mxu0 0.0
    %v2825 = vand.u32 %v1295, 4294901760
    %2826 = vmatpush1.msra.mxu0 %v2825
    %2827 = vmatprep.subr.mxu0 0.0
    %v2828 = vand.u32 %v1294, 4294901760
    %2829 = vmatpush1.msra.mxu0 %v2828
    %2830 = vmatprep.subr.mxu0 0.0
    %v2831 = vand.u32 %v1293, 4294901760
    %2832 = vmatpush1.msra.mxu0 %v2831
    %2833 = vmatprep.subr.mxu0 0.0
    %v2834 = vand.u32 %v1292, 4294901760
    %2835 = vmatpush1.msra.mxu0 %v2834
    %2836 = vmatprep.subr.mxu0 0.0
    %v2837 = vand.u32 %v1291, 4294901760
    %2838 = vmatpush1.msra.mxu0 %v2837
    %2839 = vmatprep.subr.mxu0 0.0
    %v2840 = vand.u32 %v1290, 4294901760
    %2841 = vmatpush1.msra.mxu0 %v2840
    %2842 = vmatprep.subr.mxu0 0.0
    %v2843 = vand.u32 %v1289, 4294901760
    %2844 = vmatpush1.msra.mxu0 %v2843
    %2845 = vmatprep.subr.mxu0 0.0
    %v2846 = vand.u32 %v1288, 4294901760
    %2847 = vmatpush1.msra.mxu0 %v2846
    %2848 = vmatprep.subr.mxu0 0.0
    %v2849 = vand.u32 %v1287, 4294901760
    %2850 = vmatpush1.msra.mxu0 %v2849
    %2851 = vmatprep.subr.mxu0 0.0
    %v2852 = vand.u32 %v1286, 4294901760
    %2853 = vmatpush1.msra.mxu0 %v2852
    %2854 = vmatprep.subr.mxu0 0.0
    %v2855 = vand.u32 %v1285, 4294901760
    %2856 = vmatpush1.msra.mxu0 %v2855
    %2857 = vmatprep.subr.mxu0 0.0
    %v2858 = vand.u32 %v1284, 4294901760
    %2859 = vmatpush1.msra.mxu0 %v2858
    %2860 = vmatprep.subr.mxu0 0.0
    %v2861 = vand.u32 %v1283, 4294901760
    %2862 = vmatpush1.msra.mxu0 %v2861
    %2863 = vmatprep.subr.mxu0 0.0
    %2864 = vmatpush2.msra.mxu0 0.0
    %2865 = vmatprep.subr.mxu0 0.0
    %2866 = vmatpush2.msra.mxu0 0.0
    %2867 = vmatprep.subr.mxu0 0.0
    %2868 = vmatpush2.msra.mxu0 0.0
    %2869 = vmatprep.subr.mxu0 0.0
    %2870 = vmatpush2.msra.mxu0 0.0
    %2871 = vmatprep.subr.mxu0 0.0
    %2872 = vmatpush2.msra.mxu0 0.0
    %2873 = vmatprep.subr.mxu0 0.0
    %2874 = vmatpush2.msra.mxu0 0.0
    %2875 = vmatprep.subr.mxu0 0.0
    %2876 = vmatpush2.msra.mxu0 0.0
    %2877 = vmatprep.subr.mxu0 0.0
    %2878 = vmatpush2.msra.mxu0 0.0
    %2879 = vmatprep.subr.mxu0 0.0
    %2880 = vmatpush2.msra.mxu0 0.0
    %2881 = vmatprep.subr.mxu0 0.0
    %2882 = vmatpush2.msra.mxu0 0.0
    %2883 = vmatprep.subr.mxu0 0.0
    %2884 = vmatpush2.msra.mxu0 0.0
    %2885 = vmatprep.subr.mxu0 0.0
    %2886 = vmatpush2.msra.mxu0 0.0
    %2887 = vmatprep.subr.mxu0 0.0
    %2888 = vmatpush2.msra.mxu0 0.0
    %2889 = vmatprep.subr.mxu0 0.0
    %2890 = vmatpush2.msra.mxu0 0.0
    %2891 = vmatprep.subr.mxu0 0.0
    %v2892 = vand.u32 %v1300, 4294901760
    %2893 = vmatpush2.msra.mxu0 %v2892
    %2894 = vmatprep.subr.mxu0 0.0
    %v2895 = vand.u32 %v1299, 4294901760
    %2896 = vmatpush2.msra.mxu0 %v2895
    %v2897 = vand.u32 %v1339, 4294901760
    %2898 = vmatprep.mubr.f32.mxu0 %v2897
    %v2899 = vand.u32 %v1301, 4294901760
    %2900 = vmatmul.mubr.f32.gmra.mxu0 %v2899
    %v2901 = vpop.f32.mrf.mxu0
    %v2902 = vadd.f32 %v2693, %v2901
    %v2903 = vpop.f32.mrf.mxu0
    %v2904 = vand.u32 %v1342, 4294901760
    %2905 = vmatprep.mubr.f32.mxu0 %v2904
    %v2906 = vand.u32 %v1303, 4294901760
    %2907 = vmatmul.mubr.f32.gmra.mxu0 %v2906
    %v2908 = vpop.f32.mrf.mxu0
    %v2909 = vadd.f32 %v2700, %v2908
    %v2910 = vpop.f32.mrf.mxu0
    %v2911 = vand.u32 %v1345, 4294901760
    %2912 = vmatprep.mubr.f32.mxu0 %v2911
    %v2913 = vand.u32 %v1305, 4294901760
    %2914 = vmatmul.mubr.f32.gmra.mxu0 %v2913
    %v2915 = vpop.f32.mrf.mxu0
    %v2916 = vadd.f32 %v2707, %v2915
    %v2917 = vpop.f32.mrf.mxu0
    %v2918 = vand.u32 %v1348, 4294901760
    %2919 = vmatprep.mubr.f32.mxu0 %v2918
    %v2920 = vand.u32 %v1307, 4294901760
    %2921 = vmatmul.mubr.f32.gmra.mxu0 %v2920
    %v2922 = vpop.f32.mrf.mxu0
    %v2923 = vadd.f32 %v2714, %v2922
    %v2924 = vpop.f32.mrf.mxu0
    %v2925 = vand.u32 %v1351, 4294901760
    %2926 = vmatprep.mubr.f32.mxu0 %v2925
    %v2927 = vand.u32 %v1309, 4294901760
    %2928 = vmatmul.mubr.f32.gmra.mxu0 %v2927
    %v2929 = vpop.f32.mrf.mxu0
    %v2930 = vadd.f32 %v2721, %v2929
    %v2931 = vpop.f32.mrf.mxu0
    %v2932 = vand.u32 %v1354, 4294901760
    %2933 = vmatprep.mubr.f32.mxu0 %v2932
    %v2934 = vand.u32 %v1311, 4294901760
    %2935 = vmatmul.mubr.f32.gmra.mxu0 %v2934
    %v2936 = vpop.f32.mrf.mxu0
    %v2937 = vadd.f32 %v2728, %v2936
    %v2938 = vpop.f32.mrf.mxu0
    %v2939 = vand.u32 %v1357, 4294901760
    %2940 = vmatprep.mubr.f32.mxu0 %v2939
    %v2941 = vand.u32 %v1313, 4294901760
    %2942 = vmatmul.mubr.f32.gmra.mxu0 %v2941
    %v2943 = vpop.f32.mrf.mxu0
    %v2944 = vadd.f32 %v2735, %v2943
    %v2945 = vpop.f32.mrf.mxu0
    %v2946 = vand.u32 %v1360, 4294901760
    %2947 = vmatprep.mubr.f32.mxu0 %v2946
    %v2948 = vand.u32 %v1315, 4294901760
    %2949 = vmatmul.mubr.f32.gmra.mxu0 %v2948
    %v2950 = vpop.f32.mrf.mxu0
    %v2951 = vadd.f32 %v2742, %v2950
    %v2952 = vpop.f32.mrf.mxu0
    %v2953 = vand.u32 %v1363, 4294901760
    %2954 = vmatprep.mubr.f32.mxu0 %v2953
    %v2955 = vand.u32 %v1317, 4294901760
    %2956 = vmatmul.mubr.f32.gmra.mxu0 %v2955
    %v2957 = vpop.f32.mrf.mxu0
    %v2958 = vadd.f32 %v2749, %v2957
    %v2959 = vpop.f32.mrf.mxu0
    %v2960 = vand.u32 %v1366, 4294901760
    %2961 = vmatprep.mubr.f32.mxu0 %v2960
    %v2962 = vand.u32 %v1319, 4294901760
    %2963 = vmatmul.mubr.f32.gmra.mxu0 %v2962
    %v2964 = vpop.f32.mrf.mxu0
    %v2965 = vadd.f32 %v2756, %v2964
    %v2966 = vpop.f32.mrf.mxu0
    %v2967 = vand.u32 %v1369, 4294901760
    %2968 = vmatprep.mubr.f32.mxu0 %v2967
    %v2969 = vand.u32 %v1321, 4294901760
    %2970 = vmatmul.mubr.f32.gmra.mxu0 %v2969
    %v2971 = vpop.f32.mrf.mxu0
    %v2972 = vadd.f32 %v2763, %v2971
    %v2973 = vpop.f32.mrf.mxu0
    %v2974 = vand.u32 %v1372, 4294901760
    %2975 = vmatprep.mubr.f32.mxu0 %v2974
    %v2976 = vand.u32 %v1323, 4294901760
    %2977 = vmatmul.mubr.f32.gmra.mxu0 %v2976
    %v2978 = vpop.f32.mrf.mxu0
    %v2979 = vadd.f32 %v2770, %v2978
    %v2980 = vpop.f32.mrf.mxu0
    %v2981 = vand.u32 %v1375, 4294901760
    %2982 = vmatprep.mubr.f32.mxu0 %v2981
    %v2983 = vand.u32 %v1325, 4294901760
    %2984 = vmatmul.mubr.f32.gmra.mxu0 %v2983
    %v2985 = vpop.f32.mrf.mxu0
    %v2986 = vadd.f32 %v2777, %v2985
    %v2987 = vpop.f32.mrf.mxu0
    %v2988 = vand.u32 %v1378, 4294901760
    %2989 = vmatprep.mubr.f32.mxu0 %v2988
    %v2990 = vand.u32 %v1327, 4294901760
    %2991 = vmatmul.mubr.f32.gmra.mxu0 %v2990
    %v2992 = vpop.f32.mrf.mxu0
    %v2993 = vadd.f32 %v2784, %v2992
    %v2994 = vpop.f32.mrf.mxu0
    %v2995 = vand.u32 %v1381, 4294901760
    %2996 = vmatprep.mubr.f32.mxu0 %v2995
    %v2997 = vand.u32 %v1329, 4294901760
    %2998 = vmatmul.mubr.f32.gmra.mxu0 %v2997
    %v2999 = vpop.f32.mrf.mxu0
    %v3000 = vadd.f32 %v2791, %v2999
    %v3001 = vpop.f32.mrf.mxu0
    %v3002 = vand.u32 %v1384, 4294901760
    %3003 = vmatprep.mubr.f32.mxu0 %v3002
    %v3004 = vand.u32 %v1331, 4294901760
    %3005 = vmatmul.mubr.f32.gmra.mxu0 %v3004
    %v3006 = vpop.f32.mrf.mxu0
    %v3007 = vadd.f32 %v2798, %v3006
    %v3008 = vpop.f32.mrf.mxu0
    %v3009 = vand.u32 %v1387, 4294901760
    %3010 = vmatprep.mubr.f32.mxu0 %v3009
    %v3011 = vand.u32 %v1333, 4294901760
    %3012 = vmatmul.mubr.f32.gmra.mxu0 %v3011
    %v3013 = vpop.f32.mrf.mxu0
    %v3014 = vadd.f32 %v2805, %v3013
    %v3015 = vpop.f32.mrf.mxu0
    %v3016 = vand.u32 %v1390, 4294901760
    %3017 = vmatprep.mubr.f32.mxu0 %v3016
    %v3018 = vand.u32 %v1335, 4294901760
    %3019 = vmatmul.mubr.f32.gmra.mxu0 %v3018
    %v3020 = vpop.f32.mrf.mxu0
    %v3021 = vadd.f32 %v2812, %v3020
    %v3022 = vpop.f32.mrf.mxu0
    %3023 = vdwg.mxu0
    %v3024 = vmax.f32 %v2902, 0.0
    %v3025 = vmax.f32 %v2909, 0.0
    %v3026 = vmax.f32 %v2916, 0.0
    %v3027 = vmax.f32 %v2923, 0.0
    %v3028 = vmax.f32 %v2930, 0.0
    %v3029 = vmax.f32 %v2937, 0.0
    %v3030 = vmax.f32 %v2944, 0.0
    %v3031 = vmax.f32 %v2951, 0.0
    %v3032 = vmax.f32 %v2958, 0.0
    %v3033 = vmax.f32 %v2965, 0.0
    %v3034 = vmax.f32 %v2972, 0.0
    %v3035 = vmax.f32 %v2979, 0.0
    %v3036 = vmax.f32 %v2986, 0.0
    %v3037 = vmax.f32 %v2993, 0.0
    %v3038 = vmax.f32 %v3000, 0.0
    %v3039 = vmax.f32 %v3007, 0.0
    %v3040 = vmax.f32 %v3014, 0.0
    %v3041 = vmax.f32 %v3021, 0.0
    %v3042 = vld [vmem:[%s3] sm:$0xff]
    %v3043 = vld [vmem:[%s3 + $0x8] sm:$0xff]
    %v3045 = vsel %vm1337, %v3043, 0
    %3047 = vmatprep.subr.mxu0 0.0
    %v3048 = vand.u32 %v3039, 4294901760
    %3049 = vmatpush1.msra.mxu0 %v3048
    %3050 = vmatprep.subr.mxu0 0.0
    %v3051 = vand.u32 %v3038, 4294901760
    %3052 = vmatpush1.msra.mxu0 %v3051
    %3053 = vmatprep.subr.mxu0 0.0
    %v3054 = vand.u32 %v3037, 4294901760
    %3055 = vmatpush1.msra.mxu0 %v3054
    %3056 = vmatprep.subr.mxu0 0.0
    %v3057 = vand.u32 %v3036, 4294901760
    %3058 = vmatpush1.msra.mxu0 %v3057
    %3059 = vmatprep.subr.mxu0 0.0
    %v3060 = vand.u32 %v3035, 4294901760
    %3061 = vmatpush1.msra.mxu0 %v3060
    %3062 = vmatprep.subr.mxu0 0.0
    %v3063 = vand.u32 %v3034, 4294901760
    %3064 = vmatpush1.msra.mxu0 %v3063
    %3065 = vmatprep.subr.mxu0 0.0
    %v3066 = vand.u32 %v3033, 4294901760
    %3067 = vmatpush1.msra.mxu0 %v3066
    %3068 = vmatprep.subr.mxu0 0.0
    %v3069 = vand.u32 %v3032, 4294901760
    %3070 = vmatpush1.msra.mxu0 %v3069
    %3071 = vmatprep.subr.mxu0 0.0
    %v3072 = vand.u32 %v3031, 4294901760
    %3073 = vmatpush1.msra.mxu0 %v3072
    %3074 = vmatprep.subr.mxu0 0.0
    %v3075 = vand.u32 %v3030, 4294901760
    %3076 = vmatpush1.msra.mxu0 %v3075
    %3077 = vmatprep.subr.mxu0 0.0
    %v3078 = vand.u32 %v3029, 4294901760
    %3079 = vmatpush1.msra.mxu0 %v3078
    %3080 = vmatprep.subr.mxu0 0.0
    %v3081 = vand.u32 %v3028, 4294901760
    %3082 = vmatpush1.msra.mxu0 %v3081
    %3083 = vmatprep.subr.mxu0 0.0
    %v3084 = vand.u32 %v3027, 4294901760
    %3085 = vmatpush1.msra.mxu0 %v3084
    %3086 = vmatprep.subr.mxu0 0.0
    %v3087 = vand.u32 %v3026, 4294901760
    %3088 = vmatpush1.msra.mxu0 %v3087
    %3089 = vmatprep.subr.mxu0 0.0
    %v3090 = vand.u32 %v3025, 4294901760
    %3091 = vmatpush1.msra.mxu0 %v3090
    %3092 = vmatprep.subr.mxu0 0.0
    %v3093 = vand.u32 %v3024, 4294901760
    %3094 = vmatpush1.msra.mxu0 %v3093
    %3095 = vmatprep.subr.mxu0 0.0
    %3096 = vmatpush2.msra.mxu0 0.0
    %3097 = vmatprep.subr.mxu0 0.0
    %3098 = vmatpush2.msra.mxu0 0.0
    %3099 = vmatprep.subr.mxu0 0.0
    %3100 = vmatpush2.msra.mxu0 0.0
    %3101 = vmatprep.subr.mxu0 0.0
    %3102 = vmatpush2.msra.mxu0 0.0
    %3103 = vmatprep.subr.mxu0 0.0
    %3104 = vmatpush2.msra.mxu0 0.0
    %3105 = vmatprep.subr.mxu0 0.0
    %3106 = vmatpush2.msra.mxu0 0.0
    %3107 = vmatprep.subr.mxu0 0.0
    %3108 = vmatpush2.msra.mxu0 0.0
    %3109 = vmatprep.subr.mxu0 0.0
    %3110 = vmatpush2.msra.mxu0 0.0
    %3111 = vmatprep.subr.mxu0 0.0
    %3112 = vmatpush2.msra.mxu0 0.0
    %3113 = vmatprep.subr.mxu0 0.0
    %3114 = vmatpush2.msra.mxu0 0.0
    %3115 = vmatprep.subr.mxu0 0.0
    %3116 = vmatpush2.msra.mxu0 0.0
    %3117 = vmatprep.subr.mxu0 0.0
    %3118 = vmatpush2.msra.mxu0 0.0
    %3119 = vmatprep.subr.mxu0 0.0
    %3120 = vmatpush2.msra.mxu0 0.0
    %3121 = vmatprep.subr.mxu0 0.0
    %3122 = vmatpush2.msra.mxu0 0.0
    %3123 = vmatprep.subr.mxu0 0.0
    %v3124 = vand.u32 %v3041, 4294901760
    %3125 = vmatpush2.msra.mxu0 %v3124
    %3126 = vmatprep.subr.mxu0 0.0
    %v3127 = vand.u32 %v3040, 4294901760
    %3128 = vmatpush2.msra.mxu0 %v3127
    %v3129 = vand.u32 %v3045, 4294901760
    %v3130 = vsub.f32 %v3045, %v3129
    %v3131 = vand.u32 %v3130, 4294901760
    %v3132 = vsub.f32 %v3130, %v3131
    %v3133 = vand.u32 %v3132, 4294901760
    %3134 = vmatprep.mubr.f32.mxu0 %v3133
    %v3135 = vand.u32 %v3042, 4294901760
    %v3136 = vsub.f32 %v3042, %v3135
    %v3137 = vand.u32 %v3136, 4294901760
    %v3138 = vsub.f32 %v3136, %v3137
    %v3139 = vand.u32 %v3138, 4294901760
    %3140 = vmatmul.mubr.f32.gmra.mxu0 %v3139
    %v3141 = vpop.f32.mrf.mxu0
    %v3142 = vadd.f32 0.0, %v3141
    %v3143 = vpop.f32.mrf.mxu0
    %3144 = vdwg.mxu0
    %3145 = vmatprep.subr.mxu0 0.0
    %v3146 = vand.u32 %v3039, 4294901760
    %v3147 = vsub.f32 %v3039, %v3146
    %v3148 = vand.u32 %v3147, 4294901760
    %v3149 = vsub.f32 %v3147, %v3148
    %v3150 = vand.u32 %v3149, 4294901760
    %3151 = vmatpush1.msra.mxu0 %v3150
    %3152 = vmatprep.subr.mxu0 0.0
    %v3153 = vand.u32 %v3038, 4294901760
    %v3154 = vsub.f32 %v3038, %v3153
    %v3155 = vand.u32 %v3154, 4294901760
    %v3156 = vsub.f32 %v3154, %v3155
    %v3157 = vand.u32 %v3156, 4294901760
    %3158 = vmatpush1.msra.mxu0 %v3157
    %3159 = vmatprep.subr.mxu0 0.0
    %v3160 = vand.u32 %v3037, 4294901760
    %v3161 = vsub.f32 %v3037, %v3160
    %v3162 = vand.u32 %v3161, 4294901760
    %v3163 = vsub.f32 %v3161, %v3162
    %v3164 = vand.u32 %v3163, 4294901760
    %3165 = vmatpush1.msra.mxu0 %v3164
    %3166 = vmatprep.subr.mxu0 0.0
    %v3167 = vand.u32 %v3036, 4294901760
    %v3168 = vsub.f32 %v3036, %v3167
    %v3169 = vand.u32 %v3168, 4294901760
    %v3170 = vsub.f32 %v3168, %v3169
    %v3171 = vand.u32 %v3170, 4294901760
    %3172 = vmatpush1.msra.mxu0 %v3171
    %3173 = vmatprep.subr.mxu0 0.0
    %v3174 = vand.u32 %v3035, 4294901760
    %v3175 = vsub.f32 %v3035, %v3174
    %v3176 = vand.u32 %v3175, 4294901760
    %v3177 = vsub.f32 %v3175, %v3176
    %v3178 = vand.u32 %v3177, 4294901760
    %3179 = vmatpush1.msra.mxu0 %v3178
    %3180 = vmatprep.subr.mxu0 0.0
    %v3181 = vand.u32 %v3034, 4294901760
    %v3182 = vsub.f32 %v3034, %v3181
    %v3183 = vand.u32 %v3182, 4294901760
    %v3184 = vsub.f32 %v3182, %v3183
    %v3185 = vand.u32 %v3184, 4294901760
    %3186 = vmatpush1.msra.mxu0 %v3185
    %3187 = vmatprep.subr.mxu0 0.0
    %v3188 = vand.u32 %v3033, 4294901760
    %v3189 = vsub.f32 %v3033, %v3188
    %v3190 = vand.u32 %v3189, 4294901760
    %v3191 = vsub.f32 %v3189, %v3190
    %v3192 = vand.u32 %v3191, 4294901760
    %3193 = vmatpush1.msra.mxu0 %v3192
    %3194 = vmatprep.subr.mxu0 0.0
    %v3195 = vand.u32 %v3032, 4294901760
    %v3196 = vsub.f32 %v3032, %v3195
    %v3197 = vand.u32 %v3196, 4294901760
    %v3198 = vsub.f32 %v3196, %v3197
    %v3199 = vand.u32 %v3198, 4294901760
    %3200 = vmatpush1.msra.mxu0 %v3199
    %3201 = vmatprep.subr.mxu0 0.0
    %v3202 = vand.u32 %v3031, 4294901760
    %v3203 = vsub.f32 %v3031, %v3202
    %v3204 = vand.u32 %v3203, 4294901760
    %v3205 = vsub.f32 %v3203, %v3204
    %v3206 = vand.u32 %v3205, 4294901760
    %3207 = vmatpush1.msra.mxu0 %v3206
    %3208 = vmatprep.subr.mxu0 0.0
    %v3209 = vand.u32 %v3030, 4294901760
    %v3210 = vsub.f32 %v3030, %v3209
    %v3211 = vand.u32 %v3210, 4294901760
    %v3212 = vsub.f32 %v3210, %v3211
    %v3213 = vand.u32 %v3212, 4294901760
    %3214 = vmatpush1.msra.mxu0 %v3213
    %3215 = vmatprep.subr.mxu0 0.0
    %v3216 = vand.u32 %v3029, 4294901760
    %v3217 = vsub.f32 %v3029, %v3216
    %v3218 = vand.u32 %v3217, 4294901760
    %v3219 = vsub.f32 %v3217, %v3218
    %v3220 = vand.u32 %v3219, 4294901760
    %3221 = vmatpush1.msra.mxu0 %v3220
    %3222 = vmatprep.subr.mxu0 0.0
    %v3223 = vand.u32 %v3028, 4294901760
    %v3224 = vsub.f32 %v3028, %v3223
    %v3225 = vand.u32 %v3224, 4294901760
    %v3226 = vsub.f32 %v3224, %v3225
    %v3227 = vand.u32 %v3226, 4294901760
    %3228 = vmatpush1.msra.mxu0 %v3227
    %3229 = vmatprep.subr.mxu0 0.0
    %v3230 = vand.u32 %v3027, 4294901760
    %v3231 = vsub.f32 %v3027, %v3230
    %v3232 = vand.u32 %v3231, 4294901760
    %v3233 = vsub.f32 %v3231, %v3232
    %v3234 = vand.u32 %v3233, 4294901760
    %3235 = vmatpush1.msra.mxu0 %v3234
    %3236 = vmatprep.subr.mxu0 0.0
    %v3237 = vand.u32 %v3026, 4294901760
    %v3238 = vsub.f32 %v3026, %v3237
    %v3239 = vand.u32 %v3238, 4294901760
    %v3240 = vsub.f32 %v3238, %v3239
    %v3241 = vand.u32 %v3240, 4294901760
    %3242 = vmatpush1.msra.mxu0 %v3241
    %3243 = vmatprep.subr.mxu0 0.0
    %v3244 = vand.u32 %v3025, 4294901760
    %v3245 = vsub.f32 %v3025, %v3244
    %v3246 = vand.u32 %v3245, 4294901760
    %v3247 = vsub.f32 %v3245, %v3246
    %v3248 = vand.u32 %v3247, 4294901760
    %3249 = vmatpush1.msra.mxu0 %v3248
    %3250 = vmatprep.subr.mxu0 0.0
    %v3251 = vand.u32 %v3024, 4294901760
    %v3252 = vsub.f32 %v3024, %v3251
    %v3253 = vand.u32 %v3252, 4294901760
    %v3254 = vsub.f32 %v3252, %v3253
    %v3255 = vand.u32 %v3254, 4294901760
    %3256 = vmatpush1.msra.mxu0 %v3255
    %3257 = vmatprep.subr.mxu0 0.0
    %3258 = vmatpush2.msra.mxu0 0.0
    %3259 = vmatprep.subr.mxu0 0.0
    %3260 = vmatpush2.msra.mxu0 0.0
    %3261 = vmatprep.subr.mxu0 0.0
    %3262 = vmatpush2.msra.mxu0 0.0
    %3263 = vmatprep.subr.mxu0 0.0
    %3264 = vmatpush2.msra.mxu0 0.0
    %3265 = vmatprep.subr.mxu0 0.0
    %3266 = vmatpush2.msra.mxu0 0.0
    %3267 = vmatprep.subr.mxu0 0.0
    %3268 = vmatpush2.msra.mxu0 0.0
    %3269 = vmatprep.subr.mxu0 0.0
    %3270 = vmatpush2.msra.mxu0 0.0
    %3271 = vmatprep.subr.mxu0 0.0
    %3272 = vmatpush2.msra.mxu0 0.0
    %3273 = vmatprep.subr.mxu0 0.0
    %3274 = vmatpush2.msra.mxu0 0.0
    %3275 = vmatprep.subr.mxu0 0.0
    %3276 = vmatpush2.msra.mxu0 0.0
    %3277 = vmatprep.subr.mxu0 0.0
    %3278 = vmatpush2.msra.mxu0 0.0
    %3279 = vmatprep.subr.mxu0 0.0
    %3280 = vmatpush2.msra.mxu0 0.0
    %3281 = vmatprep.subr.mxu0 0.0
    %3282 = vmatpush2.msra.mxu0 0.0
    %3283 = vmatprep.subr.mxu0 0.0
    %3284 = vmatpush2.msra.mxu0 0.0
    %3285 = vmatprep.subr.mxu0 0.0
    %v3286 = vand.u32 %v3041, 4294901760
    %v3287 = vsub.f32 %v3041, %v3286
    %v3288 = vand.u32 %v3287, 4294901760
    %v3289 = vsub.f32 %v3287, %v3288
    %v3290 = vand.u32 %v3289, 4294901760
    %3291 = vmatpush2.msra.mxu0 %v3290
    %3292 = vmatprep.subr.mxu0 0.0
    %v3293 = vand.u32 %v3040, 4294901760
    %v3294 = vsub.f32 %v3040, %v3293
    %v3295 = vand.u32 %v3294, 4294901760
    %v3296 = vsub.f32 %v3294, %v3295
    %v3297 = vand.u32 %v3296, 4294901760
    %3298 = vmatpush2.msra.mxu0 %v3297
    %v3299 = vand.u32 %v3045, 4294901760
    %3300 = vmatprep.mubr.f32.mxu0 %v3299
    %v3301 = vand.u32 %v3042, 4294901760
    %3302 = vmatmul.mubr.f32.gmra.mxu0 %v3301
    %v3303 = vpop.f32.mrf.mxu0
    %v3304 = vadd.f32 %v3142, %v3303
    %v3305 = vpop.f32.mrf.mxu0
    %3306 = vdwg.mxu0
    %3307 = vmatprep.subr.mxu0 0.0
    %v3308 = vand.u32 %v3039, 4294901760
    %v3309 = vsub.f32 %v3039, %v3308
    %3310 = vmatpush1.msra.mxu0 %v3309
    %3311 = vmatprep.subr.mxu0 0.0
    %v3312 = vand.u32 %v3038, 4294901760
    %v3313 = vsub.f32 %v3038, %v3312
    %3314 = vmatpush1.msra.mxu0 %v3313
    %3315 = vmatprep.subr.mxu0 0.0
    %v3316 = vand.u32 %v3037, 4294901760
    %v3317 = vsub.f32 %v3037, %v3316
    %3318 = vmatpush1.msra.mxu0 %v3317
    %3319 = vmatprep.subr.mxu0 0.0
    %v3320 = vand.u32 %v3036, 4294901760
    %v3321 = vsub.f32 %v3036, %v3320
    %3322 = vmatpush1.msra.mxu0 %v3321
    %3323 = vmatprep.subr.mxu0 0.0
    %v3324 = vand.u32 %v3035, 4294901760
    %v3325 = vsub.f32 %v3035, %v3324
    %3326 = vmatpush1.msra.mxu0 %v3325
    %3327 = vmatprep.subr.mxu0 0.0
    %v3328 = vand.u32 %v3034, 4294901760
    %v3329 = vsub.f32 %v3034, %v3328
    %3330 = vmatpush1.msra.mxu0 %v3329
    %3331 = vmatprep.subr.mxu0 0.0
    %v3332 = vand.u32 %v3033, 4294901760
    %v3333 = vsub.f32 %v3033, %v3332
    %3334 = vmatpush1.msra.mxu0 %v3333
    %3335 = vmatprep.subr.mxu0 0.0
    %v3336 = vand.u32 %v3032, 4294901760
    %v3337 = vsub.f32 %v3032, %v3336
    %3338 = vmatpush1.msra.mxu0 %v3337
    %3339 = vmatprep.subr.mxu0 0.0
    %v3340 = vand.u32 %v3031, 4294901760
    %v3341 = vsub.f32 %v3031, %v3340
    %3342 = vmatpush1.msra.mxu0 %v3341
    %3343 = vmatprep.subr.mxu0 0.0
    %v3344 = vand.u32 %v3030, 4294901760
    %v3345 = vsub.f32 %v3030, %v3344
    %3346 = vmatpush1.msra.mxu0 %v3345
    %3347 = vmatprep.subr.mxu0 0.0
    %v3348 = vand.u32 %v3029, 4294901760
    %v3349 = vsub.f32 %v3029, %v3348
    %3350 = vmatpush1.msra.mxu0 %v3349
    %3351 = vmatprep.subr.mxu0 0.0
    %v3352 = vand.u32 %v3028, 4294901760
    %v3353 = vsub.f32 %v3028, %v3352
    %3354 = vmatpush1.msra.mxu0 %v3353
    %3355 = vmatprep.subr.mxu0 0.0
    %v3356 = vand.u32 %v3027, 4294901760
    %v3357 = vsub.f32 %v3027, %v3356
    %3358 = vmatpush1.msra.mxu0 %v3357
    %3359 = vmatprep.subr.mxu0 0.0
    %v3360 = vand.u32 %v3026, 4294901760
    %v3361 = vsub.f32 %v3026, %v3360
    %3362 = vmatpush1.msra.mxu0 %v3361
    %3363 = vmatprep.subr.mxu0 0.0
    %v3364 = vand.u32 %v3025, 4294901760
    %v3365 = vsub.f32 %v3025, %v3364
    %3366 = vmatpush1.msra.mxu0 %v3365
    %3367 = vmatprep.subr.mxu0 0.0
    %v3368 = vand.u32 %v3024, 4294901760
    %v3369 = vsub.f32 %v3024, %v3368
    %3370 = vmatpush1.msra.mxu0 %v3369
    %3371 = vmatprep.subr.mxu0 0.0
    %3372 = vmatpush2.msra.mxu0 0.0
    %3373 = vmatprep.subr.mxu0 0.0
    %3374 = vmatpush2.msra.mxu0 0.0
    %3375 = vmatprep.subr.mxu0 0.0
    %3376 = vmatpush2.msra.mxu0 0.0
    %3377 = vmatprep.subr.mxu0 0.0
    %3378 = vmatpush2.msra.mxu0 0.0
    %3379 = vmatprep.subr.mxu0 0.0
    %3380 = vmatpush2.msra.mxu0 0.0
    %3381 = vmatprep.subr.mxu0 0.0
    %3382 = vmatpush2.msra.mxu0 0.0
    %3383 = vmatprep.subr.mxu0 0.0
    %3384 = vmatpush2.msra.mxu0 0.0
    %3385 = vmatprep.subr.mxu0 0.0
    %3386 = vmatpush2.msra.mxu0 0.0
    %3387 = vmatprep.subr.mxu0 0.0
    %3388 = vmatpush2.msra.mxu0 0.0
    %3389 = vmatprep.subr.mxu0 0.0
    %3390 = vmatpush2.msra.mxu0 0.0
    %3391 = vmatprep.subr.mxu0 0.0
    %3392 = vmatpush2.msra.mxu0 0.0
    %3393 = vmatprep.subr.mxu0 0.0
    %3394 = vmatpush2.msra.mxu0 0.0
    %3395 = vmatprep.subr.mxu0 0.0
    %3396 = vmatpush2.msra.mxu0 0.0
    %3397 = vmatprep.subr.mxu0 0.0
    %3398 = vmatpush2.msra.mxu0 0.0
    %3399 = vmatprep.subr.mxu0 0.0
    %v3400 = vand.u32 %v3041, 4294901760
    %v3401 = vsub.f32 %v3041, %v3400
    %3402 = vmatpush2.msra.mxu0 %v3401
    %3403 = vmatprep.subr.mxu0 0.0
    %v3404 = vand.u32 %v3040, 4294901760
    %v3405 = vsub.f32 %v3040, %v3404
    %3406 = vmatpush2.msra.mxu0 %v3405
    %v3407 = vand.u32 %v3045, 4294901760
    %v3408 = vsub.f32 %v3045, %v3407
    %3409 = vmatprep.mubr.f32.mxu0 %v3408
    %v3410 = vand.u32 %v3042, 4294901760
    %v3411 = vsub.f32 %v3042, %v3410
    %3412 = vmatmul.mubr.f32.gmra.mxu0 %v3411
    %v3413 = vpop.f32.mrf.mxu0
    %v3414 = vadd.f32 %v3304, %v3413
    %v3415 = vpop.f32.mrf.mxu0
    %3416 = vdwg.mxu0
    %3417 = vmatprep.subr.mxu0 0.0
    %v3418 = vand.u32 %v3039, 4294901760
    %3419 = vmatpush1.msra.mxu0 %v3418
    %3420 = vmatprep.subr.mxu0 0.0
    %v3421 = vand.u32 %v3038, 4294901760
    %3422 = vmatpush1.msra.mxu0 %v3421
    %3423 = vmatprep.subr.mxu0 0.0
    %v3424 = vand.u32 %v3037, 4294901760
    %3425 = vmatpush1.msra.mxu0 %v3424
    %3426 = vmatprep.subr.mxu0 0.0
    %v3427 = vand.u32 %v3036, 4294901760
    %3428 = vmatpush1.msra.mxu0 %v3427
    %3429 = vmatprep.subr.mxu0 0.0
    %v3430 = vand.u32 %v3035, 4294901760
    %3431 = vmatpush1.msra.mxu0 %v3430
    %3432 = vmatprep.subr.mxu0 0.0
    %v3433 = vand.u32 %v3034, 4294901760
    %3434 = vmatpush1.msra.mxu0 %v3433
    %3435 = vmatprep.subr.mxu0 0.0
    %v3436 = vand.u32 %v3033, 4294901760
    %3437 = vmatpush1.msra.mxu0 %v3436
    %3438 = vmatprep.subr.mxu0 0.0
    %v3439 = vand.u32 %v3032, 4294901760
    %3440 = vmatpush1.msra.mxu0 %v3439
    %3441 = vmatprep.subr.mxu0 0.0
    %v3442 = vand.u32 %v3031, 4294901760
    %3443 = vmatpush1.msra.mxu0 %v3442
    %3444 = vmatprep.subr.mxu0 0.0
    %v3445 = vand.u32 %v3030, 4294901760
    %3446 = vmatpush1.msra.mxu0 %v3445
    %3447 = vmatprep.subr.mxu0 0.0
    %v3448 = vand.u32 %v3029, 4294901760
    %3449 = vmatpush1.msra.mxu0 %v3448
    %3450 = vmatprep.subr.mxu0 0.0
    %v3451 = vand.u32 %v3028, 4294901760
    %3452 = vmatpush1.msra.mxu0 %v3451
    %3453 = vmatprep.subr.mxu0 0.0
    %v3454 = vand.u32 %v3027, 4294901760
    %3455 = vmatpush1.msra.mxu0 %v3454
    %3456 = vmatprep.subr.mxu0 0.0
    %v3457 = vand.u32 %v3026, 4294901760
    %3458 = vmatpush1.msra.mxu0 %v3457
    %3459 = vmatprep.subr.mxu0 0.0
    %v3460 = vand.u32 %v3025, 4294901760
    %3461 = vmatpush1.msra.mxu0 %v3460
    %3462 = vmatprep.subr.mxu0 0.0
    %v3463 = vand.u32 %v3024, 4294901760
    %3464 = vmatpush1.msra.mxu0 %v3463
    %3465 = vmatprep.subr.mxu0 0.0
    %3466 = vmatpush2.msra.mxu0 0.0
    %3467 = vmatprep.subr.mxu0 0.0
    %3468 = vmatpush2.msra.mxu0 0.0
    %3469 = vmatprep.subr.mxu0 0.0
    %3470 = vmatpush2.msra.mxu0 0.0
    %3471 = vmatprep.subr.mxu0 0.0
    %3472 = vmatpush2.msra.mxu0 0.0
    %3473 = vmatprep.subr.mxu0 0.0
    %3474 = vmatpush2.msra.mxu0 0.0
    %3475 = vmatprep.subr.mxu0 0.0
    %3476 = vmatpush2.msra.mxu0 0.0
    %3477 = vmatprep.subr.mxu0 0.0
    %3478 = vmatpush2.msra.mxu0 0.0
    %3479 = vmatprep.subr.mxu0 0.0
    %3480 = vmatpush2.msra.mxu0 0.0
    %3481 = vmatprep.subr.mxu0 0.0
    %3482 = vmatpush2.msra.mxu0 0.0
    %3483 = vmatprep.subr.mxu0 0.0
    %3484 = vmatpush2.msra.mxu0 0.0
    %3485 = vmatprep.subr.mxu0 0.0
    %3486 = vmatpush2.msra.mxu0 0.0
    %3487 = vmatprep.subr.mxu0 0.0
    %3488 = vmatpush2.msra.mxu0 0.0
    %3489 = vmatprep.subr.mxu0 0.0
    %3490 = vmatpush2.msra.mxu0 0.0
    %3491 = vmatprep.subr.mxu0 0.0
    %3492 = vmatpush2.msra.mxu0 0.0
    %3493 = vmatprep.subr.mxu0 0.0
    %v3494 = vand.u32 %v3041, 4294901760
    %3495 = vmatpush2.msra.mxu0 %v3494
    %3496 = vmatprep.subr.mxu0 0.0
    %v3497 = vand.u32 %v3040, 4294901760
    %3498 = vmatpush2.msra.mxu0 %v3497
    %v3499 = vand.u32 %v3045, 4294901760
    %v3500 = vsub.f32 %v3045, %v3499
    %v3501 = vand.u32 %v3500, 4294901760
    %3502 = vmatprep.mubr.f32.mxu0 %v3501
    %v3503 = vand.u32 %v3042, 4294901760
    %v3504 = vsub.f32 %v3042, %v3503
    %v3505 = vand.u32 %v3504, 4294901760
    %3506 = vmatmul.mubr.f32.gmra.mxu0 %v3505
    %v3507 = vpop.f32.mrf.mxu0
    %v3508 = vadd.f32 %v3414, %v3507
    %v3509 = vpop.f32.mrf.mxu0
    %3510 = vdwg.mxu0
    %3511 = vmatprep.subr.mxu0 0.0
    %v3512 = vand.u32 %v3039, 4294901760
    %v3513 = vsub.f32 %v3039, %v3512
    %v3514 = vand.u32 %v3513, 4294901760
    %3515 = vmatpush1.msra.mxu0 %v3514
    %3516 = vmatprep.subr.mxu0 0.0
    %v3517 = vand.u32 %v3038, 4294901760
    %v3518 = vsub.f32 %v3038, %v3517
    %v3519 = vand.u32 %v3518, 4294901760
    %3520 = vmatpush1.msra.mxu0 %v3519
    %3521 = vmatprep.subr.mxu0 0.0
    %v3522 = vand.u32 %v3037, 4294901760
    %v3523 = vsub.f32 %v3037, %v3522
    %v3524 = vand.u32 %v3523, 4294901760
    %3525 = vmatpush1.msra.mxu0 %v3524
    %3526 = vmatprep.subr.mxu0 0.0
    %v3527 = vand.u32 %v3036, 4294901760
    %v3528 = vsub.f32 %v3036, %v3527
    %v3529 = vand.u32 %v3528, 4294901760
    %3530 = vmatpush1.msra.mxu0 %v3529
    %3531 = vmatprep.subr.mxu0 0.0
    %v3532 = vand.u32 %v3035, 4294901760
    %v3533 = vsub.f32 %v3035, %v3532
    %v3534 = vand.u32 %v3533, 4294901760
    %3535 = vmatpush1.msra.mxu0 %v3534
    %3536 = vmatprep.subr.mxu0 0.0
    %v3537 = vand.u32 %v3034, 4294901760
    %v3538 = vsub.f32 %v3034, %v3537
    %v3539 = vand.u32 %v3538, 4294901760
    %3540 = vmatpush1.msra.mxu0 %v3539
    %3541 = vmatprep.subr.mxu0 0.0
    %v3542 = vand.u32 %v3033, 4294901760
    %v3543 = vsub.f32 %v3033, %v3542
    %v3544 = vand.u32 %v3543, 4294901760
    %3545 = vmatpush1.msra.mxu0 %v3544
    %3546 = vmatprep.subr.mxu0 0.0
    %v3547 = vand.u32 %v3032, 4294901760
    %v3548 = vsub.f32 %v3032, %v3547
    %v3549 = vand.u32 %v3548, 4294901760
    %3550 = vmatpush1.msra.mxu0 %v3549
    %3551 = vmatprep.subr.mxu0 0.0
    %v3552 = vand.u32 %v3031, 4294901760
    %v3553 = vsub.f32 %v3031, %v3552
    %v3554 = vand.u32 %v3553, 4294901760
    %3555 = vmatpush1.msra.mxu0 %v3554
    %3556 = vmatprep.subr.mxu0 0.0
    %v3557 = vand.u32 %v3030, 4294901760
    %v3558 = vsub.f32 %v3030, %v3557
    %v3559 = vand.u32 %v3558, 4294901760
    %3560 = vmatpush1.msra.mxu0 %v3559
    %3561 = vmatprep.subr.mxu0 0.0
    %v3562 = vand.u32 %v3029, 4294901760
    %v3563 = vsub.f32 %v3029, %v3562
    %v3564 = vand.u32 %v3563, 4294901760
    %3565 = vmatpush1.msra.mxu0 %v3564
    %3566 = vmatprep.subr.mxu0 0.0
    %v3567 = vand.u32 %v3028, 4294901760
    %v3568 = vsub.f32 %v3028, %v3567
    %v3569 = vand.u32 %v3568, 4294901760
    %3570 = vmatpush1.msra.mxu0 %v3569
    %3571 = vmatprep.subr.mxu0 0.0
    %v3572 = vand.u32 %v3027, 4294901760
    %v3573 = vsub.f32 %v3027, %v3572
    %v3574 = vand.u32 %v3573, 4294901760
    %3575 = vmatpush1.msra.mxu0 %v3574
    %3576 = vmatprep.subr.mxu0 0.0
    %v3577 = vand.u32 %v3026, 4294901760
    %v3578 = vsub.f32 %v3026, %v3577
    %v3579 = vand.u32 %v3578, 4294901760
    %3580 = vmatpush1.msra.mxu0 %v3579
    %3581 = vmatprep.subr.mxu0 0.0
    %v3582 = vand.u32 %v3025, 4294901760
    %v3583 = vsub.f32 %v3025, %v3582
    %v3584 = vand.u32 %v3583, 4294901760
    %3585 = vmatpush1.msra.mxu0 %v3584
    %3586 = vmatprep.subr.mxu0 0.0
    %v3587 = vand.u32 %v3024, 4294901760
    %v3588 = vsub.f32 %v3024, %v3587
    %v3589 = vand.u32 %v3588, 4294901760
    %3590 = vmatpush1.msra.mxu0 %v3589
    %3591 = vmatprep.subr.mxu0 0.0
    %3592 = vmatpush2.msra.mxu0 0.0
    %3593 = vmatprep.subr.mxu0 0.0
    %3594 = vmatpush2.msra.mxu0 0.0
    %3595 = vmatprep.subr.mxu0 0.0
    %3596 = vmatpush2.msra.mxu0 0.0
    %3597 = vmatprep.subr.mxu0 0.0
    %3598 = vmatpush2.msra.mxu0 0.0
    %3599 = vmatprep.subr.mxu0 0.0
    %3600 = vmatpush2.msra.mxu0 0.0
    %3601 = vmatprep.subr.mxu0 0.0
    %3602 = vmatpush2.msra.mxu0 0.0
    %3603 = vmatprep.subr.mxu0 0.0
    %3604 = vmatpush2.msra.mxu0 0.0
    %3605 = vmatprep.subr.mxu0 0.0
    %3606 = vmatpush2.msra.mxu0 0.0
    %3607 = vmatprep.subr.mxu0 0.0
    %3608 = vmatpush2.msra.mxu0 0.0
    %3609 = vmatprep.subr.mxu0 0.0
    %3610 = vmatpush2.msra.mxu0 0.0
    %3611 = vmatprep.subr.mxu0 0.0
    %3612 = vmatpush2.msra.mxu0 0.0
    %3613 = vmatprep.subr.mxu0 0.0
    %3614 = vmatpush2.msra.mxu0 0.0
    %3615 = vmatprep.subr.mxu0 0.0
    %3616 = vmatpush2.msra.mxu0 0.0
    %3617 = vmatprep.subr.mxu0 0.0
    %3618 = vmatpush2.msra.mxu0 0.0
    %3619 = vmatprep.subr.mxu0 0.0
    %v3620 = vand.u32 %v3041, 4294901760
    %v3621 = vsub.f32 %v3041, %v3620
    %v3622 = vand.u32 %v3621, 4294901760
    %3623 = vmatpush2.msra.mxu0 %v3622
    %3624 = vmatprep.subr.mxu0 0.0
    %v3625 = vand.u32 %v3040, 4294901760
    %v3626 = vsub.f32 %v3040, %v3625
    %v3627 = vand.u32 %v3626, 4294901760
    %3628 = vmatpush2.msra.mxu0 %v3627
    %v3629 = vand.u32 %v3045, 4294901760
    %3630 = vmatprep.mubr.f32.mxu0 %v3629
    %v3631 = vand.u32 %v3042, 4294901760
    %3632 = vmatmul.mubr.f32.gmra.mxu0 %v3631
    %v3633 = vpop.f32.mrf.mxu0
    %v3634 = vadd.f32 %v3508, %v3633
    %v3635 = vpop.f32.mrf.mxu0
    %3636 = vdwg.mxu0
    %3637 = vmatprep.subr.mxu0 0.0
    %v3638 = vand.u32 %v3039, 4294901760
    %3639 = vmatpush1.msra.mxu0 %v3638
    %3640 = vmatprep.subr.mxu0 0.0
    %v3641 = vand.u32 %v3038, 4294901760
    %3642 = vmatpush1.msra.mxu0 %v3641
    %3643 = vmatprep.subr.mxu0 0.0
    %v3644 = vand.u32 %v3037, 4294901760
    %3645 = vmatpush1.msra.mxu0 %v3644
    %3646 = vmatprep.subr.mxu0 0.0
    %v3647 = vand.u32 %v3036, 4294901760
    %3648 = vmatpush1.msra.mxu0 %v3647
    %3649 = vmatprep.subr.mxu0 0.0
    %v3650 = vand.u32 %v3035, 4294901760
    %3651 = vmatpush1.msra.mxu0 %v3650
    %3652 = vmatprep.subr.mxu0 0.0
    %v3653 = vand.u32 %v3034, 4294901760
    %3654 = vmatpush1.msra.mxu0 %v3653
    %3655 = vmatprep.subr.mxu0 0.0
    %v3656 = vand.u32 %v3033, 4294901760
    %3657 = vmatpush1.msra.mxu0 %v3656
    %3658 = vmatprep.subr.mxu0 0.0
    %v3659 = vand.u32 %v3032, 4294901760
    %3660 = vmatpush1.msra.mxu0 %v3659
    %3661 = vmatprep.subr.mxu0 0.0
    %v3662 = vand.u32 %v3031, 4294901760
    %3663 = vmatpush1.msra.mxu0 %v3662
    %3664 = vmatprep.subr.mxu0 0.0
    %v3665 = vand.u32 %v3030, 4294901760
    %3666 = vmatpush1.msra.mxu0 %v3665
    %3667 = vmatprep.subr.mxu0 0.0
    %v3668 = vand.u32 %v3029, 4294901760
    %3669 = vmatpush1.msra.mxu0 %v3668
    %3670 = vmatprep.subr.mxu0 0.0
    %v3671 = vand.u32 %v3028, 4294901760
    %3672 = vmatpush1.msra.mxu0 %v3671
    %3673 = vmatprep.subr.mxu0 0.0
    %v3674 = vand.u32 %v3027, 4294901760
    %3675 = vmatpush1.msra.mxu0 %v3674
    %3676 = vmatprep.subr.mxu0 0.0
    %v3677 = vand.u32 %v3026, 4294901760
    %3678 = vmatpush1.msra.mxu0 %v3677
    %3679 = vmatprep.subr.mxu0 0.0
    %v3680 = vand.u32 %v3025, 4294901760
    %3681 = vmatpush1.msra.mxu0 %v3680
    %3682 = vmatprep.subr.mxu0 0.0
    %v3683 = vand.u32 %v3024, 4294901760
    %3684 = vmatpush1.msra.mxu0 %v3683
    %3685 = vmatprep.subr.mxu0 0.0
    %3686 = vmatpush2.msra.mxu0 0.0
    %3687 = vmatprep.subr.mxu0 0.0
    %3688 = vmatpush2.msra.mxu0 0.0
    %3689 = vmatprep.subr.mxu0 0.0
    %3690 = vmatpush2.msra.mxu0 0.0
    %3691 = vmatprep.subr.mxu0 0.0
    %3692 = vmatpush2.msra.mxu0 0.0
    %3693 = vmatprep.subr.mxu0 0.0
    %3694 = vmatpush2.msra.mxu0 0.0
    %3695 = vmatprep.subr.mxu0 0.0
    %3696 = vmatpush2.msra.mxu0 0.0
    %3697 = vmatprep.subr.mxu0 0.0
    %3698 = vmatpush2.msra.mxu0 0.0
    %3699 = vmatprep.subr.mxu0 0.0
    %3700 = vmatpush2.msra.mxu0 0.0
    %3701 = vmatprep.subr.mxu0 0.0
    %3702 = vmatpush2.msra.mxu0 0.0
    %3703 = vmatprep.subr.mxu0 0.0
    %3704 = vmatpush2.msra.mxu0 0.0
    %3705 = vmatprep.subr.mxu0 0.0
    %3706 = vmatpush2.msra.mxu0 0.0
    %3707 = vmatprep.subr.mxu0 0.0
    %3708 = vmatpush2.msra.mxu0 0.0
    %3709 = vmatprep.subr.mxu0 0.0
    %3710 = vmatpush2.msra.mxu0 0.0
    %3711 = vmatprep.subr.mxu0 0.0
    %3712 = vmatpush2.msra.mxu0 0.0
    %3713 = vmatprep.subr.mxu0 0.0
    %v3714 = vand.u32 %v3041, 4294901760
    %3715 = vmatpush2.msra.mxu0 %v3714
    %3716 = vmatprep.subr.mxu0 0.0
    %v3717 = vand.u32 %v3040, 4294901760
    %3718 = vmatpush2.msra.mxu0 %v3717
    %v3719 = vand.u32 %v3045, 4294901760
    %3720 = vmatprep.mubr.f32.mxu0 %v3719
    %v3721 = vand.u32 %v3042, 4294901760
    %3722 = vmatmul.mubr.f32.gmra.mxu0 %v3721
    %v3723 = vpop.f32.mrf.mxu0
    %v3724 = vadd.f32 %v3634, %v3723
    %v3725 = vpop.f32.mrf.mxu0
    %3726 = vdwg.mxu0
    %3727 = vst [vmem:[#allocation5] sm:$0x3] %v3724
    // Predicated region
    $region22: #{tpu_custom_call.1} parent=1 // pred_check
      _
    $region23: #{tpu_custom_call.1} parent=1 // pred_check_branch
      %3729 = sbr.rel (0) target = $region25
    $region24: #{tpu_custom_call.1} parent=1 // pred_region
      %s3731 = ssub.s32 32, 32
      %3732 = vsyncadd [#allocation4], %s3731
      %s3734 = sshll.u32 [#allocation5], 4
      %s3735 = int_to_ptr.vmem [resolvable:$true] %s3734
      %3737 = dma.vmem_to_hbm [thread:$0]  %s3735, 32, %s4, [#allocation4]
    $region25: #{tpu_custom_call.1} parent=1 // pred_fallthru
      _
    // Predicated region
    $region26: #{tpu_custom_call.1} parent=1 // pred_check
      _
    $region27: #{tpu_custom_call.1} parent=1 // pred_check_branch
      %3739 = sbr.rel (0) target = $region29
    $region28: #{tpu_custom_call.1} parent=1 // pred_region
      %3740 = dma.done [#allocation4], 32
    $region29: #{tpu_custom_call.1} parent=1 // pred_fallthru
      _
    %3741 = vsyncpa [#allocation3], 1
    %3742 = vsyncpa [#allocation4], 1

</llo_original>
